<compile_context>
chip_gen: v5e
topology: v5e:2x2
jax: 0.10.0
libtpu: 0.0.40
codegen_flags: <defaults>
</compile_context>

<pallas_src>
import functools

import jax
import jax.numpy as jnp
from jax.experimental import pallas as pl
from jax.experimental.pallas import tpu as pltpu


def _head_layer_kernel(x_ref, w_ref, b_ref, o_ref, *, H, W, Cin, Cout, Nb,
                       negative_slope):
    """One grid step processes Nb images.

    x_ref: (Nb, Cin, H*W)   flat NCHW input (no halo padding; halos masked in-kernel)
    w_ref: (9, Cout, Cin)   per-tap conv weights (dropout mask folded in), t = kh*3+kw
    b_ref: (Cout, 1)        bias (dropout mask folded in)
    o_ref: (Nb, Cout, H*W)  output, lane-dense last dim
    """
    HW = H * W

    # Per-lane (h, w) coordinates for halo masking; (1, HW) iota broadcasts over Cin.
    lane = jax.lax.broadcasted_iota(jnp.int32, (1, HW), 1)
    if (W & (W - 1)) == 0:                       # power-of-two width: no integer divide
        w_idx = lane & (W - 1)
        h_idx = lane >> (W.bit_length() - 1)
    else:
        w_idx = lane % W
        h_idx = lane // W
    row_ok = {-1: h_idx >= 1, 0: None, 1: h_idx <= H - 2}
    col_ok = {-1: w_idx >= 1, 0: None, 1: w_idx <= W - 2}

    # Combined validity mask per tap, hoisted out of the image loop.
    tap_mask = {}
    for dh in (-1, 0, 1):
        for dw in (-1, 0, 1):
            m = row_ok[dh]
            if col_ok[dw] is not None:
                m = col_ok[dw] if m is None else (m & col_ok[dw])
            tap_mask[(dh, dw)] = m

    bias = b_ref[...]                            # (Cout, 1)

    for n in range(Nb):
        xn = x_ref[n]                            # (Cin, HW), one lane-dense load
        y = None
        for kh in range(3):
            for kw in range(3):
                dh, dw = kh - 1, kw - 1
                s = dh * W + dw                  # static flat shift of this tap
                # tap[p] = xn[p + s] (wrap killed by the mask below); XLU lane rotate.
                tap = xn if s == 0 else pltpu.roll(xn, (-s) % HW, 1)
                m = tap_mask[(dh, dw)]
                if m is not None:
                    tap = jnp.where(m, tap, 0.0)
                contrib = jnp.dot(w_ref[kh * 3 + kw], tap,
                                  preferred_element_type=jnp.float32)
                y = contrib if y is None else y + contrib
        y = y + bias
        y = jnp.maximum(y, negative_slope * y)   # LeakyReLU(0.01)
        o_ref[n] = y.astype(o_ref.dtype)         # lane-dense (Cout, HW) store


def _default_grid_steps(n_batch):
    """grid=1 on single-TC chips (v5e/v6e); grid=2 on 2-TC chips (v7x) when it divides N."""
    try:
        kind = jax.devices()[0].device_kind.lower()
    except Exception:
        kind = ""
    two_tc = ("v7" in kind) or ("7x" in kind)
    if two_tc and n_batch >= 2 and n_batch % 2 == 0:
        return 2
    return 1


def head_layer_A_forward(x_nchw, weight_oihw, bias, dropout_index,
                         negative_slope=0.01, grid_steps=None):
    """Forward pass of head_layer_A.

    x_nchw:        (N, Cin, H, W) float32  (PyTorch NCHW convention)
    weight_oihw:   (Cout, Cin, 3, 3)
    bias:          (Cout,)
    dropout_index: int32 array of output-channel indices to drop.
    Returns (N, Cout, H, W) float32.
    """
    N, Cin, H, W = x_nchw.shape
    Cout = weight_oihw.shape[0]
    HW = H * W

    if grid_steps is None:
        grid_steps = _default_grid_steps(N)
    if grid_steps < 1 or N % grid_steps != 0:
        grid_steps = 1
    Nb = N // grid_steps

    # Free reshape only; no padding, no transposes, no post-slice.
    x_flat = x_nchw.reshape(N, Cin, HW).astype(jnp.float32)

    # Fold the channel-dropout mask into weights AND bias (exact: LeakyReLU(0) = 0).
    mask = jnp.ones((Cout,), jnp.float32).at[dropout_index].set(0.0)
    # (Cout, Cin, 3, 3) -> (3, 3, Cout, Cin) -> (9, Cout, Cin); tap t = kh*3 + kw.
    w_taps = jnp.transpose(weight_oihw, (2, 3, 0, 1)).reshape(9, Cout, Cin)
    w_taps = (w_taps * mask[None, :, None]).astype(jnp.float32)
    b2 = (bias * mask).reshape(Cout, 1).astype(jnp.float32)

    kernel = functools.partial(_head_layer_kernel, H=H, W=W, Cin=Cin, Cout=Cout,
                               Nb=Nb, negative_slope=negative_slope)

    out_flat = pl.pallas_call(
        kernel,
        out_shape=jax.ShapeDtypeStruct((N, Cout, HW), jnp.float32),
        grid_spec=pltpu.PrefetchScalarGridSpec(
            num_scalar_prefetch=0,
            grid=(grid_steps,),
            in_specs=[
                pl.BlockSpec((Nb, Cin, HW), lambda i: (i, 0, 0)),
                pl.BlockSpec((9, Cout, Cin), lambda i: (0, 0, 0)),
                pl.BlockSpec((Cout, 1), lambda i: (0, 0)),
            ],
            out_specs=pl.BlockSpec((Nb, Cout, HW), lambda i: (i, 0, 0)),
        ),
        compiler_params=pltpu.CompilerParams(
            dimension_semantics=("parallel",)),
    )(x_flat, w_taps, b2)

    # Free reshape back to NCHW (memory layout unchanged).
    return out_flat.reshape(N, Cout, H, W)


def _reference(x_nchw, weight_oihw, bias, dropout_index, negative_slope=0.01):
    y = jax.lax.conv_general_dilated(
        x_nchw, weight_oihw, window_strides=(1, 1), padding="SAME",
        dimension_numbers=("NCHW", "OIHW", "NCHW"))
    y = y + bias[None, :, None, None]
    y = jnp.where(y >= 0, y, negative_slope * y)
    mask = jnp.ones((weight_oihw.shape[0],), jnp.float32).at[dropout_index].set(0.0)
    return y * mask[None, :, None, None]


if __name__ == "__main__":
    # Module defaults: indim=3, wkdim=64; small spatial 16x16, batch 4.
    N, Cin, H, W = 4, 3, 16, 16
    Cout = 64

    key = jax.random.PRNGKey(0)
    k_x, k_w, k_b = jax.random.split(key, 3)

    # Round test inputs to bf16-representable values so the MXU's default bf16 input
    # rounding is exact for both the kernel and the XLA conv reference (accumulation
    # is f32 on both sides) -> tight, noise-free comparison.
    x = jax.random.normal(k_x, (N, Cin, H, W), dtype=jnp.float32)
    x = x.astype(jnp.bfloat16).astype(jnp.float32)
    fan_in = Cin * 3 * 3
    weight = jax.random.normal(k_w, (Cout, Cin, 3, 3), dtype=jnp.float32) / jnp.sqrt(fan_in)
    weight = weight.astype(jnp.bfloat16).astype(jnp.float32)
    bias = 0.01 * jax.random.normal(k_b, (Cout,), dtype=jnp.float32)
    dropout_index = jnp.array([1, 5, 17, 40], dtype=jnp.int32)   # channels to drop

    out = head_layer_A_forward(x, weight, bias, dropout_index)
    out = jax.block_until_ready(out)

    ref = _reference(x, weight, bias, dropout_index)
    if not jnp.allclose(out, ref, atol=1e-3, rtol=1e-3):
        err = jnp.max(jnp.abs(out - ref))
        raise AssertionError(f"Pallas kernel output mismatch vs reference (max err {err})")

    print("KERNEL_OK")
</pallas_src>

<mosaic_0001>
module attributes {stable_mosaic.version = 11 : i64} {
  func.func @_head_layer_kernel(%arg0: i32, %arg1: memref<4x3x256xf32, #tpu.memory_space<vmem>>, %arg2: memref<9x64x3xf32, #tpu.memory_space<vmem>>, %arg3: memref<64x1xf32, #tpu.memory_space<vmem>>, %arg4: memref<4x64x256xf32, #tpu.memory_space<vmem>>) attributes {dimension_semantics = [#tpu.dimension_semantics<parallel>], iteration_bounds = array<i64: 1>, scalar_prefetch = 0 : i64, scratch_operands = 0 : i64, tpu.core_type = #tpu.core_type<tc>, window_params = [{transform_indices = @transform_0, window_bounds = array<i64: 4, 3, 256>}, {pipeline_mode = #tpu.pipeline_mode<synchronous>, transform_indices = @transform_1, window_bounds = array<i64: 9, 64, 3>}, {pipeline_mode = #tpu.pipeline_mode<synchronous>, transform_indices = @transform_2, window_bounds = array<i64: 64, 1>}, {transform_indices = @transform_3, window_bounds = array<i64: 4, 64, 256>}]} {
    %0 = tpu.iota {dimensions = array<i32: 1>} : vector<1x256xi32>
    %c15_i32 = arith.constant 15 : i32
    %1 = vector.broadcast %c15_i32 : i32 to vector<1x256xi32>
    %2 = arith.andi %0, %1 : vector<1x256xi32>
    %c4_i32 = arith.constant 4 : i32
    %3 = vector.broadcast %c4_i32 : i32 to vector<1x256xi32>
    %4 = arith.shrsi %0, %3 : vector<1x256xi32>
    %c1_i32 = arith.constant 1 : i32
    %5 = vector.broadcast %c1_i32 : i32 to vector<1x256xi32>
    %6 = arith.cmpi sge, %4, %5 : vector<1x256xi32>
    %c14_i32 = arith.constant 14 : i32
    %7 = vector.broadcast %c14_i32 : i32 to vector<1x256xi32>
    %8 = arith.cmpi sle, %4, %7 : vector<1x256xi32>
    %c1_i32_0 = arith.constant 1 : i32
    %9 = vector.broadcast %c1_i32_0 : i32 to vector<1x256xi32>
    %10 = arith.cmpi sge, %2, %9 : vector<1x256xi32>
    %c14_i32_1 = arith.constant 14 : i32
    %11 = vector.broadcast %c14_i32_1 : i32 to vector<1x256xi32>
    %12 = arith.cmpi sle, %2, %11 : vector<1x256xi32>
    %13 = arith.andi %6, %10 : vector<1x256xi1>
    %14 = arith.andi %6, %12 : vector<1x256xi1>
    %15 = arith.andi %8, %10 : vector<1x256xi1>
    %16 = arith.andi %8, %12 : vector<1x256xi1>
    %c0 = arith.constant 0 : index
    %c0_2 = arith.constant 0 : index
    %17 = vector.load %arg3[%c0, %c0_2] : memref<64x1xf32, #tpu.memory_space<vmem>>, vector<64x1xf32>
    %c0_3 = arith.constant 0 : index
    %c0_4 = arith.constant 0 : index
    %c0_5 = arith.constant 0 : index
    %18 = vector.load %arg1[%c0_3, %c0_4, %c0_5] : memref<4x3x256xf32, #tpu.memory_space<vmem>>, vector<1x3x256xf32>
    %19 = vector.shape_cast %18 : vector<1x3x256xf32> to vector<3x256xf32>
    %c17_i32 = arith.constant 17 : i32
    %20 = tpu.dynamic_rotate %19 by %c17_i32 dim 1 : vector<3x256xf32>, i32 -> vector<3x256xf32>
    %cst = arith.constant 0.000000e+00 : f32
    %21 = vector.shape_cast %13 : vector<1x256xi1> to vector<1x256xi1>
    %22 = vector.broadcast %21 : vector<1x256xi1> to vector<3x256xi1>
    %23 = vector.broadcast %cst : f32 to vector<3x256xf32>
    %24 = arith.select %22, %20, %23 : vector<3x256xi1>, vector<3x256xf32>
    %c0_6 = arith.constant 0 : index
    %c0_7 = arith.constant 0 : index
    %c0_8 = arith.constant 0 : index
    %25 = vector.load %arg2[%c0_6, %c0_7, %c0_8] : memref<9x64x3xf32, #tpu.memory_space<vmem>>, vector<1x64x3xf32>
    %26 = vector.shape_cast %25 : vector<1x64x3xf32> to vector<64x3xf32>
    %cst_9 = arith.constant dense<0.000000e+00> : vector<64x256xf32>
    %27 = tpu.matmul %26, %24, %cst_9 {dimension_numbers = #tpu.dot_dimension_numbers<[1], [0], [0], [1], [0, 0, 1, 1], [], []>} : vector<64x3xf32>, vector<3x256xf32>, vector<64x256xf32> -> vector<64x256xf32>
    %c16_i32 = arith.constant 16 : i32
    %28 = tpu.dynamic_rotate %19 by %c16_i32 dim 1 : vector<3x256xf32>, i32 -> vector<3x256xf32>
    %cst_10 = arith.constant 0.000000e+00 : f32
    %29 = vector.shape_cast %6 : vector<1x256xi1> to vector<1x256xi1>
    %30 = vector.broadcast %29 : vector<1x256xi1> to vector<3x256xi1>
    %31 = vector.broadcast %cst_10 : f32 to vector<3x256xf32>
    %32 = arith.select %30, %28, %31 : vector<3x256xi1>, vector<3x256xf32>
    %c1 = arith.constant 1 : index
    %c0_11 = arith.constant 0 : index
    %c0_12 = arith.constant 0 : index
    %33 = vector.load %arg2[%c1, %c0_11, %c0_12] : memref<9x64x3xf32, #tpu.memory_space<vmem>>, vector<1x64x3xf32>
    %34 = vector.shape_cast %33 : vector<1x64x3xf32> to vector<64x3xf32>
    %cst_13 = arith.constant dense<0.000000e+00> : vector<64x256xf32>
    %35 = tpu.matmul %34, %32, %cst_13 {dimension_numbers = #tpu.dot_dimension_numbers<[1], [0], [0], [1], [0, 0, 1, 1], [], []>} : vector<64x3xf32>, vector<3x256xf32>, vector<64x256xf32> -> vector<64x256xf32>
    %36 = arith.addf %27, %35 : vector<64x256xf32>
    %c15_i32_14 = arith.constant 15 : i32
    %37 = tpu.dynamic_rotate %19 by %c15_i32_14 dim 1 : vector<3x256xf32>, i32 -> vector<3x256xf32>
    %cst_15 = arith.constant 0.000000e+00 : f32
    %38 = vector.shape_cast %14 : vector<1x256xi1> to vector<1x256xi1>
    %39 = vector.broadcast %38 : vector<1x256xi1> to vector<3x256xi1>
    %40 = vector.broadcast %cst_15 : f32 to vector<3x256xf32>
    %41 = arith.select %39, %37, %40 : vector<3x256xi1>, vector<3x256xf32>
    %c2 = arith.constant 2 : index
    %c0_16 = arith.constant 0 : index
    %c0_17 = arith.constant 0 : index
    %42 = vector.load %arg2[%c2, %c0_16, %c0_17] : memref<9x64x3xf32, #tpu.memory_space<vmem>>, vector<1x64x3xf32>
    %43 = vector.shape_cast %42 : vector<1x64x3xf32> to vector<64x3xf32>
    %cst_18 = arith.constant dense<0.000000e+00> : vector<64x256xf32>
    %44 = tpu.matmul %43, %41, %cst_18 {dimension_numbers = #tpu.dot_dimension_numbers<[1], [0], [0], [1], [0, 0, 1, 1], [], []>} : vector<64x3xf32>, vector<3x256xf32>, vector<64x256xf32> -> vector<64x256xf32>
    %45 = arith.addf %36, %44 : vector<64x256xf32>
    %c1_i32_19 = arith.constant 1 : i32
    %46 = tpu.dynamic_rotate %19 by %c1_i32_19 dim 1 : vector<3x256xf32>, i32 -> vector<3x256xf32>
    %cst_20 = arith.constant 0.000000e+00 : f32
    %47 = vector.shape_cast %10 : vector<1x256xi1> to vector<1x256xi1>
    %48 = vector.broadcast %47 : vector<1x256xi1> to vector<3x256xi1>
    %49 = vector.broadcast %cst_20 : f32 to vector<3x256xf32>
    %50 = arith.select %48, %46, %49 : vector<3x256xi1>, vector<3x256xf32>
    %c3 = arith.constant 3 : index
    %c0_21 = arith.constant 0 : index
    %c0_22 = arith.constant 0 : index
    %51 = vector.load %arg2[%c3, %c0_21, %c0_22] : memref<9x64x3xf32, #tpu.memory_space<vmem>>, vector<1x64x3xf32>
    %52 = vector.shape_cast %51 : vector<1x64x3xf32> to vector<64x3xf32>
    %cst_23 = arith.constant dense<0.000000e+00> : vector<64x256xf32>
    %53 = tpu.matmul %52, %50, %cst_23 {dimension_numbers = #tpu.dot_dimension_numbers<[1], [0], [0], [1], [0, 0, 1, 1], [], []>} : vector<64x3xf32>, vector<3x256xf32>, vector<64x256xf32> -> vector<64x256xf32>
    %54 = arith.addf %45, %53 : vector<64x256xf32>
    %c4 = arith.constant 4 : index
    %c0_24 = arith.constant 0 : index
    %c0_25 = arith.constant 0 : index
    %55 = vector.load %arg2[%c4, %c0_24, %c0_25] : memref<9x64x3xf32, #tpu.memory_space<vmem>>, vector<1x64x3xf32>
    %56 = vector.shape_cast %55 : vector<1x64x3xf32> to vector<64x3xf32>
    %cst_26 = arith.constant dense<0.000000e+00> : vector<64x256xf32>
    %57 = tpu.matmul %56, %19, %cst_26 {dimension_numbers = #tpu.dot_dimension_numbers<[1], [0], [0], [1], [0, 0, 1, 1], [], []>} : vector<64x3xf32>, vector<3x256xf32>, vector<64x256xf32> -> vector<64x256xf32>
    %58 = arith.addf %54, %57 : vector<64x256xf32>
    %c255_i32 = arith.constant 255 : i32
    %59 = tpu.dynamic_rotate %19 by %c255_i32 dim 1 : vector<3x256xf32>, i32 -> vector<3x256xf32>
    %cst_27 = arith.constant 0.000000e+00 : f32
    %60 = vector.shape_cast %12 : vector<1x256xi1> to vector<1x256xi1>
    %61 = vector.broadcast %60 : vector<1x256xi1> to vector<3x256xi1>
    %62 = vector.broadcast %cst_27 : f32 to vector<3x256xf32>
    %63 = arith.select %61, %59, %62 : vector<3x256xi1>, vector<3x256xf32>
    %c5 = arith.constant 5 : index
    %c0_28 = arith.constant 0 : index
    %c0_29 = arith.constant 0 : index
    %64 = vector.load %arg2[%c5, %c0_28, %c0_29] : memref<9x64x3xf32, #tpu.memory_space<vmem>>, vector<1x64x3xf32>
    %65 = vector.shape_cast %64 : vector<1x64x3xf32> to vector<64x3xf32>
    %cst_30 = arith.constant dense<0.000000e+00> : vector<64x256xf32>
    %66 = tpu.matmul %65, %63, %cst_30 {dimension_numbers = #tpu.dot_dimension_numbers<[1], [0], [0], [1], [0, 0, 1, 1], [], []>} : vector<64x3xf32>, vector<3x256xf32>, vector<64x256xf32> -> vector<64x256xf32>
    %67 = arith.addf %58, %66 : vector<64x256xf32>
    %c241_i32 = arith.constant 241 : i32
    %68 = tpu.dynamic_rotate %19 by %c241_i32 dim 1 : vector<3x256xf32>, i32 -> vector<3x256xf32>
    %cst_31 = arith.constant 0.000000e+00 : f32
    %69 = vector.shape_cast %15 : vector<1x256xi1> to vector<1x256xi1>
    %70 = vector.broadcast %69 : vector<1x256xi1> to vector<3x256xi1>
    %71 = vector.broadcast %cst_31 : f32 to vector<3x256xf32>
    %72 = arith.select %70, %68, %71 : vector<3x256xi1>, vector<3x256xf32>
    %c6 = arith.constant 6 : index
    %c0_32 = arith.constant 0 : index
    %c0_33 = arith.constant 0 : index
    %73 = vector.load %arg2[%c6, %c0_32, %c0_33] : memref<9x64x3xf32, #tpu.memory_space<vmem>>, vector<1x64x3xf32>
    %74 = vector.shape_cast %73 : vector<1x64x3xf32> to vector<64x3xf32>
    %cst_34 = arith.constant dense<0.000000e+00> : vector<64x256xf32>
    %75 = tpu.matmul %74, %72, %cst_34 {dimension_numbers = #tpu.dot_dimension_numbers<[1], [0], [0], [1], [0, 0, 1, 1], [], []>} : vector<64x3xf32>, vector<3x256xf32>, vector<64x256xf32> -> vector<64x256xf32>
    %76 = arith.addf %67, %75 : vector<64x256xf32>
    %c240_i32 = arith.constant 240 : i32
    %77 = tpu.dynamic_rotate %19 by %c240_i32 dim 1 : vector<3x256xf32>, i32 -> vector<3x256xf32>
    %cst_35 = arith.constant 0.000000e+00 : f32
    %78 = vector.shape_cast %8 : vector<1x256xi1> to vector<1x256xi1>
    %79 = vector.broadcast %78 : vector<1x256xi1> to vector<3x256xi1>
    %80 = vector.broadcast %cst_35 : f32 to vector<3x256xf32>
    %81 = arith.select %79, %77, %80 : vector<3x256xi1>, vector<3x256xf32>
    %c7 = arith.constant 7 : index
    %c0_36 = arith.constant 0 : index
    %c0_37 = arith.constant 0 : index
    %82 = vector.load %arg2[%c7, %c0_36, %c0_37] : memref<9x64x3xf32, #tpu.memory_space<vmem>>, vector<1x64x3xf32>
    %83 = vector.shape_cast %82 : vector<1x64x3xf32> to vector<64x3xf32>
    %cst_38 = arith.constant dense<0.000000e+00> : vector<64x256xf32>
    %84 = tpu.matmul %83, %81, %cst_38 {dimension_numbers = #tpu.dot_dimension_numbers<[1], [0], [0], [1], [0, 0, 1, 1], [], []>} : vector<64x3xf32>, vector<3x256xf32>, vector<64x256xf32> -> vector<64x256xf32>
    %85 = arith.addf %76, %84 : vector<64x256xf32>
    %c239_i32 = arith.constant 239 : i32
    %86 = tpu.dynamic_rotate %19 by %c239_i32 dim 1 : vector<3x256xf32>, i32 -> vector<3x256xf32>
    %cst_39 = arith.constant 0.000000e+00 : f32
    %87 = vector.shape_cast %16 : vector<1x256xi1> to vector<1x256xi1>
    %88 = vector.broadcast %87 : vector<1x256xi1> to vector<3x256xi1>
    %89 = vector.broadcast %cst_39 : f32 to vector<3x256xf32>
    %90 = arith.select %88, %86, %89 : vector<3x256xi1>, vector<3x256xf32>
    %c8 = arith.constant 8 : index
    %c0_40 = arith.constant 0 : index
    %c0_41 = arith.constant 0 : index
    %91 = vector.load %arg2[%c8, %c0_40, %c0_41] : memref<9x64x3xf32, #tpu.memory_space<vmem>>, vector<1x64x3xf32>
    %92 = vector.shape_cast %91 : vector<1x64x3xf32> to vector<64x3xf32>
    %cst_42 = arith.constant dense<0.000000e+00> : vector<64x256xf32>
    %93 = tpu.matmul %92, %90, %cst_42 {dimension_numbers = #tpu.dot_dimension_numbers<[1], [0], [0], [1], [0, 0, 1, 1], [], []>} : vector<64x3xf32>, vector<3x256xf32>, vector<64x256xf32> -> vector<64x256xf32>
    %94 = arith.addf %85, %93 : vector<64x256xf32>
    %95 = vector.broadcast %17 : vector<64x1xf32> to vector<64x256xf32>
    %96 = arith.addf %94, %95 : vector<64x256xf32>
    %cst_43 = arith.constant 0.00999999977 : f32
    %97 = vector.broadcast %cst_43 : f32 to vector<64x256xf32>
    %98 = arith.mulf %97, %96 : vector<64x256xf32>
    %99 = arith.maximumf %96, %98 : vector<64x256xf32>
    %c0_44 = arith.constant 0 : index
    %c0_45 = arith.constant 0 : index
    %c0_46 = arith.constant 0 : index
    %100 = vector.load %arg4[%c0_44, %c0_45, %c0_46] : memref<4x64x256xf32, #tpu.memory_space<vmem>>, vector<1x64x256xf32>
    %101 = vector.shape_cast %100 : vector<1x64x256xf32> to vector<64x256xf32>
    %102 = vector.shape_cast %99 : vector<64x256xf32> to vector<1x64x256xf32>
    tpu.vector_store %arg4[%c0_44, %c0_45, %c0_46], %102 {strides = array<i32>} : memref<4x64x256xf32, #tpu.memory_space<vmem>>, vector<1x64x256xf32>,
    %c1_47 = arith.constant 1 : index
    %c0_48 = arith.constant 0 : index
    %c0_49 = arith.constant 0 : index
    %103 = vector.load %arg1[%c1_47, %c0_48, %c0_49] : memref<4x3x256xf32, #tpu.memory_space<vmem>>, vector<1x3x256xf32>
    %104 = vector.shape_cast %103 : vector<1x3x256xf32> to vector<3x256xf32>
    %c17_i32_50 = arith.constant 17 : i32
    %105 = tpu.dynamic_rotate %104 by %c17_i32_50 dim 1 : vector<3x256xf32>, i32 -> vector<3x256xf32>
    %cst_51 = arith.constant 0.000000e+00 : f32
    %106 = vector.shape_cast %13 : vector<1x256xi1> to vector<1x256xi1>
    %107 = vector.broadcast %106 : vector<1x256xi1> to vector<3x256xi1>
    %108 = vector.broadcast %cst_51 : f32 to vector<3x256xf32>
    %109 = arith.select %107, %105, %108 : vector<3x256xi1>, vector<3x256xf32>
    %c0_52 = arith.constant 0 : index
    %c0_53 = arith.constant 0 : index
    %c0_54 = arith.constant 0 : index
    %110 = vector.load %arg2[%c0_52, %c0_53, %c0_54] : memref<9x64x3xf32, #tpu.memory_space<vmem>>, vector<1x64x3xf32>
    %111 = vector.shape_cast %110 : vector<1x64x3xf32> to vector<64x3xf32>
    %cst_55 = arith.constant dense<0.000000e+00> : vector<64x256xf32>
    %112 = tpu.matmul %111, %109, %cst_55 {dimension_numbers = #tpu.dot_dimension_numbers<[1], [0], [0], [1], [0, 0, 1, 1], [], []>} : vector<64x3xf32>, vector<3x256xf32>, vector<64x256xf32> -> vector<64x256xf32>
    %c16_i32_56 = arith.constant 16 : i32
    %113 = tpu.dynamic_rotate %104 by %c16_i32_56 dim 1 : vector<3x256xf32>, i32 -> vector<3x256xf32>
    %cst_57 = arith.constant 0.000000e+00 : f32
    %114 = vector.shape_cast %6 : vector<1x256xi1> to vector<1x256xi1>
    %115 = vector.broadcast %114 : vector<1x256xi1> to vector<3x256xi1>
    %116 = vector.broadcast %cst_57 : f32 to vector<3x256xf32>
    %117 = arith.select %115, %113, %116 : vector<3x256xi1>, vector<3x256xf32>
    %c1_58 = arith.constant 1 : index
    %c0_59 = arith.constant 0 : index
    %c0_60 = arith.constant 0 : index
    %118 = vector.load %arg2[%c1_58, %c0_59, %c0_60] : memref<9x64x3xf32, #tpu.memory_space<vmem>>, vector<1x64x3xf32>
    %119 = vector.shape_cast %118 : vector<1x64x3xf32> to vector<64x3xf32>
    %cst_61 = arith.constant dense<0.000000e+00> : vector<64x256xf32>
    %120 = tpu.matmul %119, %117, %cst_61 {dimension_numbers = #tpu.dot_dimension_numbers<[1], [0], [0], [1], [0, 0, 1, 1], [], []>} : vector<64x3xf32>, vector<3x256xf32>, vector<64x256xf32> -> vector<64x256xf32>
    %121 = arith.addf %112, %120 : vector<64x256xf32>
    %c15_i32_62 = arith.constant 15 : i32
    %122 = tpu.dynamic_rotate %104 by %c15_i32_62 dim 1 : vector<3x256xf32>, i32 -> vector<3x256xf32>
    %cst_63 = arith.constant 0.000000e+00 : f32
    %123 = vector.shape_cast %14 : vector<1x256xi1> to vector<1x256xi1>
    %124 = vector.broadcast %123 : vector<1x256xi1> to vector<3x256xi1>
    %125 = vector.broadcast %cst_63 : f32 to vector<3x256xf32>
    %126 = arith.select %124, %122, %125 : vector<3x256xi1>, vector<3x256xf32>
    %c2_64 = arith.constant 2 : index
    %c0_65 = arith.constant 0 : index
    %c0_66 = arith.constant 0 : index
    %127 = vector.load %arg2[%c2_64, %c0_65, %c0_66] : memref<9x64x3xf32, #tpu.memory_space<vmem>>, vector<1x64x3xf32>
    %128 = vector.shape_cast %127 : vector<1x64x3xf32> to vector<64x3xf32>
    %cst_67 = arith.constant dense<0.000000e+00> : vector<64x256xf32>
    %129 = tpu.matmul %128, %126, %cst_67 {dimension_numbers = #tpu.dot_dimension_numbers<[1], [0], [0], [1], [0, 0, 1, 1], [], []>} : vector<64x3xf32>, vector<3x256xf32>, vector<64x256xf32> -> vector<64x256xf32>
    %130 = arith.addf %121, %129 : vector<64x256xf32>
    %c1_i32_68 = arith.constant 1 : i32
    %131 = tpu.dynamic_rotate %104 by %c1_i32_68 dim 1 : vector<3x256xf32>, i32 -> vector<3x256xf32>
    %cst_69 = arith.constant 0.000000e+00 : f32
    %132 = vector.shape_cast %10 : vector<1x256xi1> to vector<1x256xi1>
    %133 = vector.broadcast %132 : vector<1x256xi1> to vector<3x256xi1>
    %134 = vector.broadcast %cst_69 : f32 to vector<3x256xf32>
    %135 = arith.select %133, %131, %134 : vector<3x256xi1>, vector<3x256xf32>
    %c3_70 = arith.constant 3 : index
    %c0_71 = arith.constant 0 : index
    %c0_72 = arith.constant 0 : index
    %136 = vector.load %arg2[%c3_70, %c0_71, %c0_72] : memref<9x64x3xf32, #tpu.memory_space<vmem>>, vector<1x64x3xf32>
    %137 = vector.shape_cast %136 : vector<1x64x3xf32> to vector<64x3xf32>
    %cst_73 = arith.constant dense<0.000000e+00> : vector<64x256xf32>
    %138 = tpu.matmul %137, %135, %cst_73 {dimension_numbers = #tpu.dot_dimension_numbers<[1], [0], [0], [1], [0, 0, 1, 1], [], []>} : vector<64x3xf32>, vector<3x256xf32>, vector<64x256xf32> -> vector<64x256xf32>
    %139 = arith.addf %130, %138 : vector<64x256xf32>
    %c4_74 = arith.constant 4 : index
    %c0_75 = arith.constant 0 : index
    %c0_76 = arith.constant 0 : index
    %140 = vector.load %arg2[%c4_74, %c0_75, %c0_76] : memref<9x64x3xf32, #tpu.memory_space<vmem>>, vector<1x64x3xf32>
    %141 = vector.shape_cast %140 : vector<1x64x3xf32> to vector<64x3xf32>
    %cst_77 = arith.constant dense<0.000000e+00> : vector<64x256xf32>
    %142 = tpu.matmul %141, %104, %cst_77 {dimension_numbers = #tpu.dot_dimension_numbers<[1], [0], [0], [1], [0, 0, 1, 1], [], []>} : vector<64x3xf32>, vector<3x256xf32>, vector<64x256xf32> -> vector<64x256xf32>
    %143 = arith.addf %139, %142 : vector<64x256xf32>
    %c255_i32_78 = arith.constant 255 : i32
    %144 = tpu.dynamic_rotate %104 by %c255_i32_78 dim 1 : vector<3x256xf32>, i32 -> vector<3x256xf32>
    %cst_79 = arith.constant 0.000000e+00 : f32
    %145 = vector.shape_cast %12 : vector<1x256xi1> to vector<1x256xi1>
    %146 = vector.broadcast %145 : vector<1x256xi1> to vector<3x256xi1>
    %147 = vector.broadcast %cst_79 : f32 to vector<3x256xf32>
    %148 = arith.select %146, %144, %147 : vector<3x256xi1>, vector<3x256xf32>
    %c5_80 = arith.constant 5 : index
    %c0_81 = arith.constant 0 : index
    %c0_82 = arith.constant 0 : index
    %149 = vector.load %arg2[%c5_80, %c0_81, %c0_82] : memref<9x64x3xf32, #tpu.memory_space<vmem>>, vector<1x64x3xf32>
    %150 = vector.shape_cast %149 : vector<1x64x3xf32> to vector<64x3xf32>
    %cst_83 = arith.constant dense<0.000000e+00> : vector<64x256xf32>
    %151 = tpu.matmul %150, %148, %cst_83 {dimension_numbers = #tpu.dot_dimension_numbers<[1], [0], [0], [1], [0, 0, 1, 1], [], []>} : vector<64x3xf32>, vector<3x256xf32>, vector<64x256xf32> -> vector<64x256xf32>
    %152 = arith.addf %143, %151 : vector<64x256xf32>
    %c241_i32_84 = arith.constant 241 : i32
    %153 = tpu.dynamic_rotate %104 by %c241_i32_84 dim 1 : vector<3x256xf32>, i32 -> vector<3x256xf32>
    %cst_85 = arith.constant 0.000000e+00 : f32
    %154 = vector.shape_cast %15 : vector<1x256xi1> to vector<1x256xi1>
    %155 = vector.broadcast %154 : vector<1x256xi1> to vector<3x256xi1>
    %156 = vector.broadcast %cst_85 : f32 to vector<3x256xf32>
    %157 = arith.select %155, %153, %156 : vector<3x256xi1>, vector<3x256xf32>
    %c6_86 = arith.constant 6 : index
    %c0_87 = arith.constant 0 : index
    %c0_88 = arith.constant 0 : index
    %158 = vector.load %arg2[%c6_86, %c0_87, %c0_88] : memref<9x64x3xf32, #tpu.memory_space<vmem>>, vector<1x64x3xf32>
    %159 = vector.shape_cast %158 : vector<1x64x3xf32> to vector<64x3xf32>
    %cst_89 = arith.constant dense<0.000000e+00> : vector<64x256xf32>
    %160 = tpu.matmul %159, %157, %cst_89 {dimension_numbers = #tpu.dot_dimension_numbers<[1], [0], [0], [1], [0, 0, 1, 1], [], []>} : vector<64x3xf32>, vector<3x256xf32>, vector<64x256xf32> -> vector<64x256xf32>
    %161 = arith.addf %152, %160 : vector<64x256xf32>
    %c240_i32_90 = arith.constant 240 : i32
    %162 = tpu.dynamic_rotate %104 by %c240_i32_90 dim 1 : vector<3x256xf32>, i32 -> vector<3x256xf32>
    %cst_91 = arith.constant 0.000000e+00 : f32
    %163 = vector.shape_cast %8 : vector<1x256xi1> to vector<1x256xi1>
    %164 = vector.broadcast %163 : vector<1x256xi1> to vector<3x256xi1>
    %165 = vector.broadcast %cst_91 : f32 to vector<3x256xf32>
    %166 = arith.select %164, %162, %165 : vector<3x256xi1>, vector<3x256xf32>
    %c7_92 = arith.constant 7 : index
    %c0_93 = arith.constant 0 : index
    %c0_94 = arith.constant 0 : index
    %167 = vector.load %arg2[%c7_92, %c0_93, %c0_94] : memref<9x64x3xf32, #tpu.memory_space<vmem>>, vector<1x64x3xf32>
    %168 = vector.shape_cast %167 : vector<1x64x3xf32> to vector<64x3xf32>
    %cst_95 = arith.constant dense<0.000000e+00> : vector<64x256xf32>
    %169 = tpu.matmul %168, %166, %cst_95 {dimension_numbers = #tpu.dot_dimension_numbers<[1], [0], [0], [1], [0, 0, 1, 1], [], []>} : vector<64x3xf32>, vector<3x256xf32>, vector<64x256xf32> -> vector<64x256xf32>
    %170 = arith.addf %161, %169 : vector<64x256xf32>
    %c239_i32_96 = arith.constant 239 : i32
    %171 = tpu.dynamic_rotate %104 by %c239_i32_96 dim 1 : vector<3x256xf32>, i32 -> vector<3x256xf32>
    %cst_97 = arith.constant 0.000000e+00 : f32
    %172 = vector.shape_cast %16 : vector<1x256xi1> to vector<1x256xi1>
    %173 = vector.broadcast %172 : vector<1x256xi1> to vector<3x256xi1>
    %174 = vector.broadcast %cst_97 : f32 to vector<3x256xf32>
    %175 = arith.select %173, %171, %174 : vector<3x256xi1>, vector<3x256xf32>
    %c8_98 = arith.constant 8 : index
    %c0_99 = arith.constant 0 : index
    %c0_100 = arith.constant 0 : index
    %176 = vector.load %arg2[%c8_98, %c0_99, %c0_100] : memref<9x64x3xf32, #tpu.memory_space<vmem>>, vector<1x64x3xf32>
    %177 = vector.shape_cast %176 : vector<1x64x3xf32> to vector<64x3xf32>
    %cst_101 = arith.constant dense<0.000000e+00> : vector<64x256xf32>
    %178 = tpu.matmul %177, %175, %cst_101 {dimension_numbers = #tpu.dot_dimension_numbers<[1], [0], [0], [1], [0, 0, 1, 1], [], []>} : vector<64x3xf32>, vector<3x256xf32>, vector<64x256xf32> -> vector<64x256xf32>
    %179 = arith.addf %170, %178 : vector<64x256xf32>
    %180 = vector.broadcast %17 : vector<64x1xf32> to vector<64x256xf32>
    %181 = arith.addf %179, %180 : vector<64x256xf32>
    %cst_102 = arith.constant 0.00999999977 : f32
    %182 = vector.broadcast %cst_102 : f32 to vector<64x256xf32>
    %183 = arith.mulf %182, %181 : vector<64x256xf32>
    %184 = arith.maximumf %181, %183 : vector<64x256xf32>
    %c1_103 = arith.constant 1 : index
    %c0_104 = arith.constant 0 : index
    %c0_105 = arith.constant 0 : index
    %185 = vector.load %arg4[%c1_103, %c0_104, %c0_105] : memref<4x64x256xf32, #tpu.memory_space<vmem>>, vector<1x64x256xf32>
    %186 = vector.shape_cast %185 : vector<1x64x256xf32> to vector<64x256xf32>
    %187 = vector.shape_cast %184 : vector<64x256xf32> to vector<1x64x256xf32>
    tpu.vector_store %arg4[%c1_103, %c0_104, %c0_105], %187 {strides = array<i32>} : memref<4x64x256xf32, #tpu.memory_space<vmem>>, vector<1x64x256xf32>,
    %c2_106 = arith.constant 2 : index
    %c0_107 = arith.constant 0 : index
    %c0_108 = arith.constant 0 : index
    %188 = vector.load %arg1[%c2_106, %c0_107, %c0_108] : memref<4x3x256xf32, #tpu.memory_space<vmem>>, vector<1x3x256xf32>
    %189 = vector.shape_cast %188 : vector<1x3x256xf32> to vector<3x256xf32>
    %c17_i32_109 = arith.constant 17 : i32
    %190 = tpu.dynamic_rotate %189 by %c17_i32_109 dim 1 : vector<3x256xf32>, i32 -> vector<3x256xf32>
    %cst_110 = arith.constant 0.000000e+00 : f32
    %191 = vector.shape_cast %13 : vector<1x256xi1> to vector<1x256xi1>
    %192 = vector.broadcast %191 : vector<1x256xi1> to vector<3x256xi1>
    %193 = vector.broadcast %cst_110 : f32 to vector<3x256xf32>
    %194 = arith.select %192, %190, %193 : vector<3x256xi1>, vector<3x256xf32>
    %c0_111 = arith.constant 0 : index
    %c0_112 = arith.constant 0 : index
    %c0_113 = arith.constant 0 : index
    %195 = vector.load %arg2[%c0_111, %c0_112, %c0_113] : memref<9x64x3xf32, #tpu.memory_space<vmem>>, vector<1x64x3xf32>
    %196 = vector.shape_cast %195 : vector<1x64x3xf32> to vector<64x3xf32>
    %cst_114 = arith.constant dense<0.000000e+00> : vector<64x256xf32>
    %197 = tpu.matmul %196, %194, %cst_114 {dimension_numbers = #tpu.dot_dimension_numbers<[1], [0], [0], [1], [0, 0, 1, 1], [], []>} : vector<64x3xf32>, vector<3x256xf32>, vector<64x256xf32> -> vector<64x256xf32>
    %c16_i32_115 = arith.constant 16 : i32
    %198 = tpu.dynamic_rotate %189 by %c16_i32_115 dim 1 : vector<3x256xf32>, i32 -> vector<3x256xf32>
    %cst_116 = arith.constant 0.000000e+00 : f32
    %199 = vector.shape_cast %6 : vector<1x256xi1> to vector<1x256xi1>
    %200 = vector.broadcast %199 : vector<1x256xi1> to vector<3x256xi1>
    %201 = vector.broadcast %cst_116 : f32 to vector<3x256xf32>
    %202 = arith.select %200, %198, %201 : vector<3x256xi1>, vector<3x256xf32>
    %c1_117 = arith.constant 1 : index
    %c0_118 = arith.constant 0 : index
    %c0_119 = arith.constant 0 : index
    %203 = vector.load %arg2[%c1_117, %c0_118, %c0_119] : memref<9x64x3xf32, #tpu.memory_space<vmem>>, vector<1x64x3xf32>
    %204 = vector.shape_cast %203 : vector<1x64x3xf32> to vector<64x3xf32>
    %cst_120 = arith.constant dense<0.000000e+00> : vector<64x256xf32>
    %205 = tpu.matmul %204, %202, %cst_120 {dimension_numbers = #tpu.dot_dimension_numbers<[1], [0], [0], [1], [0, 0, 1, 1], [], []>} : vector<64x3xf32>, vector<3x256xf32>, vector<64x256xf32> -> vector<64x256xf32>
    %206 = arith.addf %197, %205 : vector<64x256xf32>
    %c15_i32_121 = arith.constant 15 : i32
    %207 = tpu.dynamic_rotate %189 by %c15_i32_121 dim 1 : vector<3x256xf32>, i32 -> vector<3x256xf32>
    %cst_122 = arith.constant 0.000000e+00 : f32
    %208 = vector.shape_cast %14 : vector<1x256xi1> to vector<1x256xi1>
    %209 = vector.broadcast %208 : vector<1x256xi1> to vector<3x256xi1>
    %210 = vector.broadcast %cst_122 : f32 to vector<3x256xf32>
    %211 = arith.select %209, %207, %210 : vector<3x256xi1>, vector<3x256xf32>
    %c2_123 = arith.constant 2 : index
    %c0_124 = arith.constant 0 : index
    %c0_125 = arith.constant 0 : index
    %212 = vector.load %arg2[%c2_123, %c0_124, %c0_125] : memref<9x64x3xf32, #tpu.memory_space<vmem>>, vector<1x64x3xf32>
    %213 = vector.shape_cast %212 : vector<1x64x3xf32> to vector<64x3xf32>
    %cst_126 = arith.constant dense<0.000000e+00> : vector<64x256xf32>
    %214 = tpu.matmul %213, %211, %cst_126 {dimension_numbers = #tpu.dot_dimension_numbers<[1], [0], [0], [1], [0, 0, 1, 1], [], []>} : vector<64x3xf32>, vector<3x256xf32>, vector<64x256xf32> -> vector<64x256xf32>
    %215 = arith.addf %206, %214 : vector<64x256xf32>
    %c1_i32_127 = arith.constant 1 : i32
    %216 = tpu.dynamic_rotate %189 by %c1_i32_127 dim 1 : vector<3x256xf32>, i32 -> vector<3x256xf32>
    %cst_128 = arith.constant 0.000000e+00 : f32
    %217 = vector.shape_cast %10 : vector<1x256xi1> to vector<1x256xi1>
    %218 = vector.broadcast %217 : vector<1x256xi1> to vector<3x256xi1>
    %219 = vector.broadcast %cst_128 : f32 to vector<3x256xf32>
    %220 = arith.select %218, %216, %219 : vector<3x256xi1>, vector<3x256xf32>
    %c3_129 = arith.constant 3 : index
    %c0_130 = arith.constant 0 : index
    %c0_131 = arith.constant 0 : index
    %221 = vector.load %arg2[%c3_129, %c0_130, %c0_131] : memref<9x64x3xf32, #tpu.memory_space<vmem>>, vector<1x64x3xf32>
    %222 = vector.shape_cast %221 : vector<1x64x3xf32> to vector<64x3xf32>
    %cst_132 = arith.constant dense<0.000000e+00> : vector<64x256xf32>
    %223 = tpu.matmul %222, %220, %cst_132 {dimension_numbers = #tpu.dot_dimension_numbers<[1], [0], [0], [1], [0, 0, 1, 1], [], []>} : vector<64x3xf32>, vector<3x256xf32>, vector<64x256xf32> -> vector<64x256xf32>
    %224 = arith.addf %215, %223 : vector<64x256xf32>
    %c4_133 = arith.constant 4 : index
    %c0_134 = arith.constant 0 : index
    %c0_135 = arith.constant 0 : index
    %225 = vector.load %arg2[%c4_133, %c0_134, %c0_135] : memref<9x64x3xf32, #tpu.memory_space<vmem>>, vector<1x64x3xf32>
    %226 = vector.shape_cast %225 : vector<1x64x3xf32> to vector<64x3xf32>
    %cst_136 = arith.constant dense<0.000000e+00> : vector<64x256xf32>
    %227 = tpu.matmul %226, %189, %cst_136 {dimension_numbers = #tpu.dot_dimension_numbers<[1], [0], [0], [1], [0, 0, 1, 1], [], []>} : vector<64x3xf32>, vector<3x256xf32>, vector<64x256xf32> -> vector<64x256xf32>
    %228 = arith.addf %224, %227 : vector<64x256xf32>
    %c255_i32_137 = arith.constant 255 : i32
    %229 = tpu.dynamic_rotate %189 by %c255_i32_137 dim 1 : vector<3x256xf32>, i32 -> vector<3x256xf32>
    %cst_138 = arith.constant 0.000000e+00 : f32
    %230 = vector.shape_cast %12 : vector<1x256xi1> to vector<1x256xi1>
    %231 = vector.broadcast %230 : vector<1x256xi1> to vector<3x256xi1>
    %232 = vector.broadcast %cst_138 : f32 to vector<3x256xf32>
    %233 = arith.select %231, %229, %232 : vector<3x256xi1>, vector<3x256xf32>
    %c5_139 = arith.constant 5 : index
    %c0_140 = arith.constant 0 : index
    %c0_141 = arith.constant 0 : index
    %234 = vector.load %arg2[%c5_139, %c0_140, %c0_141] : memref<9x64x3xf32, #tpu.memory_space<vmem>>, vector<1x64x3xf32>
    %235 = vector.shape_cast %234 : vector<1x64x3xf32> to vector<64x3xf32>
    %cst_142 = arith.constant dense<0.000000e+00> : vector<64x256xf32>
    %236 = tpu.matmul %235, %233, %cst_142 {dimension_numbers = #tpu.dot_dimension_numbers<[1], [0], [0], [1], [0, 0, 1, 1], [], []>} : vector<64x3xf32>, vector<3x256xf32>, vector<64x256xf32> -> vector<64x256xf32>
    %237 = arith.addf %228, %236 : vector<64x256xf32>
    %c241_i32_143 = arith.constant 241 : i32
    %238 = tpu.dynamic_rotate %189 by %c241_i32_143 dim 1 : vector<3x256xf32>, i32 -> vector<3x256xf32>
    %cst_144 = arith.constant 0.000000e+00 : f32
    %239 = vector.shape_cast %15 : vector<1x256xi1> to vector<1x256xi1>
    %240 = vector.broadcast %239 : vector<1x256xi1> to vector<3x256xi1>
    %241 = vector.broadcast %cst_144 : f32 to vector<3x256xf32>
    %242 = arith.select %240, %238, %241 : vector<3x256xi1>, vector<3x256xf32>
    %c6_145 = arith.constant 6 : index
    %c0_146 = arith.constant 0 : index
    %c0_147 = arith.constant 0 : index
    %243 = vector.load %arg2[%c6_145, %c0_146, %c0_147] : memref<9x64x3xf32, #tpu.memory_space<vmem>>, vector<1x64x3xf32>
    %244 = vector.shape_cast %243 : vector<1x64x3xf32> to vector<64x3xf32>
    %cst_148 = arith.constant dense<0.000000e+00> : vector<64x256xf32>
    %245 = tpu.matmul %244, %242, %cst_148 {dimension_numbers = #tpu.dot_dimension_numbers<[1], [0], [0], [1], [0, 0, 1, 1], [], []>} : vector<64x3xf32>, vector<3x256xf32>, vector<64x256xf32> -> vector<64x256xf32>
    %246 = arith.addf %237, %245 : vector<64x256xf32>
    %c240_i32_149 = arith.constant 240 : i32
    %247 = tpu.dynamic_rotate %189 by %c240_i32_149 dim 1 : vector<3x256xf32>, i32 -> vector<3x256xf32>
    %cst_150 = arith.constant 0.000000e+00 : f32
    %248 = vector.shape_cast %8 : vector<1x256xi1> to vector<1x256xi1>
    %249 = vector.broadcast %248 : vector<1x256xi1> to vector<3x256xi1>
    %250 = vector.broadcast %cst_150 : f32 to vector<3x256xf32>
    %251 = arith.select %249, %247, %250 : vector<3x256xi1>, vector<3x256xf32>
    %c7_151 = arith.constant 7 : index
    %c0_152 = arith.constant 0 : index
    %c0_153 = arith.constant 0 : index
    %252 = vector.load %arg2[%c7_151, %c0_152, %c0_153] : memref<9x64x3xf32, #tpu.memory_space<vmem>>, vector<1x64x3xf32>
    %253 = vector.shape_cast %252 : vector<1x64x3xf32> to vector<64x3xf32>
    %cst_154 = arith.constant dense<0.000000e+00> : vector<64x256xf32>
    %254 = tpu.matmul %253, %251, %cst_154 {dimension_numbers = #tpu.dot_dimension_numbers<[1], [0], [0], [1], [0, 0, 1, 1], [], []>} : vector<64x3xf32>, vector<3x256xf32>, vector<64x256xf32> -> vector<64x256xf32>
    %255 = arith.addf %246, %254 : vector<64x256xf32>
    %c239_i32_155 = arith.constant 239 : i32
    %256 = tpu.dynamic_rotate %189 by %c239_i32_155 dim 1 : vector<3x256xf32>, i32 -> vector<3x256xf32>
    %cst_156 = arith.constant 0.000000e+00 : f32
    %257 = vector.shape_cast %16 : vector<1x256xi1> to vector<1x256xi1>
    %258 = vector.broadcast %257 : vector<1x256xi1> to vector<3x256xi1>
    %259 = vector.broadcast %cst_156 : f32 to vector<3x256xf32>
    %260 = arith.select %258, %256, %259 : vector<3x256xi1>, vector<3x256xf32>
    %c8_157 = arith.constant 8 : index
    %c0_158 = arith.constant 0 : index
    %c0_159 = arith.constant 0 : index
    %261 = vector.load %arg2[%c8_157, %c0_158, %c0_159] : memref<9x64x3xf32, #tpu.memory_space<vmem>>, vector<1x64x3xf32>
    %262 = vector.shape_cast %261 : vector<1x64x3xf32> to vector<64x3xf32>
    %cst_160 = arith.constant dense<0.000000e+00> : vector<64x256xf32>
    %263 = tpu.matmul %262, %260, %cst_160 {dimension_numbers = #tpu.dot_dimension_numbers<[1], [0], [0], [1], [0, 0, 1, 1], [], []>} : vector<64x3xf32>, vector<3x256xf32>, vector<64x256xf32> -> vector<64x256xf32>
    %264 = arith.addf %255, %263 : vector<64x256xf32>
    %265 = vector.broadcast %17 : vector<64x1xf32> to vector<64x256xf32>
    %266 = arith.addf %264, %265 : vector<64x256xf32>
    %cst_161 = arith.constant 0.00999999977 : f32
    %267 = vector.broadcast %cst_161 : f32 to vector<64x256xf32>
    %268 = arith.mulf %267, %266 : vector<64x256xf32>
    %269 = arith.maximumf %266, %268 : vector<64x256xf32>
    %c2_162 = arith.constant 2 : index
    %c0_163 = arith.constant 0 : index
    %c0_164 = arith.constant 0 : index
    %270 = vector.load %arg4[%c2_162, %c0_163, %c0_164] : memref<4x64x256xf32, #tpu.memory_space<vmem>>, vector<1x64x256xf32>
    %271 = vector.shape_cast %270 : vector<1x64x256xf32> to vector<64x256xf32>
    %272 = vector.shape_cast %269 : vector<64x256xf32> to vector<1x64x256xf32>
    tpu.vector_store %arg4[%c2_162, %c0_163, %c0_164], %272 {strides = array<i32>} : memref<4x64x256xf32, #tpu.memory_space<vmem>>, vector<1x64x256xf32>,
    %c3_165 = arith.constant 3 : index
    %c0_166 = arith.constant 0 : index
    %c0_167 = arith.constant 0 : index
    %273 = vector.load %arg1[%c3_165, %c0_166, %c0_167] : memref<4x3x256xf32, #tpu.memory_space<vmem>>, vector<1x3x256xf32>
    %274 = vector.shape_cast %273 : vector<1x3x256xf32> to vector<3x256xf32>
    %c17_i32_168 = arith.constant 17 : i32
    %275 = tpu.dynamic_rotate %274 by %c17_i32_168 dim 1 : vector<3x256xf32>, i32 -> vector<3x256xf32>
    %cst_169 = arith.constant 0.000000e+00 : f32
    %276 = vector.shape_cast %13 : vector<1x256xi1> to vector<1x256xi1>
    %277 = vector.broadcast %276 : vector<1x256xi1> to vector<3x256xi1>
    %278 = vector.broadcast %cst_169 : f32 to vector<3x256xf32>
    %279 = arith.select %277, %275, %278 : vector<3x256xi1>, vector<3x256xf32>
    %c0_170 = arith.constant 0 : index
    %c0_171 = arith.constant 0 : index
    %c0_172 = arith.constant 0 : index
    %280 = vector.load %arg2[%c0_170, %c0_171, %c0_172] : memref<9x64x3xf32, #tpu.memory_space<vmem>>, vector<1x64x3xf32>
    %281 = vector.shape_cast %280 : vector<1x64x3xf32> to vector<64x3xf32>
    %cst_173 = arith.constant dense<0.000000e+00> : vector<64x256xf32>
    %282 = tpu.matmul %281, %279, %cst_173 {dimension_numbers = #tpu.dot_dimension_numbers<[1], [0], [0], [1], [0, 0, 1, 1], [], []>} : vector<64x3xf32>, vector<3x256xf32>, vector<64x256xf32> -> vector<64x256xf32>
    %c16_i32_174 = arith.constant 16 : i32
    %283 = tpu.dynamic_rotate %274 by %c16_i32_174 dim 1 : vector<3x256xf32>, i32 -> vector<3x256xf32>
    %cst_175 = arith.constant 0.000000e+00 : f32
    %284 = vector.shape_cast %6 : vector<1x256xi1> to vector<1x256xi1>
    %285 = vector.broadcast %284 : vector<1x256xi1> to vector<3x256xi1>
    %286 = vector.broadcast %cst_175 : f32 to vector<3x256xf32>
    %287 = arith.select %285, %283, %286 : vector<3x256xi1>, vector<3x256xf32>
    %c1_176 = arith.constant 1 : index
    %c0_177 = arith.constant 0 : index
    %c0_178 = arith.constant 0 : index
    %288 = vector.load %arg2[%c1_176, %c0_177, %c0_178] : memref<9x64x3xf32, #tpu.memory_space<vmem>>, vector<1x64x3xf32>
    %289 = vector.shape_cast %288 : vector<1x64x3xf32> to vector<64x3xf32>
    %cst_179 = arith.constant dense<0.000000e+00> : vector<64x256xf32>
    %290 = tpu.matmul %289, %287, %cst_179 {dimension_numbers = #tpu.dot_dimension_numbers<[1], [0], [0], [1], [0, 0, 1, 1], [], []>} : vector<64x3xf32>, vector<3x256xf32>, vector<64x256xf32> -> vector<64x256xf32>
    %291 = arith.addf %282, %290 : vector<64x256xf32>
    %c15_i32_180 = arith.constant 15 : i32
    %292 = tpu.dynamic_rotate %274 by %c15_i32_180 dim 1 : vector<3x256xf32>, i32 -> vector<3x256xf32>
    %cst_181 = arith.constant 0.000000e+00 : f32
    %293 = vector.shape_cast %14 : vector<1x256xi1> to vector<1x256xi1>
    %294 = vector.broadcast %293 : vector<1x256xi1> to vector<3x256xi1>
    %295 = vector.broadcast %cst_181 : f32 to vector<3x256xf32>
    %296 = arith.select %294, %292, %295 : vector<3x256xi1>, vector<3x256xf32>
    %c2_182 = arith.constant 2 : index
    %c0_183 = arith.constant 0 : index
    %c0_184 = arith.constant 0 : index
    %297 = vector.load %arg2[%c2_182, %c0_183, %c0_184] : memref<9x64x3xf32, #tpu.memory_space<vmem>>, vector<1x64x3xf32>
    %298 = vector.shape_cast %297 : vector<1x64x3xf32> to vector<64x3xf32>
    %cst_185 = arith.constant dense<0.000000e+00> : vector<64x256xf32>
    %299 = tpu.matmul %298, %296, %cst_185 {dimension_numbers = #tpu.dot_dimension_numbers<[1], [0], [0], [1], [0, 0, 1, 1], [], []>} : vector<64x3xf32>, vector<3x256xf32>, vector<64x256xf32> -> vector<64x256xf32>
    %300 = arith.addf %291, %299 : vector<64x256xf32>
    %c1_i32_186 = arith.constant 1 : i32
    %301 = tpu.dynamic_rotate %274 by %c1_i32_186 dim 1 : vector<3x256xf32>, i32 -> vector<3x256xf32>
    %cst_187 = arith.constant 0.000000e+00 : f32
    %302 = vector.shape_cast %10 : vector<1x256xi1> to vector<1x256xi1>
    %303 = vector.broadcast %302 : vector<1x256xi1> to vector<3x256xi1>
    %304 = vector.broadcast %cst_187 : f32 to vector<3x256xf32>
    %305 = arith.select %303, %301, %304 : vector<3x256xi1>, vector<3x256xf32>
    %c3_188 = arith.constant 3 : index
    %c0_189 = arith.constant 0 : index
    %c0_190 = arith.constant 0 : index
    %306 = vector.load %arg2[%c3_188, %c0_189, %c0_190] : memref<9x64x3xf32, #tpu.memory_space<vmem>>, vector<1x64x3xf32>
    %307 = vector.shape_cast %306 : vector<1x64x3xf32> to vector<64x3xf32>
    %cst_191 = arith.constant dense<0.000000e+00> : vector<64x256xf32>
    %308 = tpu.matmul %307, %305, %cst_191 {dimension_numbers = #tpu.dot_dimension_numbers<[1], [0], [0], [1], [0, 0, 1, 1], [], []>} : vector<64x3xf32>, vector<3x256xf32>, vector<64x256xf32> -> vector<64x256xf32>
    %309 = arith.addf %300, %308 : vector<64x256xf32>
    %c4_192 = arith.constant 4 : index
    %c0_193 = arith.constant 0 : index
    %c0_194 = arith.constant 0 : index
    %310 = vector.load %arg2[%c4_192, %c0_193, %c0_194] : memref<9x64x3xf32, #tpu.memory_space<vmem>>, vector<1x64x3xf32>
    %311 = vector.shape_cast %310 : vector<1x64x3xf32> to vector<64x3xf32>
    %cst_195 = arith.constant dense<0.000000e+00> : vector<64x256xf32>
    %312 = tpu.matmul %311, %274, %cst_195 {dimension_numbers = #tpu.dot_dimension_numbers<[1], [0], [0], [1], [0, 0, 1, 1], [], []>} : vector<64x3xf32>, vector<3x256xf32>, vector<64x256xf32> -> vector<64x256xf32>
    %313 = arith.addf %309, %312 : vector<64x256xf32>
    %c255_i32_196 = arith.constant 255 : i32
    %314 = tpu.dynamic_rotate %274 by %c255_i32_196 dim 1 : vector<3x256xf32>, i32 -> vector<3x256xf32>
    %cst_197 = arith.constant 0.000000e+00 : f32
    %315 = vector.shape_cast %12 : vector<1x256xi1> to vector<1x256xi1>
    %316 = vector.broadcast %315 : vector<1x256xi1> to vector<3x256xi1>
    %317 = vector.broadcast %cst_197 : f32 to vector<3x256xf32>
    %318 = arith.select %316, %314, %317 : vector<3x256xi1>, vector<3x256xf32>
    %c5_198 = arith.constant 5 : index
    %c0_199 = arith.constant 0 : index
    %c0_200 = arith.constant 0 : index
    %319 = vector.load %arg2[%c5_198, %c0_199, %c0_200] : memref<9x64x3xf32, #tpu.memory_space<vmem>>, vector<1x64x3xf32>
    %320 = vector.shape_cast %319 : vector<1x64x3xf32> to vector<64x3xf32>
    %cst_201 = arith.constant dense<0.000000e+00> : vector<64x256xf32>
    %321 = tpu.matmul %320, %318, %cst_201 {dimension_numbers = #tpu.dot_dimension_numbers<[1], [0], [0], [1], [0, 0, 1, 1], [], []>} : vector<64x3xf32>, vector<3x256xf32>, vector<64x256xf32> -> vector<64x256xf32>
    %322 = arith.addf %313, %321 : vector<64x256xf32>
    %c241_i32_202 = arith.constant 241 : i32
    %323 = tpu.dynamic_rotate %274 by %c241_i32_202 dim 1 : vector<3x256xf32>, i32 -> vector<3x256xf32>
    %cst_203 = arith.constant 0.000000e+00 : f32
    %324 = vector.shape_cast %15 : vector<1x256xi1> to vector<1x256xi1>
    %325 = vector.broadcast %324 : vector<1x256xi1> to vector<3x256xi1>
    %326 = vector.broadcast %cst_203 : f32 to vector<3x256xf32>
    %327 = arith.select %325, %323, %326 : vector<3x256xi1>, vector<3x256xf32>
    %c6_204 = arith.constant 6 : index
    %c0_205 = arith.constant 0 : index
    %c0_206 = arith.constant 0 : index
    %328 = vector.load %arg2[%c6_204, %c0_205, %c0_206] : memref<9x64x3xf32, #tpu.memory_space<vmem>>, vector<1x64x3xf32>
    %329 = vector.shape_cast %328 : vector<1x64x3xf32> to vector<64x3xf32>
    %cst_207 = arith.constant dense<0.000000e+00> : vector<64x256xf32>
    %330 = tpu.matmul %329, %327, %cst_207 {dimension_numbers = #tpu.dot_dimension_numbers<[1], [0], [0], [1], [0, 0, 1, 1], [], []>} : vector<64x3xf32>, vector<3x256xf32>, vector<64x256xf32> -> vector<64x256xf32>
    %331 = arith.addf %322, %330 : vector<64x256xf32>
    %c240_i32_208 = arith.constant 240 : i32
    %332 = tpu.dynamic_rotate %274 by %c240_i32_208 dim 1 : vector<3x256xf32>, i32 -> vector<3x256xf32>
    %cst_209 = arith.constant 0.000000e+00 : f32
    %333 = vector.shape_cast %8 : vector<1x256xi1> to vector<1x256xi1>
    %334 = vector.broadcast %333 : vector<1x256xi1> to vector<3x256xi1>
    %335 = vector.broadcast %cst_209 : f32 to vector<3x256xf32>
    %336 = arith.select %334, %332, %335 : vector<3x256xi1>, vector<3x256xf32>
    %c7_210 = arith.constant 7 : index
    %c0_211 = arith.constant 0 : index
    %c0_212 = arith.constant 0 : index
    %337 = vector.load %arg2[%c7_210, %c0_211, %c0_212] : memref<9x64x3xf32, #tpu.memory_space<vmem>>, vector<1x64x3xf32>
    %338 = vector.shape_cast %337 : vector<1x64x3xf32> to vector<64x3xf32>
    %cst_213 = arith.constant dense<0.000000e+00> : vector<64x256xf32>
    %339 = tpu.matmul %338, %336, %cst_213 {dimension_numbers = #tpu.dot_dimension_numbers<[1], [0], [0], [1], [0, 0, 1, 1], [], []>} : vector<64x3xf32>, vector<3x256xf32>, vector<64x256xf32> -> vector<64x256xf32>
    %340 = arith.addf %331, %339 : vector<64x256xf32>
    %c239_i32_214 = arith.constant 239 : i32
    %341 = tpu.dynamic_rotate %274 by %c239_i32_214 dim 1 : vector<3x256xf32>, i32 -> vector<3x256xf32>
    %cst_215 = arith.constant 0.000000e+00 : f32
    %342 = vector.shape_cast %16 : vector<1x256xi1> to vector<1x256xi1>
    %343 = vector.broadcast %342 : vector<1x256xi1> to vector<3x256xi1>
    %344 = vector.broadcast %cst_215 : f32 to vector<3x256xf32>
    %345 = arith.select %343, %341, %344 : vector<3x256xi1>, vector<3x256xf32>
    %c8_216 = arith.constant 8 : index
    %c0_217 = arith.constant 0 : index
    %c0_218 = arith.constant 0 : index
    %346 = vector.load %arg2[%c8_216, %c0_217, %c0_218] : memref<9x64x3xf32, #tpu.memory_space<vmem>>, vector<1x64x3xf32>
    %347 = vector.shape_cast %346 : vector<1x64x3xf32> to vector<64x3xf32>
    %cst_219 = arith.constant dense<0.000000e+00> : vector<64x256xf32>
    %348 = tpu.matmul %347, %345, %cst_219 {dimension_numbers = #tpu.dot_dimension_numbers<[1], [0], [0], [1], [0, 0, 1, 1], [], []>} : vector<64x3xf32>, vector<3x256xf32>, vector<64x256xf32> -> vector<64x256xf32>
    %349 = arith.addf %340, %348 : vector<64x256xf32>
    %350 = vector.broadcast %17 : vector<64x1xf32> to vector<64x256xf32>
    %351 = arith.addf %349, %350 : vector<64x256xf32>
    %cst_220 = arith.constant 0.00999999977 : f32
    %352 = vector.broadcast %cst_220 : f32 to vector<64x256xf32>
    %353 = arith.mulf %352, %351 : vector<64x256xf32>
    %354 = arith.maximumf %351, %353 : vector<64x256xf32>
    %c3_221 = arith.constant 3 : index
    %c0_222 = arith.constant 0 : index
    %c0_223 = arith.constant 0 : index
    %355 = vector.load %arg4[%c3_221, %c0_222, %c0_223] : memref<4x64x256xf32, #tpu.memory_space<vmem>>, vector<1x64x256xf32>
    %356 = vector.shape_cast %355 : vector<1x64x256xf32> to vector<64x256xf32>
    %357 = vector.shape_cast %354 : vector<64x256xf32> to vector<1x64x256xf32>
    tpu.vector_store %arg4[%c3_221, %c0_222, %c0_223], %357 {strides = array<i32>} : memref<4x64x256xf32, #tpu.memory_space<vmem>>, vector<1x64x256xf32>,
    return
  }
  func.func @transform_0(%arg0: i32) -> (i32, i32, i32) {
    %c0_i32 = arith.constant 0 : i32
    %c0_i32_0 = arith.constant 0 : i32
    %c0_i32_1 = arith.constant 0 : i32
    return %arg0, %c0_i32, %c0_i32_0 : i32, i32, i32
  }
  func.func @transform_1(%arg0: i32) -> (i32, i32, i32) {
    %c0_i32 = arith.constant 0 : i32
    %c0_i32_0 = arith.constant 0 : i32
    %c0_i32_1 = arith.constant 0 : i32
    %c0_i32_2 = arith.constant 0 : i32
    return %c0_i32, %c0_i32_0, %c0_i32_1 : i32, i32, i32
  }
  func.func @transform_2(%arg0: i32) -> (i32, i32) {
    %c0_i32 = arith.constant 0 : i32
    %c0_i32_0 = arith.constant 0 : i32
    %c0_i32_1 = arith.constant 0 : i32
    return %c0_i32, %c0_i32_0 : i32, i32
  }
  func.func @transform_3(%arg0: i32) -> (i32, i32, i32) {
    %c0_i32 = arith.constant 0 : i32
    %c0_i32_0 = arith.constant 0 : i32
    %c0_i32_1 = arith.constant 0 : i32
    return %arg0, %c0_i32, %c0_i32_0 : i32, i32, i32
  }
}

</mosaic_0001>

<llo_original>
// kernel: tpu_custom_call.1
$region0: #{tpu_custom_call.1}
  #allocation0 [shape = 'u32[]', space=smem, size = 0x4, offset = 0x4, fixed_abs, tag = 'smem constant byte address 0x4 - core index']
  #allocation1 [shape = 'u32[72,128]{1,0:T(1,128)}', space=vmem, size = 0x9000, scoped, tag = 'internal scratch']
  %s0 = inlined_call_operand.vmem [shape: f32[4,3,256], index: 0, kind: input, shape index: {}]
  %s1 = inlined_call_operand.vmem [shape: f32[9,64,3], index: 1, kind: input, shape index: {}]
  %s2 = inlined_call_operand.vmem [shape: f32[64,1], index: 2, kind: input, shape index: {}]
  %s3 = inlined_call_operand.hbm [shape: f32[4,64,256], index: 3, kind: output, shape index: {}]
  %s4 = sld [smem:[#allocation0]]
  $region22: #{tpu_custom_call.1} parent=0
    _
  %s6 = ssub.s32 1, %s4
  %s7 = scalar_select 0, %s6, %s4
  $region1: #{tpu_custom_call.1} parent=0
    #allocation2 [shape = 'u8[262144]{0}', space=vmem, size = 0x40000, scoped, tag = 'output window, operand 0, single buffered']
    #allocation3 [shape = 's32[1]{0}', space=sflag, size = 0x4, scoped, tag = 'scoped memory for tpu_custom_call.1']
    %8 = vsyncpa [#allocation3], 0
    // Predicated region
    $region2: #{tpu_custom_call.1} parent=1 // pred_check
      _
    $region3: #{tpu_custom_call.1} parent=1 // pred_check_branch
      %10 = sbr.rel (0) target = $region5
    $region4: #{tpu_custom_call.1} parent=1 // pred_region
      _
    $region5: #{tpu_custom_call.1} parent=1 // pred_fallthru
      _
    // Predicated region
    $region6: #{tpu_custom_call.1} parent=1 // pred_check
      _
    $region7: #{tpu_custom_call.1} parent=1 // pred_check_branch
      %12 = sbr.rel (0) target = $region9
    $region8: #{tpu_custom_call.1} parent=1 // pred_region
      _
    $region9: #{tpu_custom_call.1} parent=1 // pred_fallthru
      _
    // Predicated region
    $region10: #{tpu_custom_call.1} parent=1 // pred_check
      _
    $region11: #{tpu_custom_call.1} parent=1 // pred_check_branch
      %14 = sbr.rel (0) target = $region13
    $region12: #{tpu_custom_call.1} parent=1 // pred_region
      _
    $region13: #{tpu_custom_call.1} parent=1 // pred_fallthru
      _
    %v15 = vlaneseq
    %v16 = vand.u32 %v15, 127
    %v17 = vadd.s32 %v16, 128
    %v18 = vand.u32 %v16, 15
    %v19 = vand.u32 %v17, 15
    %v20 = vshra.s32 %v16, 4
    %v21 = vshra.s32 %v17, 4
    %vm22 = vcmp.ge.s32.totalorder %v20, 1
    %vm23 = vcmp.ge.s32.totalorder %v21, 1
    %vm24 = vcmp.le.s32.totalorder %v20, 14
    %vm25 = vcmp.le.s32.totalorder %v21, 14
    %vm26 = vcmp.ge.s32.totalorder %v18, 1
    %vm27 = vcmp.ge.s32.totalorder %v19, 1
    %vm28 = vcmp.le.s32.totalorder %v18, 14
    %vm29 = vcmp.le.s32.totalorder %v19, 14
    %vm30 = vmand %vm22, %vm26
    %vm31 = vmand %vm23, %vm27
    %vm32 = vmand %vm22, %vm28
    %vm33 = vmand %vm23, %vm29
    %vm34 = vmand %vm24, %vm26
    %vm35 = vmand %vm25, %vm27
    %vm36 = vmand %vm24, %vm28
    %vm37 = vmand %vm25, %vm29
    %v38 = vld [vmem:[%s2] sm:$0xff]
    %v39 = vld [vmem:[%s2 + $0x8] sm:$0xff]
    %v40 = vld [vmem:[%s2 + $0x10] sm:$0xff]
    %v41 = vld [vmem:[%s2 + $0x18] sm:$0xff]
    %v42 = vld [vmem:[%s2 + $0x20] sm:$0xff]
    %v43 = vld [vmem:[%s2 + $0x28] sm:$0xff]
    %v44 = vld [vmem:[%s2 + $0x30] sm:$0xff]
    %v45 = vld [vmem:[%s2 + $0x38] sm:$0xff]
    %v46 = vld [vmem:[%s0] sm:$0x77]
    %48 = vst [vmem:[#allocation1] ss:$2 sm:$0xff] %v46
    %v49 = vld.sshfl [vmem:[#allocation1] sm:$0xff pattern:$0x75316420]
    %v50 = vld.sshfl [vmem:[#allocation1 + $0x8] sm:$0xff pattern:$0x75316420]
    %53 = vrot.lane.b32.xlu0 %v49, 17
    %v54 = vpop.permute.xlu0 %53
    %55 = vrot.lane.b32.xlu0 %v50, 17
    %v56 = vpop.permute.xlu0 %55
    %vm57 = vcmp.lt.s32.totalorder %v16, 17
    %v58 = vsel %vm57, %v54, %v56
    %v59 = vsel %vm57, %v56, %v54
    %v60 = vsel %vm30, 1, 0
    %v61 = vsel %vm31, 1, 0
    %vm62 = vcmp.eq.s32.totalorder %v60, 1
    %vm63 = vcmp.eq.s32.totalorder %v61, 1
    %v64 = vsel %vm62, %v59, 0.0
    %v65 = vsel %vm63, %v58, 0.0
    %v66 = vld [vmem:[%s1] sm:$0xff]
    %v67 = vld [vmem:[%s1 + $0x8] sm:$0xff]
    %v68 = vld [vmem:[%s1 + $0x10] sm:$0xff]
    %v69 = vld [vmem:[%s1 + $0x18] sm:$0xff]
    %v70 = vld [vmem:[%s1 + $0x20] sm:$0xff]
    %v71 = vld [vmem:[%s1 + $0x28] sm:$0xff]
    %v72 = vld [vmem:[%s1 + $0x30] sm:$0xff]
    %v73 = vld [vmem:[%s1 + $0x38] sm:$0xff]
    %74 = vst [vmem:[#allocation1] ss:$2 sm:$0xff] %v46
    %v75 = vld.sshfl [vmem:[#allocation1] sm:$0xff pattern:$0x75316420]
    %v76 = vld.sshfl [vmem:[#allocation1 + $0x8] sm:$0xff pattern:$0x75316420]
    %79 = vrot.lane.b32.xlu0 %v75, 16
    %v80 = vpop.permute.xlu0 %79
    %81 = vrot.lane.b32.xlu0 %v76, 16
    %v82 = vpop.permute.xlu0 %81
    %vm83 = vcmp.lt.s32.totalorder %v16, 16
    %v84 = vsel %vm83, %v80, %v82
    %v85 = vsel %vm83, %v82, %v80
    %v86 = vsel %vm22, 1, 0
    %v87 = vsel %vm23, 1, 0
    %vm88 = vcmp.eq.s32.totalorder %v86, 1
    %vm89 = vcmp.eq.s32.totalorder %v87, 1
    %v90 = vsel %vm88, %v85, 0.0
    %v91 = vsel %vm89, %v84, 0.0
    %s92 = scalar_lea.vmem %s1, 64
    %v93 = vld [vmem:[%s92] sm:$0xff]
    %v94 = vld [vmem:[%s92 + $0x8] sm:$0xff]
    %v95 = vld [vmem:[%s92 + $0x10] sm:$0xff]
    %v96 = vld [vmem:[%s92 + $0x18] sm:$0xff]
    %v97 = vld [vmem:[%s92 + $0x20] sm:$0xff]
    %v98 = vld [vmem:[%s92 + $0x28] sm:$0xff]
    %v99 = vld [vmem:[%s92 + $0x30] sm:$0xff]
    %v100 = vld [vmem:[%s92 + $0x38] sm:$0xff]
    %vm101 = vcmask 23552
    %v103 = vsel %vm101, %v93, 0
    %v106 = vsel %vm101, %v94, 0
    %v109 = vsel %vm101, %v95, 0
    %v112 = vsel %vm101, %v96, 0
    %v115 = vsel %vm101, %v97, 0
    %v118 = vsel %vm101, %v98, 0
    %v121 = vsel %vm101, %v99, 0
    %v124 = vsel %vm101, %v100, 0
    %vm126 = vcmask 1042432
    %v128 = vsel %vm126, %v90, 0
    %v131 = vsel %vm126, %v91, 0
    %133 = vmatpush.msra.mxu0 0.0
    %134 = vmatpush.msra.mxu0 0.0
    %135 = vmatpush.msra.mxu0 0.0
    %136 = vmatpush.msra.mxu0 0.0
    %137 = vmatpush.msra.mxu0 0.0
    %138 = vmatpush.msra.mxu0 0.0
    %139 = vmatpush.msra.mxu0 0.0
    %140 = vmatpush.msra.mxu0 0.0
    %141 = vmatpush.msra.mxu0 0.0
    %142 = vmatpush.msra.mxu0 0.0
    %143 = vmatpush.msra.mxu0 0.0
    %144 = vmatpush.msra.mxu0 0.0
    %145 = vmatpush.msra.mxu0 0.0
    %146 = vmatpush.msra.mxu0 0.0
    %147 = vmatpush.msra.mxu0 0.0
    %148 = vmatpush.msra.mxu0 %v128
    %149 = vmatmul.f32.gmra.mxu0 %v103
    %v150 = vpop.f32.mrf.mxu0
    %v151 = vadd.f32 0.0, %v150
    %152 = vmatmul.f32.gmra.mxu0 %v106
    %v153 = vpop.f32.mrf.mxu0
    %v154 = vadd.f32 0.0, %v153
    %155 = vmatmul.f32.gmra.mxu0 %v109
    %v156 = vpop.f32.mrf.mxu0
    %v157 = vadd.f32 0.0, %v156
    %158 = vmatmul.f32.gmra.mxu0 %v112
    %v159 = vpop.f32.mrf.mxu0
    %v160 = vadd.f32 0.0, %v159
    %161 = vmatmul.f32.gmra.mxu0 %v115
    %v162 = vpop.f32.mrf.mxu0
    %v163 = vadd.f32 0.0, %v162
    %164 = vmatmul.f32.gmra.mxu0 %v118
    %v165 = vpop.f32.mrf.mxu0
    %v166 = vadd.f32 0.0, %v165
    %167 = vmatmul.f32.gmra.mxu0 %v121
    %v168 = vpop.f32.mrf.mxu0
    %v169 = vadd.f32 0.0, %v168
    %170 = vmatmul.f32.gmra.mxu0 %v124
    %v171 = vpop.f32.mrf.mxu0
    %v172 = vadd.f32 0.0, %v171
    %173 = vdwg.mxu0
    %174 = vmatpush.msra.mxu0 0.0
    %175 = vmatpush.msra.mxu0 0.0
    %176 = vmatpush.msra.mxu0 0.0
    %177 = vmatpush.msra.mxu0 0.0
    %178 = vmatpush.msra.mxu0 0.0
    %179 = vmatpush.msra.mxu0 0.0
    %180 = vmatpush.msra.mxu0 0.0
    %181 = vmatpush.msra.mxu0 0.0
    %182 = vmatpush.msra.mxu0 0.0
    %183 = vmatpush.msra.mxu0 0.0
    %184 = vmatpush.msra.mxu0 0.0
    %185 = vmatpush.msra.mxu0 0.0
    %186 = vmatpush.msra.mxu0 0.0
    %187 = vmatpush.msra.mxu0 0.0
    %188 = vmatpush.msra.mxu0 0.0
    %189 = vmatpush.msra.mxu0 %v131
    %190 = vmatmul.f32.gmra.mxu0 %v103
    %v191 = vpop.f32.mrf.mxu0
    %v192 = vadd.f32 0.0, %v191
    %193 = vmatmul.f32.gmra.mxu0 %v106
    %v194 = vpop.f32.mrf.mxu0
    %v195 = vadd.f32 0.0, %v194
    %196 = vmatmul.f32.gmra.mxu0 %v109
    %v197 = vpop.f32.mrf.mxu0
    %v198 = vadd.f32 0.0, %v197
    %199 = vmatmul.f32.gmra.mxu0 %v112
    %v200 = vpop.f32.mrf.mxu0
    %v201 = vadd.f32 0.0, %v200
    %202 = vmatmul.f32.gmra.mxu0 %v115
    %v203 = vpop.f32.mrf.mxu0
    %v204 = vadd.f32 0.0, %v203
    %205 = vmatmul.f32.gmra.mxu0 %v118
    %v206 = vpop.f32.mrf.mxu0
    %v207 = vadd.f32 0.0, %v206
    %208 = vmatmul.f32.gmra.mxu0 %v121
    %v209 = vpop.f32.mrf.mxu0
    %v210 = vadd.f32 0.0, %v209
    %211 = vmatmul.f32.gmra.mxu0 %v124
    %v212 = vpop.f32.mrf.mxu0
    %v213 = vadd.f32 0.0, %v212
    %214 = vdwg.mxu0
    %v216 = vsel %vm101, %v66, 0
    %v219 = vsel %vm101, %v67, 0
    %v222 = vsel %vm101, %v68, 0
    %v225 = vsel %vm101, %v69, 0
    %v228 = vsel %vm101, %v70, 0
    %v231 = vsel %vm101, %v71, 0
    %v234 = vsel %vm101, %v72, 0
    %v237 = vsel %vm101, %v73, 0
    %v240 = vsel %vm126, %v64, 0
    %v243 = vsel %vm126, %v65, 0
    %245 = vmatpush.msra.mxu0 0.0
    %246 = vmatpush.msra.mxu0 0.0
    %247 = vmatpush.msra.mxu0 0.0
    %248 = vmatpush.msra.mxu0 0.0
    %249 = vmatpush.msra.mxu0 0.0
    %250 = vmatpush.msra.mxu0 0.0
    %251 = vmatpush.msra.mxu0 0.0
    %252 = vmatpush.msra.mxu0 0.0
    %253 = vmatpush.msra.mxu0 0.0
    %254 = vmatpush.msra.mxu0 0.0
    %255 = vmatpush.msra.mxu0 0.0
    %256 = vmatpush.msra.mxu0 0.0
    %257 = vmatpush.msra.mxu0 0.0
    %258 = vmatpush.msra.mxu0 0.0
    %259 = vmatpush.msra.mxu0 0.0
    %260 = vmatpush.msra.mxu0 %v240
    %261 = vmatmul.f32.gmra.mxu0 %v216
    %v262 = vpop.f32.mrf.mxu0
    %v263 = vadd.f32 %v151, %v262
    %264 = vmatmul.f32.gmra.mxu0 %v219
    %v265 = vpop.f32.mrf.mxu0
    %v266 = vadd.f32 %v154, %v265
    %267 = vmatmul.f32.gmra.mxu0 %v222
    %v268 = vpop.f32.mrf.mxu0
    %v269 = vadd.f32 %v157, %v268
    %270 = vmatmul.f32.gmra.mxu0 %v225
    %v271 = vpop.f32.mrf.mxu0
    %v272 = vadd.f32 %v160, %v271
    %273 = vmatmul.f32.gmra.mxu0 %v228
    %v274 = vpop.f32.mrf.mxu0
    %v275 = vadd.f32 %v163, %v274
    %276 = vmatmul.f32.gmra.mxu0 %v231
    %v277 = vpop.f32.mrf.mxu0
    %v278 = vadd.f32 %v166, %v277
    %279 = vmatmul.f32.gmra.mxu0 %v234
    %v280 = vpop.f32.mrf.mxu0
    %v281 = vadd.f32 %v169, %v280
    %282 = vmatmul.f32.gmra.mxu0 %v237
    %v283 = vpop.f32.mrf.mxu0
    %v284 = vadd.f32 %v172, %v283
    %285 = vdwg.mxu0
    %286 = vmatpush.msra.mxu0 0.0
    %287 = vmatpush.msra.mxu0 0.0
    %288 = vmatpush.msra.mxu0 0.0
    %289 = vmatpush.msra.mxu0 0.0
    %290 = vmatpush.msra.mxu0 0.0
    %291 = vmatpush.msra.mxu0 0.0
    %292 = vmatpush.msra.mxu0 0.0
    %293 = vmatpush.msra.mxu0 0.0
    %294 = vmatpush.msra.mxu0 0.0
    %295 = vmatpush.msra.mxu0 0.0
    %296 = vmatpush.msra.mxu0 0.0
    %297 = vmatpush.msra.mxu0 0.0
    %298 = vmatpush.msra.mxu0 0.0
    %299 = vmatpush.msra.mxu0 0.0
    %300 = vmatpush.msra.mxu0 0.0
    %301 = vmatpush.msra.mxu0 %v243
    %302 = vmatmul.f32.gmra.mxu0 %v216
    %v303 = vpop.f32.mrf.mxu0
    %v304 = vadd.f32 %v192, %v303
    %305 = vmatmul.f32.gmra.mxu0 %v219
    %v306 = vpop.f32.mrf.mxu0
    %v307 = vadd.f32 %v195, %v306
    %308 = vmatmul.f32.gmra.mxu0 %v222
    %v309 = vpop.f32.mrf.mxu0
    %v310 = vadd.f32 %v198, %v309
    %311 = vmatmul.f32.gmra.mxu0 %v225
    %v312 = vpop.f32.mrf.mxu0
    %v313 = vadd.f32 %v201, %v312
    %314 = vmatmul.f32.gmra.mxu0 %v228
    %v315 = vpop.f32.mrf.mxu0
    %v316 = vadd.f32 %v204, %v315
    %317 = vmatmul.f32.gmra.mxu0 %v231
    %v318 = vpop.f32.mrf.mxu0
    %v319 = vadd.f32 %v207, %v318
    %320 = vmatmul.f32.gmra.mxu0 %v234
    %v321 = vpop.f32.mrf.mxu0
    %v322 = vadd.f32 %v210, %v321
    %323 = vmatmul.f32.gmra.mxu0 %v237
    %v324 = vpop.f32.mrf.mxu0
    %v325 = vadd.f32 %v213, %v324
    %326 = vdwg.mxu0
    %327 = vst [vmem:[#allocation1] ss:$2 sm:$0xff] %v46
    %v328 = vld.sshfl [vmem:[#allocation1] sm:$0xff pattern:$0x75316420]
    %v329 = vld.sshfl [vmem:[#allocation1 + $0x8] sm:$0xff pattern:$0x75316420]
    %332 = vrot.lane.b32.xlu0 %v328, 15
    %v333 = vpop.permute.xlu0 %332
    %334 = vrot.lane.b32.xlu0 %v329, 15
    %v335 = vpop.permute.xlu0 %334
    %vm336 = vcmp.lt.s32.totalorder %v16, 15
    %v337 = vsel %vm336, %v333, %v335
    %v338 = vsel %vm336, %v335, %v333
    %v339 = vsel %vm32, 1, 0
    %v340 = vsel %vm33, 1, 0
    %vm341 = vcmp.eq.s32.totalorder %v339, 1
    %vm342 = vcmp.eq.s32.totalorder %v340, 1
    %v343 = vsel %vm341, %v338, 0.0
    %v344 = vsel %vm342, %v337, 0.0
    %s345 = scalar_lea.vmem %s1, 128
    %v346 = vld [vmem:[%s345] sm:$0xff]
    %v347 = vld [vmem:[%s345 + $0x8] sm:$0xff]
    %v348 = vld [vmem:[%s345 + $0x10] sm:$0xff]
    %v349 = vld [vmem:[%s345 + $0x18] sm:$0xff]
    %v350 = vld [vmem:[%s345 + $0x20] sm:$0xff]
    %v351 = vld [vmem:[%s345 + $0x28] sm:$0xff]
    %v352 = vld [vmem:[%s345 + $0x30] sm:$0xff]
    %v353 = vld [vmem:[%s345 + $0x38] sm:$0xff]
    %v355 = vsel %vm101, %v346, 0
    %v358 = vsel %vm101, %v347, 0
    %v361 = vsel %vm101, %v348, 0
    %v364 = vsel %vm101, %v349, 0
    %v367 = vsel %vm101, %v350, 0
    %v370 = vsel %vm101, %v351, 0
    %v373 = vsel %vm101, %v352, 0
    %v376 = vsel %vm101, %v353, 0
    %v379 = vsel %vm126, %v343, 0
    %v382 = vsel %vm126, %v344, 0
    %384 = vmatpush.msra.mxu0 0.0
    %385 = vmatpush.msra.mxu0 0.0
    %386 = vmatpush.msra.mxu0 0.0
    %387 = vmatpush.msra.mxu0 0.0
    %388 = vmatpush.msra.mxu0 0.0
    %389 = vmatpush.msra.mxu0 0.0
    %390 = vmatpush.msra.mxu0 0.0
    %391 = vmatpush.msra.mxu0 0.0
    %392 = vmatpush.msra.mxu0 0.0
    %393 = vmatpush.msra.mxu0 0.0
    %394 = vmatpush.msra.mxu0 0.0
    %395 = vmatpush.msra.mxu0 0.0
    %396 = vmatpush.msra.mxu0 0.0
    %397 = vmatpush.msra.mxu0 0.0
    %398 = vmatpush.msra.mxu0 0.0
    %399 = vmatpush.msra.mxu0 %v379
    %400 = vmatmul.f32.gmra.mxu0 %v355
    %v401 = vpop.f32.mrf.mxu0
    %v402 = vadd.f32 0.0, %v401
    %403 = vmatmul.f32.gmra.mxu0 %v358
    %v404 = vpop.f32.mrf.mxu0
    %v405 = vadd.f32 0.0, %v404
    %406 = vmatmul.f32.gmra.mxu0 %v361
    %v407 = vpop.f32.mrf.mxu0
    %v408 = vadd.f32 0.0, %v407
    %409 = vmatmul.f32.gmra.mxu0 %v364
    %v410 = vpop.f32.mrf.mxu0
    %v411 = vadd.f32 0.0, %v410
    %412 = vmatmul.f32.gmra.mxu0 %v367
    %v413 = vpop.f32.mrf.mxu0
    %v414 = vadd.f32 0.0, %v413
    %415 = vmatmul.f32.gmra.mxu0 %v370
    %v416 = vpop.f32.mrf.mxu0
    %v417 = vadd.f32 0.0, %v416
    %418 = vmatmul.f32.gmra.mxu0 %v373
    %v419 = vpop.f32.mrf.mxu0
    %v420 = vadd.f32 0.0, %v419
    %421 = vmatmul.f32.gmra.mxu0 %v376
    %v422 = vpop.f32.mrf.mxu0
    %v423 = vadd.f32 0.0, %v422
    %424 = vdwg.mxu0
    %425 = vmatpush.msra.mxu0 0.0
    %426 = vmatpush.msra.mxu0 0.0
    %427 = vmatpush.msra.mxu0 0.0
    %428 = vmatpush.msra.mxu0 0.0
    %429 = vmatpush.msra.mxu0 0.0
    %430 = vmatpush.msra.mxu0 0.0
    %431 = vmatpush.msra.mxu0 0.0
    %432 = vmatpush.msra.mxu0 0.0
    %433 = vmatpush.msra.mxu0 0.0
    %434 = vmatpush.msra.mxu0 0.0
    %435 = vmatpush.msra.mxu0 0.0
    %436 = vmatpush.msra.mxu0 0.0
    %437 = vmatpush.msra.mxu0 0.0
    %438 = vmatpush.msra.mxu0 0.0
    %439 = vmatpush.msra.mxu0 0.0
    %440 = vmatpush.msra.mxu0 %v382
    %441 = vmatmul.f32.gmra.mxu0 %v355
    %v442 = vpop.f32.mrf.mxu0
    %v443 = vadd.f32 0.0, %v442
    %444 = vmatmul.f32.gmra.mxu0 %v358
    %v445 = vpop.f32.mrf.mxu0
    %v446 = vadd.f32 0.0, %v445
    %447 = vmatmul.f32.gmra.mxu0 %v361
    %v448 = vpop.f32.mrf.mxu0
    %v449 = vadd.f32 0.0, %v448
    %450 = vmatmul.f32.gmra.mxu0 %v364
    %v451 = vpop.f32.mrf.mxu0
    %v452 = vadd.f32 0.0, %v451
    %453 = vmatmul.f32.gmra.mxu0 %v367
    %v454 = vpop.f32.mrf.mxu0
    %v455 = vadd.f32 0.0, %v454
    %456 = vmatmul.f32.gmra.mxu0 %v370
    %v457 = vpop.f32.mrf.mxu0
    %v458 = vadd.f32 0.0, %v457
    %459 = vmatmul.f32.gmra.mxu0 %v373
    %v460 = vpop.f32.mrf.mxu0
    %v461 = vadd.f32 0.0, %v460
    %462 = vmatmul.f32.gmra.mxu0 %v376
    %v463 = vpop.f32.mrf.mxu0
    %v464 = vadd.f32 0.0, %v463
    %465 = vdwg.mxu0
    %v466 = vadd.f32 %v263, %v402
    %v467 = vadd.f32 %v304, %v443
    %v468 = vadd.f32 %v266, %v405
    %v469 = vadd.f32 %v307, %v446
    %v470 = vadd.f32 %v269, %v408
    %v471 = vadd.f32 %v310, %v449
    %v472 = vadd.f32 %v272, %v411
    %v473 = vadd.f32 %v313, %v452
    %v474 = vadd.f32 %v275, %v414
    %v475 = vadd.f32 %v316, %v455
    %v476 = vadd.f32 %v278, %v417
    %v477 = vadd.f32 %v319, %v458
    %v478 = vadd.f32 %v281, %v420
    %v479 = vadd.f32 %v322, %v461
    %v480 = vadd.f32 %v284, %v423
    %v481 = vadd.f32 %v325, %v464
    %482 = vst [vmem:[#allocation1] ss:$2 sm:$0xff] %v46
    %v483 = vld.sshfl [vmem:[#allocation1] sm:$0xff pattern:$0x75316420]
    %v484 = vld.sshfl [vmem:[#allocation1 + $0x8] sm:$0xff pattern:$0x75316420]
    %487 = vrot.lane.b32.xlu0 %v483, 1
    %v488 = vpop.permute.xlu0 %487
    %489 = vrot.lane.b32.xlu0 %v484, 1
    %v490 = vpop.permute.xlu0 %489
    %vm491 = vcmp.lt.s32.totalorder %v16, 1
    %v492 = vsel %vm491, %v488, %v490
    %v493 = vsel %vm491, %v490, %v488
    %v494 = vsel %vm26, 1, 0
    %v495 = vsel %vm27, 1, 0
    %vm496 = vcmp.eq.s32.totalorder %v494, 1
    %vm497 = vcmp.eq.s32.totalorder %v495, 1
    %v498 = vsel %vm496, %v493, 0.0
    %v499 = vsel %vm497, %v492, 0.0
    %s500 = scalar_lea.vmem %s1, 192
    %v501 = vld [vmem:[%s500] sm:$0xff]
    %v502 = vld [vmem:[%s500 + $0x8] sm:$0xff]
    %v503 = vld [vmem:[%s500 + $0x10] sm:$0xff]
    %v504 = vld [vmem:[%s500 + $0x18] sm:$0xff]
    %v505 = vld [vmem:[%s500 + $0x20] sm:$0xff]
    %v506 = vld [vmem:[%s500 + $0x28] sm:$0xff]
    %v507 = vld [vmem:[%s500 + $0x30] sm:$0xff]
    %v508 = vld [vmem:[%s500 + $0x38] sm:$0xff]
    %v510 = vsel %vm101, %v501, 0
    %v513 = vsel %vm101, %v502, 0
    %v516 = vsel %vm101, %v503, 0
    %v519 = vsel %vm101, %v504, 0
    %v522 = vsel %vm101, %v505, 0
    %v525 = vsel %vm101, %v506, 0
    %v528 = vsel %vm101, %v507, 0
    %v531 = vsel %vm101, %v508, 0
    %v534 = vsel %vm126, %v498, 0
    %v537 = vsel %vm126, %v499, 0
    %539 = vmatpush.msra.mxu0 0.0
    %540 = vmatpush.msra.mxu0 0.0
    %541 = vmatpush.msra.mxu0 0.0
    %542 = vmatpush.msra.mxu0 0.0
    %543 = vmatpush.msra.mxu0 0.0
    %544 = vmatpush.msra.mxu0 0.0
    %545 = vmatpush.msra.mxu0 0.0
    %546 = vmatpush.msra.mxu0 0.0
    %547 = vmatpush.msra.mxu0 0.0
    %548 = vmatpush.msra.mxu0 0.0
    %549 = vmatpush.msra.mxu0 0.0
    %550 = vmatpush.msra.mxu0 0.0
    %551 = vmatpush.msra.mxu0 0.0
    %552 = vmatpush.msra.mxu0 0.0
    %553 = vmatpush.msra.mxu0 0.0
    %554 = vmatpush.msra.mxu0 %v534
    %555 = vmatmul.f32.gmra.mxu0 %v510
    %v556 = vpop.f32.mrf.mxu0
    %v557 = vadd.f32 0.0, %v556
    %558 = vmatmul.f32.gmra.mxu0 %v513
    %v559 = vpop.f32.mrf.mxu0
    %v560 = vadd.f32 0.0, %v559
    %561 = vmatmul.f32.gmra.mxu0 %v516
    %v562 = vpop.f32.mrf.mxu0
    %v563 = vadd.f32 0.0, %v562
    %564 = vmatmul.f32.gmra.mxu0 %v519
    %v565 = vpop.f32.mrf.mxu0
    %v566 = vadd.f32 0.0, %v565
    %567 = vmatmul.f32.gmra.mxu0 %v522
    %v568 = vpop.f32.mrf.mxu0
    %v569 = vadd.f32 0.0, %v568
    %570 = vmatmul.f32.gmra.mxu0 %v525
    %v571 = vpop.f32.mrf.mxu0
    %v572 = vadd.f32 0.0, %v571
    %573 = vmatmul.f32.gmra.mxu0 %v528
    %v574 = vpop.f32.mrf.mxu0
    %v575 = vadd.f32 0.0, %v574
    %576 = vmatmul.f32.gmra.mxu0 %v531
    %v577 = vpop.f32.mrf.mxu0
    %v578 = vadd.f32 0.0, %v577
    %579 = vdwg.mxu0
    %580 = vmatpush.msra.mxu0 0.0
    %581 = vmatpush.msra.mxu0 0.0
    %582 = vmatpush.msra.mxu0 0.0
    %583 = vmatpush.msra.mxu0 0.0
    %584 = vmatpush.msra.mxu0 0.0
    %585 = vmatpush.msra.mxu0 0.0
    %586 = vmatpush.msra.mxu0 0.0
    %587 = vmatpush.msra.mxu0 0.0
    %588 = vmatpush.msra.mxu0 0.0
    %589 = vmatpush.msra.mxu0 0.0
    %590 = vmatpush.msra.mxu0 0.0
    %591 = vmatpush.msra.mxu0 0.0
    %592 = vmatpush.msra.mxu0 0.0
    %593 = vmatpush.msra.mxu0 0.0
    %594 = vmatpush.msra.mxu0 0.0
    %595 = vmatpush.msra.mxu0 %v537
    %596 = vmatmul.f32.gmra.mxu0 %v510
    %v597 = vpop.f32.mrf.mxu0
    %v598 = vadd.f32 0.0, %v597
    %599 = vmatmul.f32.gmra.mxu0 %v513
    %v600 = vpop.f32.mrf.mxu0
    %v601 = vadd.f32 0.0, %v600
    %602 = vmatmul.f32.gmra.mxu0 %v516
    %v603 = vpop.f32.mrf.mxu0
    %v604 = vadd.f32 0.0, %v603
    %605 = vmatmul.f32.gmra.mxu0 %v519
    %v606 = vpop.f32.mrf.mxu0
    %v607 = vadd.f32 0.0, %v606
    %608 = vmatmul.f32.gmra.mxu0 %v522
    %v609 = vpop.f32.mrf.mxu0
    %v610 = vadd.f32 0.0, %v609
    %611 = vmatmul.f32.gmra.mxu0 %v525
    %v612 = vpop.f32.mrf.mxu0
    %v613 = vadd.f32 0.0, %v612
    %614 = vmatmul.f32.gmra.mxu0 %v528
    %v615 = vpop.f32.mrf.mxu0
    %v616 = vadd.f32 0.0, %v615
    %617 = vmatmul.f32.gmra.mxu0 %v531
    %v618 = vpop.f32.mrf.mxu0
    %v619 = vadd.f32 0.0, %v618
    %620 = vdwg.mxu0
    %v621 = vadd.f32 %v466, %v557
    %v622 = vadd.f32 %v467, %v598
    %v623 = vadd.f32 %v468, %v560
    %v624 = vadd.f32 %v469, %v601
    %v625 = vadd.f32 %v470, %v563
    %v626 = vadd.f32 %v471, %v604
    %v627 = vadd.f32 %v472, %v566
    %v628 = vadd.f32 %v473, %v607
    %v629 = vadd.f32 %v474, %v569
    %v630 = vadd.f32 %v475, %v610
    %v631 = vadd.f32 %v476, %v572
    %v632 = vadd.f32 %v477, %v613
    %v633 = vadd.f32 %v478, %v575
    %v634 = vadd.f32 %v479, %v616
    %v635 = vadd.f32 %v480, %v578
    %v636 = vadd.f32 %v481, %v619
    %s637 = scalar_lea.vmem %s1, 256
    %v638 = vld [vmem:[%s637] sm:$0xff]
    %v639 = vld [vmem:[%s637 + $0x8] sm:$0xff]
    %v640 = vld [vmem:[%s637 + $0x10] sm:$0xff]
    %v641 = vld [vmem:[%s637 + $0x18] sm:$0xff]
    %v642 = vld [vmem:[%s637 + $0x20] sm:$0xff]
    %v643 = vld [vmem:[%s637 + $0x28] sm:$0xff]
    %v644 = vld [vmem:[%s637 + $0x30] sm:$0xff]
    %v645 = vld [vmem:[%s637 + $0x38] sm:$0xff]
    %646 = vst [vmem:[#allocation1] ss:$2 sm:$0xff] %v46
    %v647 = vld.sshfl [vmem:[#allocation1] sm:$0xff pattern:$0x75316420]
    %v648 = vld.sshfl [vmem:[#allocation1 + $0x8] sm:$0xff pattern:$0x75316420]
    %v650 = vsel %vm101, %v638, 0
    %v653 = vsel %vm101, %v639, 0
    %v656 = vsel %vm101, %v640, 0
    %v659 = vsel %vm101, %v641, 0
    %v662 = vsel %vm101, %v642, 0
    %v665 = vsel %vm101, %v643, 0
    %v668 = vsel %vm101, %v644, 0
    %v671 = vsel %vm101, %v645, 0
    %v673 = vsel %vm126, %v647, 0
    %v675 = vsel %vm126, %v648, 0
    %677 = vmatpush.msra.mxu0 0.0
    %678 = vmatpush.msra.mxu0 0.0
    %679 = vmatpush.msra.mxu0 0.0
    %680 = vmatpush.msra.mxu0 0.0
    %681 = vmatpush.msra.mxu0 0.0
    %682 = vmatpush.msra.mxu0 0.0
    %683 = vmatpush.msra.mxu0 0.0
    %684 = vmatpush.msra.mxu0 0.0
    %685 = vmatpush.msra.mxu0 0.0
    %686 = vmatpush.msra.mxu0 0.0
    %687 = vmatpush.msra.mxu0 0.0
    %688 = vmatpush.msra.mxu0 0.0
    %689 = vmatpush.msra.mxu0 0.0
    %690 = vmatpush.msra.mxu0 0.0
    %691 = vmatpush.msra.mxu0 0.0
    %692 = vmatpush.msra.mxu0 %v673
    %693 = vmatmul.f32.gmra.mxu0 %v650
    %v694 = vpop.f32.mrf.mxu0
    %v695 = vadd.f32 0.0, %v694
    %696 = vmatmul.f32.gmra.mxu0 %v653
    %v697 = vpop.f32.mrf.mxu0
    %v698 = vadd.f32 0.0, %v697
    %699 = vmatmul.f32.gmra.mxu0 %v656
    %v700 = vpop.f32.mrf.mxu0
    %v701 = vadd.f32 0.0, %v700
    %702 = vmatmul.f32.gmra.mxu0 %v659
    %v703 = vpop.f32.mrf.mxu0
    %v704 = vadd.f32 0.0, %v703
    %705 = vmatmul.f32.gmra.mxu0 %v662
    %v706 = vpop.f32.mrf.mxu0
    %v707 = vadd.f32 0.0, %v706
    %708 = vmatmul.f32.gmra.mxu0 %v665
    %v709 = vpop.f32.mrf.mxu0
    %v710 = vadd.f32 0.0, %v709
    %711 = vmatmul.f32.gmra.mxu0 %v668
    %v712 = vpop.f32.mrf.mxu0
    %v713 = vadd.f32 0.0, %v712
    %714 = vmatmul.f32.gmra.mxu0 %v671
    %v715 = vpop.f32.mrf.mxu0
    %v716 = vadd.f32 0.0, %v715
    %717 = vdwg.mxu0
    %718 = vmatpush.msra.mxu0 0.0
    %719 = vmatpush.msra.mxu0 0.0
    %720 = vmatpush.msra.mxu0 0.0
    %721 = vmatpush.msra.mxu0 0.0
    %722 = vmatpush.msra.mxu0 0.0
    %723 = vmatpush.msra.mxu0 0.0
    %724 = vmatpush.msra.mxu0 0.0
    %725 = vmatpush.msra.mxu0 0.0
    %726 = vmatpush.msra.mxu0 0.0
    %727 = vmatpush.msra.mxu0 0.0
    %728 = vmatpush.msra.mxu0 0.0
    %729 = vmatpush.msra.mxu0 0.0
    %730 = vmatpush.msra.mxu0 0.0
    %731 = vmatpush.msra.mxu0 0.0
    %732 = vmatpush.msra.mxu0 0.0
    %733 = vmatpush.msra.mxu0 %v675
    %734 = vmatmul.f32.gmra.mxu0 %v650
    %v735 = vpop.f32.mrf.mxu0
    %v736 = vadd.f32 0.0, %v735
    %737 = vmatmul.f32.gmra.mxu0 %v653
    %v738 = vpop.f32.mrf.mxu0
    %v739 = vadd.f32 0.0, %v738
    %740 = vmatmul.f32.gmra.mxu0 %v656
    %v741 = vpop.f32.mrf.mxu0
    %v742 = vadd.f32 0.0, %v741
    %743 = vmatmul.f32.gmra.mxu0 %v659
    %v744 = vpop.f32.mrf.mxu0
    %v745 = vadd.f32 0.0, %v744
    %746 = vmatmul.f32.gmra.mxu0 %v662
    %v747 = vpop.f32.mrf.mxu0
    %v748 = vadd.f32 0.0, %v747
    %749 = vmatmul.f32.gmra.mxu0 %v665
    %v750 = vpop.f32.mrf.mxu0
    %v751 = vadd.f32 0.0, %v750
    %752 = vmatmul.f32.gmra.mxu0 %v668
    %v753 = vpop.f32.mrf.mxu0
    %v754 = vadd.f32 0.0, %v753
    %755 = vmatmul.f32.gmra.mxu0 %v671
    %v756 = vpop.f32.mrf.mxu0
    %v757 = vadd.f32 0.0, %v756
    %758 = vdwg.mxu0
    %v759 = vadd.f32 %v621, %v695
    %v760 = vadd.f32 %v622, %v736
    %v761 = vadd.f32 %v623, %v698
    %v762 = vadd.f32 %v624, %v739
    %v763 = vadd.f32 %v625, %v701
    %v764 = vadd.f32 %v626, %v742
    %v765 = vadd.f32 %v627, %v704
    %v766 = vadd.f32 %v628, %v745
    %v767 = vadd.f32 %v629, %v707
    %v768 = vadd.f32 %v630, %v748
    %v769 = vadd.f32 %v631, %v710
    %v770 = vadd.f32 %v632, %v751
    %v771 = vadd.f32 %v633, %v713
    %v772 = vadd.f32 %v634, %v754
    %v773 = vadd.f32 %v635, %v716
    %v774 = vadd.f32 %v636, %v757
    %775 = vst [vmem:[#allocation1] ss:$2 sm:$0xff] %v46
    %v776 = vld.sshfl [vmem:[#allocation1] sm:$0xff pattern:$0x75316420]
    %v777 = vld.sshfl [vmem:[#allocation1 + $0x8] sm:$0xff pattern:$0x75316420]
    %780 = vrot.lane.b32.xlu0 %v776, 127
    %v781 = vpop.permute.xlu0 %780
    %782 = vrot.lane.b32.xlu0 %v777, 127
    %v783 = vpop.permute.xlu0 %782
    %vm784 = vcmp.lt.s32.totalorder %v16, 127
    %v785 = vsel %vm784, %v781, %v783
    %v786 = vsel %vm784, %v783, %v781
    %v787 = vsel %vm28, 1, 0
    %v788 = vsel %vm29, 1, 0
    %vm789 = vcmp.eq.s32.totalorder %v787, 1
    %vm790 = vcmp.eq.s32.totalorder %v788, 1
    %v791 = vsel %vm789, %v785, 0.0
    %v792 = vsel %vm790, %v786, 0.0
    %s793 = scalar_lea.vmem %s1, 320
    %v794 = vld [vmem:[%s793] sm:$0xff]
    %v795 = vld [vmem:[%s793 + $0x8] sm:$0xff]
    %v796 = vld [vmem:[%s793 + $0x10] sm:$0xff]
    %v797 = vld [vmem:[%s793 + $0x18] sm:$0xff]
    %v798 = vld [vmem:[%s793 + $0x20] sm:$0xff]
    %v799 = vld [vmem:[%s793 + $0x28] sm:$0xff]
    %v800 = vld [vmem:[%s793 + $0x30] sm:$0xff]
    %v801 = vld [vmem:[%s793 + $0x38] sm:$0xff]
    %v803 = vsel %vm101, %v794, 0
    %v806 = vsel %vm101, %v795, 0
    %v809 = vsel %vm101, %v796, 0
    %v812 = vsel %vm101, %v797, 0
    %v815 = vsel %vm101, %v798, 0
    %v818 = vsel %vm101, %v799, 0
    %v821 = vsel %vm101, %v800, 0
    %v824 = vsel %vm101, %v801, 0
    %v827 = vsel %vm126, %v791, 0
    %v830 = vsel %vm126, %v792, 0
    %832 = vmatpush.msra.mxu0 0.0
    %833 = vmatpush.msra.mxu0 0.0
    %834 = vmatpush.msra.mxu0 0.0
    %835 = vmatpush.msra.mxu0 0.0
    %836 = vmatpush.msra.mxu0 0.0
    %837 = vmatpush.msra.mxu0 0.0
    %838 = vmatpush.msra.mxu0 0.0
    %839 = vmatpush.msra.mxu0 0.0
    %840 = vmatpush.msra.mxu0 0.0
    %841 = vmatpush.msra.mxu0 0.0
    %842 = vmatpush.msra.mxu0 0.0
    %843 = vmatpush.msra.mxu0 0.0
    %844 = vmatpush.msra.mxu0 0.0
    %845 = vmatpush.msra.mxu0 0.0
    %846 = vmatpush.msra.mxu0 0.0
    %847 = vmatpush.msra.mxu0 %v827
    %848 = vmatmul.f32.gmra.mxu0 %v803
    %v849 = vpop.f32.mrf.mxu0
    %v850 = vadd.f32 0.0, %v849
    %851 = vmatmul.f32.gmra.mxu0 %v806
    %v852 = vpop.f32.mrf.mxu0
    %v853 = vadd.f32 0.0, %v852
    %854 = vmatmul.f32.gmra.mxu0 %v809
    %v855 = vpop.f32.mrf.mxu0
    %v856 = vadd.f32 0.0, %v855
    %857 = vmatmul.f32.gmra.mxu0 %v812
    %v858 = vpop.f32.mrf.mxu0
    %v859 = vadd.f32 0.0, %v858
    %860 = vmatmul.f32.gmra.mxu0 %v815
    %v861 = vpop.f32.mrf.mxu0
    %v862 = vadd.f32 0.0, %v861
    %863 = vmatmul.f32.gmra.mxu0 %v818
    %v864 = vpop.f32.mrf.mxu0
    %v865 = vadd.f32 0.0, %v864
    %866 = vmatmul.f32.gmra.mxu0 %v821
    %v867 = vpop.f32.mrf.mxu0
    %v868 = vadd.f32 0.0, %v867
    %869 = vmatmul.f32.gmra.mxu0 %v824
    %v870 = vpop.f32.mrf.mxu0
    %v871 = vadd.f32 0.0, %v870
    %872 = vdwg.mxu0
    %873 = vmatpush.msra.mxu0 0.0
    %874 = vmatpush.msra.mxu0 0.0
    %875 = vmatpush.msra.mxu0 0.0
    %876 = vmatpush.msra.mxu0 0.0
    %877 = vmatpush.msra.mxu0 0.0
    %878 = vmatpush.msra.mxu0 0.0
    %879 = vmatpush.msra.mxu0 0.0
    %880 = vmatpush.msra.mxu0 0.0
    %881 = vmatpush.msra.mxu0 0.0
    %882 = vmatpush.msra.mxu0 0.0
    %883 = vmatpush.msra.mxu0 0.0
    %884 = vmatpush.msra.mxu0 0.0
    %885 = vmatpush.msra.mxu0 0.0
    %886 = vmatpush.msra.mxu0 0.0
    %887 = vmatpush.msra.mxu0 0.0
    %888 = vmatpush.msra.mxu0 %v830
    %889 = vmatmul.f32.gmra.mxu0 %v803
    %v890 = vpop.f32.mrf.mxu0
    %v891 = vadd.f32 0.0, %v890
    %892 = vmatmul.f32.gmra.mxu0 %v806
    %v893 = vpop.f32.mrf.mxu0
    %v894 = vadd.f32 0.0, %v893
    %895 = vmatmul.f32.gmra.mxu0 %v809
    %v896 = vpop.f32.mrf.mxu0
    %v897 = vadd.f32 0.0, %v896
    %898 = vmatmul.f32.gmra.mxu0 %v812
    %v899 = vpop.f32.mrf.mxu0
    %v900 = vadd.f32 0.0, %v899
    %901 = vmatmul.f32.gmra.mxu0 %v815
    %v902 = vpop.f32.mrf.mxu0
    %v903 = vadd.f32 0.0, %v902
    %904 = vmatmul.f32.gmra.mxu0 %v818
    %v905 = vpop.f32.mrf.mxu0
    %v906 = vadd.f32 0.0, %v905
    %907 = vmatmul.f32.gmra.mxu0 %v821
    %v908 = vpop.f32.mrf.mxu0
    %v909 = vadd.f32 0.0, %v908
    %910 = vmatmul.f32.gmra.mxu0 %v824
    %v911 = vpop.f32.mrf.mxu0
    %v912 = vadd.f32 0.0, %v911
    %913 = vdwg.mxu0
    %v914 = vadd.f32 %v759, %v850
    %v915 = vadd.f32 %v760, %v891
    %v916 = vadd.f32 %v761, %v853
    %v917 = vadd.f32 %v762, %v894
    %v918 = vadd.f32 %v763, %v856
    %v919 = vadd.f32 %v764, %v897
    %v920 = vadd.f32 %v765, %v859
    %v921 = vadd.f32 %v766, %v900
    %v922 = vadd.f32 %v767, %v862
    %v923 = vadd.f32 %v768, %v903
    %v924 = vadd.f32 %v769, %v865
    %v925 = vadd.f32 %v770, %v906
    %v926 = vadd.f32 %v771, %v868
    %v927 = vadd.f32 %v772, %v909
    %v928 = vadd.f32 %v773, %v871
    %v929 = vadd.f32 %v774, %v912
    %930 = vst [vmem:[#allocation1] ss:$2 sm:$0xff] %v46
    %v931 = vld.sshfl [vmem:[#allocation1] sm:$0xff pattern:$0x75316420]
    %v932 = vld.sshfl [vmem:[#allocation1 + $0x8] sm:$0xff pattern:$0x75316420]
    %935 = vrot.lane.b32.xlu0 %v931, 113
    %v936 = vpop.permute.xlu0 %935
    %937 = vrot.lane.b32.xlu0 %v932, 113
    %v938 = vpop.permute.xlu0 %937
    %vm939 = vcmp.lt.s32.totalorder %v16, 113
    %v940 = vsel %vm939, %v936, %v938
    %v941 = vsel %vm939, %v938, %v936
    %v942 = vsel %vm34, 1, 0
    %v943 = vsel %vm35, 1, 0
    %vm944 = vcmp.eq.s32.totalorder %v942, 1
    %vm945 = vcmp.eq.s32.totalorder %v943, 1
    %v946 = vsel %vm944, %v940, 0.0
    %v947 = vsel %vm945, %v941, 0.0
    %s948 = scalar_lea.vmem %s1, 384
    %v949 = vld [vmem:[%s948] sm:$0xff]
    %v950 = vld [vmem:[%s948 + $0x8] sm:$0xff]
    %v951 = vld [vmem:[%s948 + $0x10] sm:$0xff]
    %v952 = vld [vmem:[%s948 + $0x18] sm:$0xff]
    %v953 = vld [vmem:[%s948 + $0x20] sm:$0xff]
    %v954 = vld [vmem:[%s948 + $0x28] sm:$0xff]
    %v955 = vld [vmem:[%s948 + $0x30] sm:$0xff]
    %v956 = vld [vmem:[%s948 + $0x38] sm:$0xff]
    %v958 = vsel %vm101, %v949, 0
    %v961 = vsel %vm101, %v950, 0
    %v964 = vsel %vm101, %v951, 0
    %v967 = vsel %vm101, %v952, 0
    %v970 = vsel %vm101, %v953, 0
    %v973 = vsel %vm101, %v954, 0
    %v976 = vsel %vm101, %v955, 0
    %v979 = vsel %vm101, %v956, 0
    %v982 = vsel %vm126, %v946, 0
    %v985 = vsel %vm126, %v947, 0
    %987 = vmatpush.msra.mxu0 0.0
    %988 = vmatpush.msra.mxu0 0.0
    %989 = vmatpush.msra.mxu0 0.0
    %990 = vmatpush.msra.mxu0 0.0
    %991 = vmatpush.msra.mxu0 0.0
    %992 = vmatpush.msra.mxu0 0.0
    %993 = vmatpush.msra.mxu0 0.0
    %994 = vmatpush.msra.mxu0 0.0
    %995 = vmatpush.msra.mxu0 0.0
    %996 = vmatpush.msra.mxu0 0.0
    %997 = vmatpush.msra.mxu0 0.0
    %998 = vmatpush.msra.mxu0 0.0
    %999 = vmatpush.msra.mxu0 0.0
    %1000 = vmatpush.msra.mxu0 0.0
    %1001 = vmatpush.msra.mxu0 0.0
    %1002 = vmatpush.msra.mxu0 %v982
    %1003 = vmatmul.f32.gmra.mxu0 %v958
    %v1004 = vpop.f32.mrf.mxu0
    %v1005 = vadd.f32 0.0, %v1004
    %1006 = vmatmul.f32.gmra.mxu0 %v961
    %v1007 = vpop.f32.mrf.mxu0
    %v1008 = vadd.f32 0.0, %v1007
    %1009 = vmatmul.f32.gmra.mxu0 %v964
    %v1010 = vpop.f32.mrf.mxu0
    %v1011 = vadd.f32 0.0, %v1010
    %1012 = vmatmul.f32.gmra.mxu0 %v967
    %v1013 = vpop.f32.mrf.mxu0
    %v1014 = vadd.f32 0.0, %v1013
    %1015 = vmatmul.f32.gmra.mxu0 %v970
    %v1016 = vpop.f32.mrf.mxu0
    %v1017 = vadd.f32 0.0, %v1016
    %1018 = vmatmul.f32.gmra.mxu0 %v973
    %v1019 = vpop.f32.mrf.mxu0
    %v1020 = vadd.f32 0.0, %v1019
    %1021 = vmatmul.f32.gmra.mxu0 %v976
    %v1022 = vpop.f32.mrf.mxu0
    %v1023 = vadd.f32 0.0, %v1022
    %1024 = vmatmul.f32.gmra.mxu0 %v979
    %v1025 = vpop.f32.mrf.mxu0
    %v1026 = vadd.f32 0.0, %v1025
    %1027 = vdwg.mxu0
    %1028 = vmatpush.msra.mxu0 0.0
    %1029 = vmatpush.msra.mxu0 0.0
    %1030 = vmatpush.msra.mxu0 0.0
    %1031 = vmatpush.msra.mxu0 0.0
    %1032 = vmatpush.msra.mxu0 0.0
    %1033 = vmatpush.msra.mxu0 0.0
    %1034 = vmatpush.msra.mxu0 0.0
    %1035 = vmatpush.msra.mxu0 0.0
    %1036 = vmatpush.msra.mxu0 0.0
    %1037 = vmatpush.msra.mxu0 0.0
    %1038 = vmatpush.msra.mxu0 0.0
    %1039 = vmatpush.msra.mxu0 0.0
    %1040 = vmatpush.msra.mxu0 0.0
    %1041 = vmatpush.msra.mxu0 0.0
    %1042 = vmatpush.msra.mxu0 0.0
    %1043 = vmatpush.msra.mxu0 %v985
    %1044 = vmatmul.f32.gmra.mxu0 %v958
    %v1045 = vpop.f32.mrf.mxu0
    %v1046 = vadd.f32 0.0, %v1045
    %1047 = vmatmul.f32.gmra.mxu0 %v961
    %v1048 = vpop.f32.mrf.mxu0
    %v1049 = vadd.f32 0.0, %v1048
    %1050 = vmatmul.f32.gmra.mxu0 %v964
    %v1051 = vpop.f32.mrf.mxu0
    %v1052 = vadd.f32 0.0, %v1051
    %1053 = vmatmul.f32.gmra.mxu0 %v967
    %v1054 = vpop.f32.mrf.mxu0
    %v1055 = vadd.f32 0.0, %v1054
    %1056 = vmatmul.f32.gmra.mxu0 %v970
    %v1057 = vpop.f32.mrf.mxu0
    %v1058 = vadd.f32 0.0, %v1057
    %1059 = vmatmul.f32.gmra.mxu0 %v973
    %v1060 = vpop.f32.mrf.mxu0
    %v1061 = vadd.f32 0.0, %v1060
    %1062 = vmatmul.f32.gmra.mxu0 %v976
    %v1063 = vpop.f32.mrf.mxu0
    %v1064 = vadd.f32 0.0, %v1063
    %1065 = vmatmul.f32.gmra.mxu0 %v979
    %v1066 = vpop.f32.mrf.mxu0
    %v1067 = vadd.f32 0.0, %v1066
    %1068 = vdwg.mxu0
    %v1069 = vadd.f32 %v914, %v1005
    %v1070 = vadd.f32 %v915, %v1046
    %v1071 = vadd.f32 %v916, %v1008
    %v1072 = vadd.f32 %v917, %v1049
    %v1073 = vadd.f32 %v918, %v1011
    %v1074 = vadd.f32 %v919, %v1052
    %v1075 = vadd.f32 %v920, %v1014
    %v1076 = vadd.f32 %v921, %v1055
    %v1077 = vadd.f32 %v922, %v1017
    %v1078 = vadd.f32 %v923, %v1058
    %v1079 = vadd.f32 %v924, %v1020
    %v1080 = vadd.f32 %v925, %v1061
    %v1081 = vadd.f32 %v926, %v1023
    %v1082 = vadd.f32 %v927, %v1064
    %v1083 = vadd.f32 %v928, %v1026
    %v1084 = vadd.f32 %v929, %v1067
    %1085 = vst [vmem:[#allocation1] ss:$2 sm:$0xff] %v46
    %v1086 = vld.sshfl [vmem:[#allocation1] sm:$0xff pattern:$0x75316420]
    %v1087 = vld.sshfl [vmem:[#allocation1 + $0x8] sm:$0xff pattern:$0x75316420]
    %1090 = vrot.lane.b32.xlu0 %v1086, 112
    %v1091 = vpop.permute.xlu0 %1090
    %1092 = vrot.lane.b32.xlu0 %v1087, 112
    %v1093 = vpop.permute.xlu0 %1092
    %vm1094 = vcmp.lt.s32.totalorder %v16, 112
    %v1095 = vsel %vm1094, %v1091, %v1093
    %v1096 = vsel %vm1094, %v1093, %v1091
    %v1097 = vsel %vm24, 1, 0
    %v1098 = vsel %vm25, 1, 0
    %vm1099 = vcmp.eq.s32.totalorder %v1097, 1
    %vm1100 = vcmp.eq.s32.totalorder %v1098, 1
    %v1101 = vsel %vm1099, %v1095, 0.0
    %v1102 = vsel %vm1100, %v1096, 0.0
    %s1103 = scalar_lea.vmem %s1, 448
    %v1104 = vld [vmem:[%s1103] sm:$0xff]
    %v1105 = vld [vmem:[%s1103 + $0x8] sm:$0xff]
    %v1106 = vld [vmem:[%s1103 + $0x10] sm:$0xff]
    %v1107 = vld [vmem:[%s1103 + $0x18] sm:$0xff]
    %v1108 = vld [vmem:[%s1103 + $0x20] sm:$0xff]
    %v1109 = vld [vmem:[%s1103 + $0x28] sm:$0xff]
    %v1110 = vld [vmem:[%s1103 + $0x30] sm:$0xff]
    %v1111 = vld [vmem:[%s1103 + $0x38] sm:$0xff]
    %v1113 = vsel %vm101, %v1104, 0
    %v1116 = vsel %vm101, %v1105, 0
    %v1119 = vsel %vm101, %v1106, 0
    %v1122 = vsel %vm101, %v1107, 0
    %v1125 = vsel %vm101, %v1108, 0
    %v1128 = vsel %vm101, %v1109, 0
    %v1131 = vsel %vm101, %v1110, 0
    %v1134 = vsel %vm101, %v1111, 0
    %v1137 = vsel %vm126, %v1101, 0
    %v1140 = vsel %vm126, %v1102, 0
    %1142 = vmatpush.msra.mxu0 0.0
    %1143 = vmatpush.msra.mxu0 0.0
    %1144 = vmatpush.msra.mxu0 0.0
    %1145 = vmatpush.msra.mxu0 0.0
    %1146 = vmatpush.msra.mxu0 0.0
    %1147 = vmatpush.msra.mxu0 0.0
    %1148 = vmatpush.msra.mxu0 0.0
    %1149 = vmatpush.msra.mxu0 0.0
    %1150 = vmatpush.msra.mxu0 0.0
    %1151 = vmatpush.msra.mxu0 0.0
    %1152 = vmatpush.msra.mxu0 0.0
    %1153 = vmatpush.msra.mxu0 0.0
    %1154 = vmatpush.msra.mxu0 0.0
    %1155 = vmatpush.msra.mxu0 0.0
    %1156 = vmatpush.msra.mxu0 0.0
    %1157 = vmatpush.msra.mxu0 %v1137
    %1158 = vmatmul.f32.gmra.mxu0 %v1113
    %v1159 = vpop.f32.mrf.mxu0
    %v1160 = vadd.f32 0.0, %v1159
    %1161 = vmatmul.f32.gmra.mxu0 %v1116
    %v1162 = vpop.f32.mrf.mxu0
    %v1163 = vadd.f32 0.0, %v1162
    %1164 = vmatmul.f32.gmra.mxu0 %v1119
    %v1165 = vpop.f32.mrf.mxu0
    %v1166 = vadd.f32 0.0, %v1165
    %1167 = vmatmul.f32.gmra.mxu0 %v1122
    %v1168 = vpop.f32.mrf.mxu0
    %v1169 = vadd.f32 0.0, %v1168
    %1170 = vmatmul.f32.gmra.mxu0 %v1125
    %v1171 = vpop.f32.mrf.mxu0
    %v1172 = vadd.f32 0.0, %v1171
    %1173 = vmatmul.f32.gmra.mxu0 %v1128
    %v1174 = vpop.f32.mrf.mxu0
    %v1175 = vadd.f32 0.0, %v1174
    %1176 = vmatmul.f32.gmra.mxu0 %v1131
    %v1177 = vpop.f32.mrf.mxu0
    %v1178 = vadd.f32 0.0, %v1177
    %1179 = vmatmul.f32.gmra.mxu0 %v1134
    %v1180 = vpop.f32.mrf.mxu0
    %v1181 = vadd.f32 0.0, %v1180
    %1182 = vdwg.mxu0
    %1183 = vmatpush.msra.mxu0 0.0
    %1184 = vmatpush.msra.mxu0 0.0
    %1185 = vmatpush.msra.mxu0 0.0
    %1186 = vmatpush.msra.mxu0 0.0
    %1187 = vmatpush.msra.mxu0 0.0
    %1188 = vmatpush.msra.mxu0 0.0
    %1189 = vmatpush.msra.mxu0 0.0
    %1190 = vmatpush.msra.mxu0 0.0
    %1191 = vmatpush.msra.mxu0 0.0
    %1192 = vmatpush.msra.mxu0 0.0
    %1193 = vmatpush.msra.mxu0 0.0
    %1194 = vmatpush.msra.mxu0 0.0
    %1195 = vmatpush.msra.mxu0 0.0
    %1196 = vmatpush.msra.mxu0 0.0
    %1197 = vmatpush.msra.mxu0 0.0
    %1198 = vmatpush.msra.mxu0 %v1140
    %1199 = vmatmul.f32.gmra.mxu0 %v1113
    %v1200 = vpop.f32.mrf.mxu0
    %v1201 = vadd.f32 0.0, %v1200
    %1202 = vmatmul.f32.gmra.mxu0 %v1116
    %v1203 = vpop.f32.mrf.mxu0
    %v1204 = vadd.f32 0.0, %v1203
    %1205 = vmatmul.f32.gmra.mxu0 %v1119
    %v1206 = vpop.f32.mrf.mxu0
    %v1207 = vadd.f32 0.0, %v1206
    %1208 = vmatmul.f32.gmra.mxu0 %v1122
    %v1209 = vpop.f32.mrf.mxu0
    %v1210 = vadd.f32 0.0, %v1209
    %1211 = vmatmul.f32.gmra.mxu0 %v1125
    %v1212 = vpop.f32.mrf.mxu0
    %v1213 = vadd.f32 0.0, %v1212
    %1214 = vmatmul.f32.gmra.mxu0 %v1128
    %v1215 = vpop.f32.mrf.mxu0
    %v1216 = vadd.f32 0.0, %v1215
    %1217 = vmatmul.f32.gmra.mxu0 %v1131
    %v1218 = vpop.f32.mrf.mxu0
    %v1219 = vadd.f32 0.0, %v1218
    %1220 = vmatmul.f32.gmra.mxu0 %v1134
    %v1221 = vpop.f32.mrf.mxu0
    %v1222 = vadd.f32 0.0, %v1221
    %1223 = vdwg.mxu0
    %v1224 = vadd.f32 %v1069, %v1160
    %v1225 = vadd.f32 %v1070, %v1201
    %v1226 = vadd.f32 %v1071, %v1163
    %v1227 = vadd.f32 %v1072, %v1204
    %v1228 = vadd.f32 %v1073, %v1166
    %v1229 = vadd.f32 %v1074, %v1207
    %v1230 = vadd.f32 %v1075, %v1169
    %v1231 = vadd.f32 %v1076, %v1210
    %v1232 = vadd.f32 %v1077, %v1172
    %v1233 = vadd.f32 %v1078, %v1213
    %v1234 = vadd.f32 %v1079, %v1175
    %v1235 = vadd.f32 %v1080, %v1216
    %v1236 = vadd.f32 %v1081, %v1178
    %v1237 = vadd.f32 %v1082, %v1219
    %v1238 = vadd.f32 %v1083, %v1181
    %v1239 = vadd.f32 %v1084, %v1222
    %1240 = vst [vmem:[#allocation1] ss:$2 sm:$0xff] %v46
    %v1241 = vld.sshfl [vmem:[#allocation1] sm:$0xff pattern:$0x75316420]
    %v1242 = vld.sshfl [vmem:[#allocation1 + $0x8] sm:$0xff pattern:$0x75316420]
    %1245 = vrot.lane.b32.xlu0 %v1241, 111
    %v1246 = vpop.permute.xlu0 %1245
    %1247 = vrot.lane.b32.xlu0 %v1242, 111
    %v1248 = vpop.permute.xlu0 %1247
    %vm1249 = vcmp.lt.s32.totalorder %v16, 111
    %v1250 = vsel %vm1249, %v1246, %v1248
    %v1251 = vsel %vm1249, %v1248, %v1246
    %v1252 = vsel %vm36, 1, 0
    %v1253 = vsel %vm37, 1, 0
    %vm1254 = vcmp.eq.s32.totalorder %v1252, 1
    %vm1255 = vcmp.eq.s32.totalorder %v1253, 1
    %v1256 = vsel %vm1254, %v1250, 0.0
    %v1257 = vsel %vm1255, %v1251, 0.0
    %s1258 = scalar_lea.vmem %s1, 512
    %v1259 = vld [vmem:[%s1258] sm:$0xff]
    %v1260 = vld [vmem:[%s1258 + $0x8] sm:$0xff]
    %v1261 = vld [vmem:[%s1258 + $0x10] sm:$0xff]
    %v1262 = vld [vmem:[%s1258 + $0x18] sm:$0xff]
    %v1263 = vld [vmem:[%s1258 + $0x20] sm:$0xff]
    %v1264 = vld [vmem:[%s1258 + $0x28] sm:$0xff]
    %v1265 = vld [vmem:[%s1258 + $0x30] sm:$0xff]
    %v1266 = vld [vmem:[%s1258 + $0x38] sm:$0xff]
    %v1268 = vsel %vm101, %v1259, 0
    %v1271 = vsel %vm101, %v1260, 0
    %v1274 = vsel %vm101, %v1261, 0
    %v1277 = vsel %vm101, %v1262, 0
    %v1280 = vsel %vm101, %v1263, 0
    %v1283 = vsel %vm101, %v1264, 0
    %v1286 = vsel %vm101, %v1265, 0
    %v1289 = vsel %vm101, %v1266, 0
    %v1292 = vsel %vm126, %v1256, 0
    %v1295 = vsel %vm126, %v1257, 0
    %1297 = vmatpush.msra.mxu0 0.0
    %1298 = vmatpush.msra.mxu0 0.0
    %1299 = vmatpush.msra.mxu0 0.0
    %1300 = vmatpush.msra.mxu0 0.0
    %1301 = vmatpush.msra.mxu0 0.0
    %1302 = vmatpush.msra.mxu0 0.0
    %1303 = vmatpush.msra.mxu0 0.0
    %1304 = vmatpush.msra.mxu0 0.0
    %1305 = vmatpush.msra.mxu0 0.0
    %1306 = vmatpush.msra.mxu0 0.0
    %1307 = vmatpush.msra.mxu0 0.0
    %1308 = vmatpush.msra.mxu0 0.0
    %1309 = vmatpush.msra.mxu0 0.0
    %1310 = vmatpush.msra.mxu0 0.0
    %1311 = vmatpush.msra.mxu0 0.0
    %1312 = vmatpush.msra.mxu0 %v1292
    %1313 = vmatmul.f32.gmra.mxu0 %v1268
    %v1314 = vpop.f32.mrf.mxu0
    %v1315 = vadd.f32 0.0, %v1314
    %1316 = vmatmul.f32.gmra.mxu0 %v1271
    %v1317 = vpop.f32.mrf.mxu0
    %v1318 = vadd.f32 0.0, %v1317
    %1319 = vmatmul.f32.gmra.mxu0 %v1274
    %v1320 = vpop.f32.mrf.mxu0
    %v1321 = vadd.f32 0.0, %v1320
    %1322 = vmatmul.f32.gmra.mxu0 %v1277
    %v1323 = vpop.f32.mrf.mxu0
    %v1324 = vadd.f32 0.0, %v1323
    %1325 = vmatmul.f32.gmra.mxu0 %v1280
    %v1326 = vpop.f32.mrf.mxu0
    %v1327 = vadd.f32 0.0, %v1326
    %1328 = vmatmul.f32.gmra.mxu0 %v1283
    %v1329 = vpop.f32.mrf.mxu0
    %v1330 = vadd.f32 0.0, %v1329
    %1331 = vmatmul.f32.gmra.mxu0 %v1286
    %v1332 = vpop.f32.mrf.mxu0
    %v1333 = vadd.f32 0.0, %v1332
    %1334 = vmatmul.f32.gmra.mxu0 %v1289
    %v1335 = vpop.f32.mrf.mxu0
    %v1336 = vadd.f32 0.0, %v1335
    %1337 = vdwg.mxu0
    %1338 = vmatpush.msra.mxu0 0.0
    %1339 = vmatpush.msra.mxu0 0.0
    %1340 = vmatpush.msra.mxu0 0.0
    %1341 = vmatpush.msra.mxu0 0.0
    %1342 = vmatpush.msra.mxu0 0.0
    %1343 = vmatpush.msra.mxu0 0.0
    %1344 = vmatpush.msra.mxu0 0.0
    %1345 = vmatpush.msra.mxu0 0.0
    %1346 = vmatpush.msra.mxu0 0.0
    %1347 = vmatpush.msra.mxu0 0.0
    %1348 = vmatpush.msra.mxu0 0.0
    %1349 = vmatpush.msra.mxu0 0.0
    %1350 = vmatpush.msra.mxu0 0.0
    %1351 = vmatpush.msra.mxu0 0.0
    %1352 = vmatpush.msra.mxu0 0.0
    %1353 = vmatpush.msra.mxu0 %v1295
    %1354 = vmatmul.f32.gmra.mxu0 %v1268
    %v1355 = vpop.f32.mrf.mxu0
    %v1356 = vadd.f32 0.0, %v1355
    %1357 = vmatmul.f32.gmra.mxu0 %v1271
    %v1358 = vpop.f32.mrf.mxu0
    %v1359 = vadd.f32 0.0, %v1358
    %1360 = vmatmul.f32.gmra.mxu0 %v1274
    %v1361 = vpop.f32.mrf.mxu0
    %v1362 = vadd.f32 0.0, %v1361
    %1363 = vmatmul.f32.gmra.mxu0 %v1277
    %v1364 = vpop.f32.mrf.mxu0
    %v1365 = vadd.f32 0.0, %v1364
    %1366 = vmatmul.f32.gmra.mxu0 %v1280
    %v1367 = vpop.f32.mrf.mxu0
    %v1368 = vadd.f32 0.0, %v1367
    %1369 = vmatmul.f32.gmra.mxu0 %v1283
    %v1370 = vpop.f32.mrf.mxu0
    %v1371 = vadd.f32 0.0, %v1370
    %1372 = vmatmul.f32.gmra.mxu0 %v1286
    %v1373 = vpop.f32.mrf.mxu0
    %v1374 = vadd.f32 0.0, %v1373
    %1375 = vmatmul.f32.gmra.mxu0 %v1289
    %v1376 = vpop.f32.mrf.mxu0
    %v1377 = vadd.f32 0.0, %v1376
    %1378 = vdwg.mxu0
    %v1379 = vadd.f32 %v1224, %v1315
    %v1380 = vadd.f32 %v1225, %v1356
    %v1381 = vadd.f32 %v1226, %v1318
    %v1382 = vadd.f32 %v1227, %v1359
    %v1383 = vadd.f32 %v1228, %v1321
    %v1384 = vadd.f32 %v1229, %v1362
    %v1385 = vadd.f32 %v1230, %v1324
    %v1386 = vadd.f32 %v1231, %v1365
    %v1387 = vadd.f32 %v1232, %v1327
    %v1388 = vadd.f32 %v1233, %v1368
    %v1389 = vadd.f32 %v1234, %v1330
    %v1390 = vadd.f32 %v1235, %v1371
    %v1391 = vadd.f32 %v1236, %v1333
    %v1392 = vadd.f32 %v1237, %v1374
    %v1393 = vadd.f32 %v1238, %v1336
    %v1394 = vadd.f32 %v1239, %v1377
    %1396 = vset.pattern.permute.xlu0 0
    %1397 = vperm.xlu0 %1396, %v38
    %v1398 = vpop.permute.xlu0 %1397
    %1401 = vset.pattern.permute.xlu0 0
    %1402 = vperm.xlu0 %1401, %v39
    %v1403 = vpop.permute.xlu0 %1402
    %1406 = vset.pattern.permute.xlu0 0
    %1407 = vperm.xlu0 %1406, %v40
    %v1408 = vpop.permute.xlu0 %1407
    %1411 = vset.pattern.permute.xlu0 0
    %1412 = vperm.xlu0 %1411, %v41
    %v1413 = vpop.permute.xlu0 %1412
    %1416 = vset.pattern.permute.xlu0 0
    %1417 = vperm.xlu0 %1416, %v42
    %v1418 = vpop.permute.xlu0 %1417
    %1421 = vset.pattern.permute.xlu0 0
    %1422 = vperm.xlu0 %1421, %v43
    %v1423 = vpop.permute.xlu0 %1422
    %1426 = vset.pattern.permute.xlu0 0
    %1427 = vperm.xlu0 %1426, %v44
    %v1428 = vpop.permute.xlu0 %1427
    %1431 = vset.pattern.permute.xlu0 0
    %1432 = vperm.xlu0 %1431, %v45
    %v1433 = vpop.permute.xlu0 %1432
    %v1435 = vadd.f32 %v1379, %v1398
    %v1436 = vadd.f32 %v1380, %v1398
    %v1437 = vadd.f32 %v1381, %v1403
    %v1438 = vadd.f32 %v1382, %v1403
    %v1439 = vadd.f32 %v1383, %v1408
    %v1440 = vadd.f32 %v1384, %v1408
    %v1441 = vadd.f32 %v1385, %v1413
    %v1442 = vadd.f32 %v1386, %v1413
    %v1443 = vadd.f32 %v1387, %v1418
    %v1444 = vadd.f32 %v1388, %v1418
    %v1445 = vadd.f32 %v1389, %v1423
    %v1446 = vadd.f32 %v1390, %v1423
    %v1447 = vadd.f32 %v1391, %v1428
    %v1448 = vadd.f32 %v1392, %v1428
    %v1449 = vadd.f32 %v1393, %v1433
    %v1450 = vadd.f32 %v1394, %v1433
    %v1451 = vmul.f32 %v1435, 0.01
    %v1452 = vmul.f32 %v1436, 0.01
    %v1453 = vmul.f32 %v1437, 0.01
    %v1454 = vmul.f32 %v1438, 0.01
    %v1455 = vmul.f32 %v1439, 0.01
    %v1456 = vmul.f32 %v1440, 0.01
    %v1457 = vmul.f32 %v1441, 0.01
    %v1458 = vmul.f32 %v1442, 0.01
    %v1459 = vmul.f32 %v1443, 0.01
    %v1460 = vmul.f32 %v1444, 0.01
    %v1461 = vmul.f32 %v1445, 0.01
    %v1462 = vmul.f32 %v1446, 0.01
    %v1463 = vmul.f32 %v1447, 0.01
    %v1464 = vmul.f32 %v1448, 0.01
    %v1465 = vmul.f32 %v1449, 0.01
    %v1466 = vmul.f32 %v1450, 0.01
    %v1467 = vmax.f32 %v1435, %v1451
    %v1468 = vmax.f32 %v1436, %v1452
    %v1469 = vmax.f32 %v1437, %v1453
    %v1470 = vmax.f32 %v1438, %v1454
    %v1471 = vmax.f32 %v1439, %v1455
    %v1472 = vmax.f32 %v1440, %v1456
    %v1473 = vmax.f32 %v1441, %v1457
    %v1474 = vmax.f32 %v1442, %v1458
    %v1475 = vmax.f32 %v1443, %v1459
    %v1476 = vmax.f32 %v1444, %v1460
    %v1477 = vmax.f32 %v1445, %v1461
    %v1478 = vmax.f32 %v1446, %v1462
    %v1479 = vmax.f32 %v1447, %v1463
    %v1480 = vmax.f32 %v1448, %v1464
    %v1481 = vmax.f32 %v1449, %v1465
    %v1482 = vmax.f32 %v1450, %v1466
    %1483 = vst [vmem:[#allocation2] sm:$0xff] %v1467
    %1484 = vst [vmem:[#allocation2 + $0x8] sm:$0xff] %v1468
    %1485 = vst [vmem:[#allocation2 + $0x10] sm:$0xff] %v1469
    %1486 = vst [vmem:[#allocation2 + $0x18] sm:$0xff] %v1470
    %1487 = vst [vmem:[#allocation2 + $0x20] sm:$0xff] %v1471
    %1488 = vst [vmem:[#allocation2 + $0x28] sm:$0xff] %v1472
    %1489 = vst [vmem:[#allocation2 + $0x30] sm:$0xff] %v1473
    %1490 = vst [vmem:[#allocation2 + $0x38] sm:$0xff] %v1474
    %1491 = vst [vmem:[#allocation2 + $0x40] sm:$0xff] %v1475
    %1492 = vst [vmem:[#allocation2 + $0x48] sm:$0xff] %v1476
    %1493 = vst [vmem:[#allocation2 + $0x50] sm:$0xff] %v1477
    %1494 = vst [vmem:[#allocation2 + $0x58] sm:$0xff] %v1478
    %1495 = vst [vmem:[#allocation2 + $0x60] sm:$0xff] %v1479
    %1496 = vst [vmem:[#allocation2 + $0x68] sm:$0xff] %v1480
    %1497 = vst [vmem:[#allocation2 + $0x70] sm:$0xff] %v1481
    %1498 = vst [vmem:[#allocation2 + $0x78] sm:$0xff] %v1482
    %s1499 = scalar_lea.vmem %s0, 8
    %v1500 = vld [vmem:[%s1499] sm:$0x77]
    %1502 = vst [vmem:[#allocation1] ss:$2 sm:$0xff] %v1500
    %v1503 = vld.sshfl [vmem:[#allocation1] sm:$0xff pattern:$0x75316420]
    %v1504 = vld.sshfl [vmem:[#allocation1 + $0x8] sm:$0xff pattern:$0x75316420]
    %1507 = vrot.lane.b32.xlu0 %v1503, 17
    %v1508 = vpop.permute.xlu0 %1507
    %1509 = vrot.lane.b32.xlu0 %v1504, 17
    %v1510 = vpop.permute.xlu0 %1509
    %v1511 = vsel %vm57, %v1508, %v1510
    %v1512 = vsel %vm57, %v1510, %v1508
    %v1513 = vsel %vm62, %v1512, 0.0
    %v1514 = vsel %vm63, %v1511, 0.0
    %v1515 = vld [vmem:[%s1] sm:$0xff]
    %v1516 = vld [vmem:[%s1 + $0x8] sm:$0xff]
    %v1517 = vld [vmem:[%s1 + $0x10] sm:$0xff]
    %v1518 = vld [vmem:[%s1 + $0x18] sm:$0xff]
    %v1519 = vld [vmem:[%s1 + $0x20] sm:$0xff]
    %v1520 = vld [vmem:[%s1 + $0x28] sm:$0xff]
    %v1521 = vld [vmem:[%s1 + $0x30] sm:$0xff]
    %v1522 = vld [vmem:[%s1 + $0x38] sm:$0xff]
    %1523 = vst [vmem:[#allocation1] ss:$2 sm:$0xff] %v1500
    %v1524 = vld.sshfl [vmem:[#allocation1] sm:$0xff pattern:$0x75316420]
    %v1525 = vld.sshfl [vmem:[#allocation1 + $0x8] sm:$0xff pattern:$0x75316420]
    %1528 = vrot.lane.b32.xlu0 %v1524, 16
    %v1529 = vpop.permute.xlu0 %1528
    %1530 = vrot.lane.b32.xlu0 %v1525, 16
    %v1531 = vpop.permute.xlu0 %1530
    %v1532 = vsel %vm83, %v1529, %v1531
    %v1533 = vsel %vm83, %v1531, %v1529
    %v1534 = vsel %vm88, %v1533, 0.0
    %v1535 = vsel %vm89, %v1532, 0.0
    %v1536 = vld [vmem:[%s92] sm:$0xff]
    %v1537 = vld [vmem:[%s92 + $0x8] sm:$0xff]
    %v1538 = vld [vmem:[%s92 + $0x10] sm:$0xff]
    %v1539 = vld [vmem:[%s92 + $0x18] sm:$0xff]
    %v1540 = vld [vmem:[%s92 + $0x20] sm:$0xff]
    %v1541 = vld [vmem:[%s92 + $0x28] sm:$0xff]
    %v1542 = vld [vmem:[%s92 + $0x30] sm:$0xff]
    %v1543 = vld [vmem:[%s92 + $0x38] sm:$0xff]
    %v1545 = vsel %vm101, %v1536, 0
    %v1548 = vsel %vm101, %v1537, 0
    %v1551 = vsel %vm101, %v1538, 0
    %v1554 = vsel %vm101, %v1539, 0
    %v1557 = vsel %vm101, %v1540, 0
    %v1560 = vsel %vm101, %v1541, 0
    %v1563 = vsel %vm101, %v1542, 0
    %v1566 = vsel %vm101, %v1543, 0
    %v1569 = vsel %vm126, %v1534, 0
    %v1572 = vsel %vm126, %v1535, 0
    %1574 = vmatpush.msra.mxu0 0.0
    %1575 = vmatpush.msra.mxu0 0.0
    %1576 = vmatpush.msra.mxu0 0.0
    %1577 = vmatpush.msra.mxu0 0.0
    %1578 = vmatpush.msra.mxu0 0.0
    %1579 = vmatpush.msra.mxu0 0.0
    %1580 = vmatpush.msra.mxu0 0.0
    %1581 = vmatpush.msra.mxu0 0.0
    %1582 = vmatpush.msra.mxu0 0.0
    %1583 = vmatpush.msra.mxu0 0.0
    %1584 = vmatpush.msra.mxu0 0.0
    %1585 = vmatpush.msra.mxu0 0.0
    %1586 = vmatpush.msra.mxu0 0.0
    %1587 = vmatpush.msra.mxu0 0.0
    %1588 = vmatpush.msra.mxu0 0.0
    %1589 = vmatpush.msra.mxu0 %v1569
    %1590 = vmatmul.f32.gmra.mxu0 %v1545
    %v1591 = vpop.f32.mrf.mxu0
    %v1592 = vadd.f32 0.0, %v1591
    %1593 = vmatmul.f32.gmra.mxu0 %v1548
    %v1594 = vpop.f32.mrf.mxu0
    %v1595 = vadd.f32 0.0, %v1594
    %1596 = vmatmul.f32.gmra.mxu0 %v1551
    %v1597 = vpop.f32.mrf.mxu0
    %v1598 = vadd.f32 0.0, %v1597
    %1599 = vmatmul.f32.gmra.mxu0 %v1554
    %v1600 = vpop.f32.mrf.mxu0
    %v1601 = vadd.f32 0.0, %v1600
    %1602 = vmatmul.f32.gmra.mxu0 %v1557
    %v1603 = vpop.f32.mrf.mxu0
    %v1604 = vadd.f32 0.0, %v1603
    %1605 = vmatmul.f32.gmra.mxu0 %v1560
    %v1606 = vpop.f32.mrf.mxu0
    %v1607 = vadd.f32 0.0, %v1606
    %1608 = vmatmul.f32.gmra.mxu0 %v1563
    %v1609 = vpop.f32.mrf.mxu0
    %v1610 = vadd.f32 0.0, %v1609
    %1611 = vmatmul.f32.gmra.mxu0 %v1566
    %v1612 = vpop.f32.mrf.mxu0
    %v1613 = vadd.f32 0.0, %v1612
    %1614 = vdwg.mxu0
    %1615 = vmatpush.msra.mxu0 0.0
    %1616 = vmatpush.msra.mxu0 0.0
    %1617 = vmatpush.msra.mxu0 0.0
    %1618 = vmatpush.msra.mxu0 0.0
    %1619 = vmatpush.msra.mxu0 0.0
    %1620 = vmatpush.msra.mxu0 0.0
    %1621 = vmatpush.msra.mxu0 0.0
    %1622 = vmatpush.msra.mxu0 0.0
    %1623 = vmatpush.msra.mxu0 0.0
    %1624 = vmatpush.msra.mxu0 0.0
    %1625 = vmatpush.msra.mxu0 0.0
    %1626 = vmatpush.msra.mxu0 0.0
    %1627 = vmatpush.msra.mxu0 0.0
    %1628 = vmatpush.msra.mxu0 0.0
    %1629 = vmatpush.msra.mxu0 0.0
    %1630 = vmatpush.msra.mxu0 %v1572
    %1631 = vmatmul.f32.gmra.mxu0 %v1545
    %v1632 = vpop.f32.mrf.mxu0
    %v1633 = vadd.f32 0.0, %v1632
    %1634 = vmatmul.f32.gmra.mxu0 %v1548
    %v1635 = vpop.f32.mrf.mxu0
    %v1636 = vadd.f32 0.0, %v1635
    %1637 = vmatmul.f32.gmra.mxu0 %v1551
    %v1638 = vpop.f32.mrf.mxu0
    %v1639 = vadd.f32 0.0, %v1638
    %1640 = vmatmul.f32.gmra.mxu0 %v1554
    %v1641 = vpop.f32.mrf.mxu0
    %v1642 = vadd.f32 0.0, %v1641
    %1643 = vmatmul.f32.gmra.mxu0 %v1557
    %v1644 = vpop.f32.mrf.mxu0
    %v1645 = vadd.f32 0.0, %v1644
    %1646 = vmatmul.f32.gmra.mxu0 %v1560
    %v1647 = vpop.f32.mrf.mxu0
    %v1648 = vadd.f32 0.0, %v1647
    %1649 = vmatmul.f32.gmra.mxu0 %v1563
    %v1650 = vpop.f32.mrf.mxu0
    %v1651 = vadd.f32 0.0, %v1650
    %1652 = vmatmul.f32.gmra.mxu0 %v1566
    %v1653 = vpop.f32.mrf.mxu0
    %v1654 = vadd.f32 0.0, %v1653
    %1655 = vdwg.mxu0
    %v1657 = vsel %vm101, %v1515, 0
    %v1660 = vsel %vm101, %v1516, 0
    %v1663 = vsel %vm101, %v1517, 0
    %v1666 = vsel %vm101, %v1518, 0
    %v1669 = vsel %vm101, %v1519, 0
    %v1672 = vsel %vm101, %v1520, 0
    %v1675 = vsel %vm101, %v1521, 0
    %v1678 = vsel %vm101, %v1522, 0
    %v1681 = vsel %vm126, %v1513, 0
    %v1684 = vsel %vm126, %v1514, 0
    %1686 = vmatpush.msra.mxu0 0.0
    %1687 = vmatpush.msra.mxu0 0.0
    %1688 = vmatpush.msra.mxu0 0.0
    %1689 = vmatpush.msra.mxu0 0.0
    %1690 = vmatpush.msra.mxu0 0.0
    %1691 = vmatpush.msra.mxu0 0.0
    %1692 = vmatpush.msra.mxu0 0.0
    %1693 = vmatpush.msra.mxu0 0.0
    %1694 = vmatpush.msra.mxu0 0.0
    %1695 = vmatpush.msra.mxu0 0.0
    %1696 = vmatpush.msra.mxu0 0.0
    %1697 = vmatpush.msra.mxu0 0.0
    %1698 = vmatpush.msra.mxu0 0.0
    %1699 = vmatpush.msra.mxu0 0.0
    %1700 = vmatpush.msra.mxu0 0.0
    %1701 = vmatpush.msra.mxu0 %v1681
    %1702 = vmatmul.f32.gmra.mxu0 %v1657
    %v1703 = vpop.f32.mrf.mxu0
    %v1704 = vadd.f32 %v1592, %v1703
    %1705 = vmatmul.f32.gmra.mxu0 %v1660
    %v1706 = vpop.f32.mrf.mxu0
    %v1707 = vadd.f32 %v1595, %v1706
    %1708 = vmatmul.f32.gmra.mxu0 %v1663
    %v1709 = vpop.f32.mrf.mxu0
    %v1710 = vadd.f32 %v1598, %v1709
    %1711 = vmatmul.f32.gmra.mxu0 %v1666
    %v1712 = vpop.f32.mrf.mxu0
    %v1713 = vadd.f32 %v1601, %v1712
    %1714 = vmatmul.f32.gmra.mxu0 %v1669
    %v1715 = vpop.f32.mrf.mxu0
    %v1716 = vadd.f32 %v1604, %v1715
    %1717 = vmatmul.f32.gmra.mxu0 %v1672
    %v1718 = vpop.f32.mrf.mxu0
    %v1719 = vadd.f32 %v1607, %v1718
    %1720 = vmatmul.f32.gmra.mxu0 %v1675
    %v1721 = vpop.f32.mrf.mxu0
    %v1722 = vadd.f32 %v1610, %v1721
    %1723 = vmatmul.f32.gmra.mxu0 %v1678
    %v1724 = vpop.f32.mrf.mxu0
    %v1725 = vadd.f32 %v1613, %v1724
    %1726 = vdwg.mxu0
    %1727 = vmatpush.msra.mxu0 0.0
    %1728 = vmatpush.msra.mxu0 0.0
    %1729 = vmatpush.msra.mxu0 0.0
    %1730 = vmatpush.msra.mxu0 0.0
    %1731 = vmatpush.msra.mxu0 0.0
    %1732 = vmatpush.msra.mxu0 0.0
    %1733 = vmatpush.msra.mxu0 0.0
    %1734 = vmatpush.msra.mxu0 0.0
    %1735 = vmatpush.msra.mxu0 0.0
    %1736 = vmatpush.msra.mxu0 0.0
    %1737 = vmatpush.msra.mxu0 0.0
    %1738 = vmatpush.msra.mxu0 0.0
    %1739 = vmatpush.msra.mxu0 0.0
    %1740 = vmatpush.msra.mxu0 0.0
    %1741 = vmatpush.msra.mxu0 0.0
    %1742 = vmatpush.msra.mxu0 %v1684
    %1743 = vmatmul.f32.gmra.mxu0 %v1657
    %v1744 = vpop.f32.mrf.mxu0
    %v1745 = vadd.f32 %v1633, %v1744
    %1746 = vmatmul.f32.gmra.mxu0 %v1660
    %v1747 = vpop.f32.mrf.mxu0
    %v1748 = vadd.f32 %v1636, %v1747
    %1749 = vmatmul.f32.gmra.mxu0 %v1663
    %v1750 = vpop.f32.mrf.mxu0
    %v1751 = vadd.f32 %v1639, %v1750
    %1752 = vmatmul.f32.gmra.mxu0 %v1666
    %v1753 = vpop.f32.mrf.mxu0
    %v1754 = vadd.f32 %v1642, %v1753
    %1755 = vmatmul.f32.gmra.mxu0 %v1669
    %v1756 = vpop.f32.mrf.mxu0
    %v1757 = vadd.f32 %v1645, %v1756
    %1758 = vmatmul.f32.gmra.mxu0 %v1672
    %v1759 = vpop.f32.mrf.mxu0
    %v1760 = vadd.f32 %v1648, %v1759
    %1761 = vmatmul.f32.gmra.mxu0 %v1675
    %v1762 = vpop.f32.mrf.mxu0
    %v1763 = vadd.f32 %v1651, %v1762
    %1764 = vmatmul.f32.gmra.mxu0 %v1678
    %v1765 = vpop.f32.mrf.mxu0
    %v1766 = vadd.f32 %v1654, %v1765
    %1767 = vdwg.mxu0
    %1768 = vst [vmem:[#allocation1] ss:$2 sm:$0xff] %v1500
    %v1769 = vld.sshfl [vmem:[#allocation1] sm:$0xff pattern:$0x75316420]
    %v1770 = vld.sshfl [vmem:[#allocation1 + $0x8] sm:$0xff pattern:$0x75316420]
    %1773 = vrot.lane.b32.xlu0 %v1769, 15
    %v1774 = vpop.permute.xlu0 %1773
    %1775 = vrot.lane.b32.xlu0 %v1770, 15
    %v1776 = vpop.permute.xlu0 %1775
    %v1777 = vsel %vm336, %v1774, %v1776
    %v1778 = vsel %vm336, %v1776, %v1774
    %v1779 = vsel %vm341, %v1778, 0.0
    %v1780 = vsel %vm342, %v1777, 0.0
    %v1781 = vld [vmem:[%s345] sm:$0xff]
    %v1782 = vld [vmem:[%s345 + $0x8] sm:$0xff]
    %v1783 = vld [vmem:[%s345 + $0x10] sm:$0xff]
    %v1784 = vld [vmem:[%s345 + $0x18] sm:$0xff]
    %v1785 = vld [vmem:[%s345 + $0x20] sm:$0xff]
    %v1786 = vld [vmem:[%s345 + $0x28] sm:$0xff]
    %v1787 = vld [vmem:[%s345 + $0x30] sm:$0xff]
    %v1788 = vld [vmem:[%s345 + $0x38] sm:$0xff]
    %v1790 = vsel %vm101, %v1781, 0
    %v1793 = vsel %vm101, %v1782, 0
    %v1796 = vsel %vm101, %v1783, 0
    %v1799 = vsel %vm101, %v1784, 0
    %v1802 = vsel %vm101, %v1785, 0
    %v1805 = vsel %vm101, %v1786, 0
    %v1808 = vsel %vm101, %v1787, 0
    %v1811 = vsel %vm101, %v1788, 0
    %v1814 = vsel %vm126, %v1779, 0
    %v1817 = vsel %vm126, %v1780, 0
    %1819 = vmatpush.msra.mxu0 0.0
    %1820 = vmatpush.msra.mxu0 0.0
    %1821 = vmatpush.msra.mxu0 0.0
    %1822 = vmatpush.msra.mxu0 0.0
    %1823 = vmatpush.msra.mxu0 0.0
    %1824 = vmatpush.msra.mxu0 0.0
    %1825 = vmatpush.msra.mxu0 0.0
    %1826 = vmatpush.msra.mxu0 0.0
    %1827 = vmatpush.msra.mxu0 0.0
    %1828 = vmatpush.msra.mxu0 0.0
    %1829 = vmatpush.msra.mxu0 0.0
    %1830 = vmatpush.msra.mxu0 0.0
    %1831 = vmatpush.msra.mxu0 0.0
    %1832 = vmatpush.msra.mxu0 0.0
    %1833 = vmatpush.msra.mxu0 0.0
    %1834 = vmatpush.msra.mxu0 %v1814
    %1835 = vmatmul.f32.gmra.mxu0 %v1790
    %v1836 = vpop.f32.mrf.mxu0
    %v1837 = vadd.f32 0.0, %v1836
    %1838 = vmatmul.f32.gmra.mxu0 %v1793
    %v1839 = vpop.f32.mrf.mxu0
    %v1840 = vadd.f32 0.0, %v1839
    %1841 = vmatmul.f32.gmra.mxu0 %v1796
    %v1842 = vpop.f32.mrf.mxu0
    %v1843 = vadd.f32 0.0, %v1842
    %1844 = vmatmul.f32.gmra.mxu0 %v1799
    %v1845 = vpop.f32.mrf.mxu0
    %v1846 = vadd.f32 0.0, %v1845
    %1847 = vmatmul.f32.gmra.mxu0 %v1802
    %v1848 = vpop.f32.mrf.mxu0
    %v1849 = vadd.f32 0.0, %v1848
    %1850 = vmatmul.f32.gmra.mxu0 %v1805
    %v1851 = vpop.f32.mrf.mxu0
    %v1852 = vadd.f32 0.0, %v1851
    %1853 = vmatmul.f32.gmra.mxu0 %v1808
    %v1854 = vpop.f32.mrf.mxu0
    %v1855 = vadd.f32 0.0, %v1854
    %1856 = vmatmul.f32.gmra.mxu0 %v1811
    %v1857 = vpop.f32.mrf.mxu0
    %v1858 = vadd.f32 0.0, %v1857
    %1859 = vdwg.mxu0
    %1860 = vmatpush.msra.mxu0 0.0
    %1861 = vmatpush.msra.mxu0 0.0
    %1862 = vmatpush.msra.mxu0 0.0
    %1863 = vmatpush.msra.mxu0 0.0
    %1864 = vmatpush.msra.mxu0 0.0
    %1865 = vmatpush.msra.mxu0 0.0
    %1866 = vmatpush.msra.mxu0 0.0
    %1867 = vmatpush.msra.mxu0 0.0
    %1868 = vmatpush.msra.mxu0 0.0
    %1869 = vmatpush.msra.mxu0 0.0
    %1870 = vmatpush.msra.mxu0 0.0
    %1871 = vmatpush.msra.mxu0 0.0
    %1872 = vmatpush.msra.mxu0 0.0
    %1873 = vmatpush.msra.mxu0 0.0
    %1874 = vmatpush.msra.mxu0 0.0
    %1875 = vmatpush.msra.mxu0 %v1817
    %1876 = vmatmul.f32.gmra.mxu0 %v1790
    %v1877 = vpop.f32.mrf.mxu0
    %v1878 = vadd.f32 0.0, %v1877
    %1879 = vmatmul.f32.gmra.mxu0 %v1793
    %v1880 = vpop.f32.mrf.mxu0
    %v1881 = vadd.f32 0.0, %v1880
    %1882 = vmatmul.f32.gmra.mxu0 %v1796
    %v1883 = vpop.f32.mrf.mxu0
    %v1884 = vadd.f32 0.0, %v1883
    %1885 = vmatmul.f32.gmra.mxu0 %v1799
    %v1886 = vpop.f32.mrf.mxu0
    %v1887 = vadd.f32 0.0, %v1886
    %1888 = vmatmul.f32.gmra.mxu0 %v1802
    %v1889 = vpop.f32.mrf.mxu0
    %v1890 = vadd.f32 0.0, %v1889
    %1891 = vmatmul.f32.gmra.mxu0 %v1805
    %v1892 = vpop.f32.mrf.mxu0
    %v1893 = vadd.f32 0.0, %v1892
    %1894 = vmatmul.f32.gmra.mxu0 %v1808
    %v1895 = vpop.f32.mrf.mxu0
    %v1896 = vadd.f32 0.0, %v1895
    %1897 = vmatmul.f32.gmra.mxu0 %v1811
    %v1898 = vpop.f32.mrf.mxu0
    %v1899 = vadd.f32 0.0, %v1898
    %1900 = vdwg.mxu0
    %v1901 = vadd.f32 %v1704, %v1837
    %v1902 = vadd.f32 %v1745, %v1878
    %v1903 = vadd.f32 %v1707, %v1840
    %v1904 = vadd.f32 %v1748, %v1881
    %v1905 = vadd.f32 %v1710, %v1843
    %v1906 = vadd.f32 %v1751, %v1884
    %v1907 = vadd.f32 %v1713, %v1846
    %v1908 = vadd.f32 %v1754, %v1887
    %v1909 = vadd.f32 %v1716, %v1849
    %v1910 = vadd.f32 %v1757, %v1890
    %v1911 = vadd.f32 %v1719, %v1852
    %v1912 = vadd.f32 %v1760, %v1893
    %v1913 = vadd.f32 %v1722, %v1855
    %v1914 = vadd.f32 %v1763, %v1896
    %v1915 = vadd.f32 %v1725, %v1858
    %v1916 = vadd.f32 %v1766, %v1899
    %1917 = vst [vmem:[#allocation1] ss:$2 sm:$0xff] %v1500
    %v1918 = vld.sshfl [vmem:[#allocation1] sm:$0xff pattern:$0x75316420]
    %v1919 = vld.sshfl [vmem:[#allocation1 + $0x8] sm:$0xff pattern:$0x75316420]
    %1922 = vrot.lane.b32.xlu0 %v1918, 1
    %v1923 = vpop.permute.xlu0 %1922
    %1924 = vrot.lane.b32.xlu0 %v1919, 1
    %v1925 = vpop.permute.xlu0 %1924
    %v1926 = vsel %vm491, %v1923, %v1925
    %v1927 = vsel %vm491, %v1925, %v1923
    %v1928 = vsel %vm496, %v1927, 0.0
    %v1929 = vsel %vm497, %v1926, 0.0
    %v1930 = vld [vmem:[%s500] sm:$0xff]
    %v1931 = vld [vmem:[%s500 + $0x8] sm:$0xff]
    %v1932 = vld [vmem:[%s500 + $0x10] sm:$0xff]
    %v1933 = vld [vmem:[%s500 + $0x18] sm:$0xff]
    %v1934 = vld [vmem:[%s500 + $0x20] sm:$0xff]
    %v1935 = vld [vmem:[%s500 + $0x28] sm:$0xff]
    %v1936 = vld [vmem:[%s500 + $0x30] sm:$0xff]
    %v1937 = vld [vmem:[%s500 + $0x38] sm:$0xff]
    %v1939 = vsel %vm101, %v1930, 0
    %v1942 = vsel %vm101, %v1931, 0
    %v1945 = vsel %vm101, %v1932, 0
    %v1948 = vsel %vm101, %v1933, 0
    %v1951 = vsel %vm101, %v1934, 0
    %v1954 = vsel %vm101, %v1935, 0
    %v1957 = vsel %vm101, %v1936, 0
    %v1960 = vsel %vm101, %v1937, 0
    %v1963 = vsel %vm126, %v1928, 0
    %v1966 = vsel %vm126, %v1929, 0
    %1968 = vmatpush.msra.mxu0 0.0
    %1969 = vmatpush.msra.mxu0 0.0
    %1970 = vmatpush.msra.mxu0 0.0
    %1971 = vmatpush.msra.mxu0 0.0
    %1972 = vmatpush.msra.mxu0 0.0
    %1973 = vmatpush.msra.mxu0 0.0
    %1974 = vmatpush.msra.mxu0 0.0
    %1975 = vmatpush.msra.mxu0 0.0
    %1976 = vmatpush.msra.mxu0 0.0
    %1977 = vmatpush.msra.mxu0 0.0
    %1978 = vmatpush.msra.mxu0 0.0
    %1979 = vmatpush.msra.mxu0 0.0
    %1980 = vmatpush.msra.mxu0 0.0
    %1981 = vmatpush.msra.mxu0 0.0
    %1982 = vmatpush.msra.mxu0 0.0
    %1983 = vmatpush.msra.mxu0 %v1963
    %1984 = vmatmul.f32.gmra.mxu0 %v1939
    %v1985 = vpop.f32.mrf.mxu0
    %v1986 = vadd.f32 0.0, %v1985
    %1987 = vmatmul.f32.gmra.mxu0 %v1942
    %v1988 = vpop.f32.mrf.mxu0
    %v1989 = vadd.f32 0.0, %v1988
    %1990 = vmatmul.f32.gmra.mxu0 %v1945
    %v1991 = vpop.f32.mrf.mxu0
    %v1992 = vadd.f32 0.0, %v1991
    %1993 = vmatmul.f32.gmra.mxu0 %v1948
    %v1994 = vpop.f32.mrf.mxu0
    %v1995 = vadd.f32 0.0, %v1994
    %1996 = vmatmul.f32.gmra.mxu0 %v1951
    %v1997 = vpop.f32.mrf.mxu0
    %v1998 = vadd.f32 0.0, %v1997
    %1999 = vmatmul.f32.gmra.mxu0 %v1954
    %v2000 = vpop.f32.mrf.mxu0
    %v2001 = vadd.f32 0.0, %v2000
    %2002 = vmatmul.f32.gmra.mxu0 %v1957
    %v2003 = vpop.f32.mrf.mxu0
    %v2004 = vadd.f32 0.0, %v2003
    %2005 = vmatmul.f32.gmra.mxu0 %v1960
    %v2006 = vpop.f32.mrf.mxu0
    %v2007 = vadd.f32 0.0, %v2006
    %2008 = vdwg.mxu0
    %2009 = vmatpush.msra.mxu0 0.0
    %2010 = vmatpush.msra.mxu0 0.0
    %2011 = vmatpush.msra.mxu0 0.0
    %2012 = vmatpush.msra.mxu0 0.0
    %2013 = vmatpush.msra.mxu0 0.0
    %2014 = vmatpush.msra.mxu0 0.0
    %2015 = vmatpush.msra.mxu0 0.0
    %2016 = vmatpush.msra.mxu0 0.0
    %2017 = vmatpush.msra.mxu0 0.0
    %2018 = vmatpush.msra.mxu0 0.0
    %2019 = vmatpush.msra.mxu0 0.0
    %2020 = vmatpush.msra.mxu0 0.0
    %2021 = vmatpush.msra.mxu0 0.0
    %2022 = vmatpush.msra.mxu0 0.0
    %2023 = vmatpush.msra.mxu0 0.0
    %2024 = vmatpush.msra.mxu0 %v1966
    %2025 = vmatmul.f32.gmra.mxu0 %v1939
    %v2026 = vpop.f32.mrf.mxu0
    %v2027 = vadd.f32 0.0, %v2026
    %2028 = vmatmul.f32.gmra.mxu0 %v1942
    %v2029 = vpop.f32.mrf.mxu0
    %v2030 = vadd.f32 0.0, %v2029
    %2031 = vmatmul.f32.gmra.mxu0 %v1945
    %v2032 = vpop.f32.mrf.mxu0
    %v2033 = vadd.f32 0.0, %v2032
    %2034 = vmatmul.f32.gmra.mxu0 %v1948
    %v2035 = vpop.f32.mrf.mxu0
    %v2036 = vadd.f32 0.0, %v2035
    %2037 = vmatmul.f32.gmra.mxu0 %v1951
    %v2038 = vpop.f32.mrf.mxu0
    %v2039 = vadd.f32 0.0, %v2038
    %2040 = vmatmul.f32.gmra.mxu0 %v1954
    %v2041 = vpop.f32.mrf.mxu0
    %v2042 = vadd.f32 0.0, %v2041
    %2043 = vmatmul.f32.gmra.mxu0 %v1957
    %v2044 = vpop.f32.mrf.mxu0
    %v2045 = vadd.f32 0.0, %v2044
    %2046 = vmatmul.f32.gmra.mxu0 %v1960
    %v2047 = vpop.f32.mrf.mxu0
    %v2048 = vadd.f32 0.0, %v2047
    %2049 = vdwg.mxu0
    %v2050 = vadd.f32 %v1901, %v1986
    %v2051 = vadd.f32 %v1902, %v2027
    %v2052 = vadd.f32 %v1903, %v1989
    %v2053 = vadd.f32 %v1904, %v2030
    %v2054 = vadd.f32 %v1905, %v1992
    %v2055 = vadd.f32 %v1906, %v2033
    %v2056 = vadd.f32 %v1907, %v1995
    %v2057 = vadd.f32 %v1908, %v2036
    %v2058 = vadd.f32 %v1909, %v1998
    %v2059 = vadd.f32 %v1910, %v2039
    %v2060 = vadd.f32 %v1911, %v2001
    %v2061 = vadd.f32 %v1912, %v2042
    %v2062 = vadd.f32 %v1913, %v2004
    %v2063 = vadd.f32 %v1914, %v2045
    %v2064 = vadd.f32 %v1915, %v2007
    %v2065 = vadd.f32 %v1916, %v2048
    %v2066 = vld [vmem:[%s637] sm:$0xff]
    %v2067 = vld [vmem:[%s637 + $0x8] sm:$0xff]
    %v2068 = vld [vmem:[%s637 + $0x10] sm:$0xff]
    %v2069 = vld [vmem:[%s637 + $0x18] sm:$0xff]
    %v2070 = vld [vmem:[%s637 + $0x20] sm:$0xff]
    %v2071 = vld [vmem:[%s637 + $0x28] sm:$0xff]
    %v2072 = vld [vmem:[%s637 + $0x30] sm:$0xff]
    %v2073 = vld [vmem:[%s637 + $0x38] sm:$0xff]
    %2074 = vst [vmem:[#allocation1] ss:$2 sm:$0xff] %v1500
    %v2075 = vld.sshfl [vmem:[#allocation1] sm:$0xff pattern:$0x75316420]
    %v2076 = vld.sshfl [vmem:[#allocation1 + $0x8] sm:$0xff pattern:$0x75316420]
    %v2078 = vsel %vm101, %v2066, 0
    %v2081 = vsel %vm101, %v2067, 0
    %v2084 = vsel %vm101, %v2068, 0
    %v2087 = vsel %vm101, %v2069, 0
    %v2090 = vsel %vm101, %v2070, 0
    %v2093 = vsel %vm101, %v2071, 0
    %v2096 = vsel %vm101, %v2072, 0
    %v2099 = vsel %vm101, %v2073, 0
    %v2101 = vsel %vm126, %v2075, 0
    %v2103 = vsel %vm126, %v2076, 0
    %2105 = vmatpush.msra.mxu0 0.0
    %2106 = vmatpush.msra.mxu0 0.0
    %2107 = vmatpush.msra.mxu0 0.0
    %2108 = vmatpush.msra.mxu0 0.0
    %2109 = vmatpush.msra.mxu0 0.0
    %2110 = vmatpush.msra.mxu0 0.0
    %2111 = vmatpush.msra.mxu0 0.0
    %2112 = vmatpush.msra.mxu0 0.0
    %2113 = vmatpush.msra.mxu0 0.0
    %2114 = vmatpush.msra.mxu0 0.0
    %2115 = vmatpush.msra.mxu0 0.0
    %2116 = vmatpush.msra.mxu0 0.0
    %2117 = vmatpush.msra.mxu0 0.0
    %2118 = vmatpush.msra.mxu0 0.0
    %2119 = vmatpush.msra.mxu0 0.0
    %2120 = vmatpush.msra.mxu0 %v2101
    %2121 = vmatmul.f32.gmra.mxu0 %v2078
    %v2122 = vpop.f32.mrf.mxu0
    %v2123 = vadd.f32 0.0, %v2122
    %2124 = vmatmul.f32.gmra.mxu0 %v2081
    %v2125 = vpop.f32.mrf.mxu0
    %v2126 = vadd.f32 0.0, %v2125
    %2127 = vmatmul.f32.gmra.mxu0 %v2084
    %v2128 = vpop.f32.mrf.mxu0
    %v2129 = vadd.f32 0.0, %v2128
    %2130 = vmatmul.f32.gmra.mxu0 %v2087
    %v2131 = vpop.f32.mrf.mxu0
    %v2132 = vadd.f32 0.0, %v2131
    %2133 = vmatmul.f32.gmra.mxu0 %v2090
    %v2134 = vpop.f32.mrf.mxu0
    %v2135 = vadd.f32 0.0, %v2134
    %2136 = vmatmul.f32.gmra.mxu0 %v2093
    %v2137 = vpop.f32.mrf.mxu0
    %v2138 = vadd.f32 0.0, %v2137
    %2139 = vmatmul.f32.gmra.mxu0 %v2096
    %v2140 = vpop.f32.mrf.mxu0
    %v2141 = vadd.f32 0.0, %v2140
    %2142 = vmatmul.f32.gmra.mxu0 %v2099
    %v2143 = vpop.f32.mrf.mxu0
    %v2144 = vadd.f32 0.0, %v2143
    %2145 = vdwg.mxu0
    %2146 = vmatpush.msra.mxu0 0.0
    %2147 = vmatpush.msra.mxu0 0.0
    %2148 = vmatpush.msra.mxu0 0.0
    %2149 = vmatpush.msra.mxu0 0.0
    %2150 = vmatpush.msra.mxu0 0.0
    %2151 = vmatpush.msra.mxu0 0.0
    %2152 = vmatpush.msra.mxu0 0.0
    %2153 = vmatpush.msra.mxu0 0.0
    %2154 = vmatpush.msra.mxu0 0.0
    %2155 = vmatpush.msra.mxu0 0.0
    %2156 = vmatpush.msra.mxu0 0.0
    %2157 = vmatpush.msra.mxu0 0.0
    %2158 = vmatpush.msra.mxu0 0.0
    %2159 = vmatpush.msra.mxu0 0.0
    %2160 = vmatpush.msra.mxu0 0.0
    %2161 = vmatpush.msra.mxu0 %v2103
    %2162 = vmatmul.f32.gmra.mxu0 %v2078
    %v2163 = vpop.f32.mrf.mxu0
    %v2164 = vadd.f32 0.0, %v2163
    %2165 = vmatmul.f32.gmra.mxu0 %v2081
    %v2166 = vpop.f32.mrf.mxu0
    %v2167 = vadd.f32 0.0, %v2166
    %2168 = vmatmul.f32.gmra.mxu0 %v2084
    %v2169 = vpop.f32.mrf.mxu0
    %v2170 = vadd.f32 0.0, %v2169
    %2171 = vmatmul.f32.gmra.mxu0 %v2087
    %v2172 = vpop.f32.mrf.mxu0
    %v2173 = vadd.f32 0.0, %v2172
    %2174 = vmatmul.f32.gmra.mxu0 %v2090
    %v2175 = vpop.f32.mrf.mxu0
    %v2176 = vadd.f32 0.0, %v2175
    %2177 = vmatmul.f32.gmra.mxu0 %v2093
    %v2178 = vpop.f32.mrf.mxu0
    %v2179 = vadd.f32 0.0, %v2178
    %2180 = vmatmul.f32.gmra.mxu0 %v2096
    %v2181 = vpop.f32.mrf.mxu0
    %v2182 = vadd.f32 0.0, %v2181
    %2183 = vmatmul.f32.gmra.mxu0 %v2099
    %v2184 = vpop.f32.mrf.mxu0
    %v2185 = vadd.f32 0.0, %v2184
    %2186 = vdwg.mxu0
    %v2187 = vadd.f32 %v2050, %v2123
    %v2188 = vadd.f32 %v2051, %v2164
    %v2189 = vadd.f32 %v2052, %v2126
    %v2190 = vadd.f32 %v2053, %v2167
    %v2191 = vadd.f32 %v2054, %v2129
    %v2192 = vadd.f32 %v2055, %v2170
    %v2193 = vadd.f32 %v2056, %v2132
    %v2194 = vadd.f32 %v2057, %v2173
    %v2195 = vadd.f32 %v2058, %v2135
    %v2196 = vadd.f32 %v2059, %v2176
    %v2197 = vadd.f32 %v2060, %v2138
    %v2198 = vadd.f32 %v2061, %v2179
    %v2199 = vadd.f32 %v2062, %v2141
    %v2200 = vadd.f32 %v2063, %v2182
    %v2201 = vadd.f32 %v2064, %v2144
    %v2202 = vadd.f32 %v2065, %v2185
    %2203 = vst [vmem:[#allocation1] ss:$2 sm:$0xff] %v1500
    %v2204 = vld.sshfl [vmem:[#allocation1] sm:$0xff pattern:$0x75316420]
    %v2205 = vld.sshfl [vmem:[#allocation1 + $0x8] sm:$0xff pattern:$0x75316420]
    %2208 = vrot.lane.b32.xlu0 %v2204, 127
    %v2209 = vpop.permute.xlu0 %2208
    %2210 = vrot.lane.b32.xlu0 %v2205, 127
    %v2211 = vpop.permute.xlu0 %2210
    %v2212 = vsel %vm784, %v2209, %v2211
    %v2213 = vsel %vm784, %v2211, %v2209
    %v2214 = vsel %vm789, %v2212, 0.0
    %v2215 = vsel %vm790, %v2213, 0.0
    %v2216 = vld [vmem:[%s793] sm:$0xff]
    %v2217 = vld [vmem:[%s793 + $0x8] sm:$0xff]
    %v2218 = vld [vmem:[%s793 + $0x10] sm:$0xff]
    %v2219 = vld [vmem:[%s793 + $0x18] sm:$0xff]
    %v2220 = vld [vmem:[%s793 + $0x20] sm:$0xff]
    %v2221 = vld [vmem:[%s793 + $0x28] sm:$0xff]
    %v2222 = vld [vmem:[%s793 + $0x30] sm:$0xff]
    %v2223 = vld [vmem:[%s793 + $0x38] sm:$0xff]
    %v2225 = vsel %vm101, %v2216, 0
    %v2228 = vsel %vm101, %v2217, 0
    %v2231 = vsel %vm101, %v2218, 0
    %v2234 = vsel %vm101, %v2219, 0
    %v2237 = vsel %vm101, %v2220, 0
    %v2240 = vsel %vm101, %v2221, 0
    %v2243 = vsel %vm101, %v2222, 0
    %v2246 = vsel %vm101, %v2223, 0
    %v2249 = vsel %vm126, %v2214, 0
    %v2252 = vsel %vm126, %v2215, 0
    %2254 = vmatpush.msra.mxu0 0.0
    %2255 = vmatpush.msra.mxu0 0.0
    %2256 = vmatpush.msra.mxu0 0.0
    %2257 = vmatpush.msra.mxu0 0.0
    %2258 = vmatpush.msra.mxu0 0.0
    %2259 = vmatpush.msra.mxu0 0.0
    %2260 = vmatpush.msra.mxu0 0.0
    %2261 = vmatpush.msra.mxu0 0.0
    %2262 = vmatpush.msra.mxu0 0.0
    %2263 = vmatpush.msra.mxu0 0.0
    %2264 = vmatpush.msra.mxu0 0.0
    %2265 = vmatpush.msra.mxu0 0.0
    %2266 = vmatpush.msra.mxu0 0.0
    %2267 = vmatpush.msra.mxu0 0.0
    %2268 = vmatpush.msra.mxu0 0.0
    %2269 = vmatpush.msra.mxu0 %v2249
    %2270 = vmatmul.f32.gmra.mxu0 %v2225
    %v2271 = vpop.f32.mrf.mxu0
    %v2272 = vadd.f32 0.0, %v2271
    %2273 = vmatmul.f32.gmra.mxu0 %v2228
    %v2274 = vpop.f32.mrf.mxu0
    %v2275 = vadd.f32 0.0, %v2274
    %2276 = vmatmul.f32.gmra.mxu0 %v2231
    %v2277 = vpop.f32.mrf.mxu0
    %v2278 = vadd.f32 0.0, %v2277
    %2279 = vmatmul.f32.gmra.mxu0 %v2234
    %v2280 = vpop.f32.mrf.mxu0
    %v2281 = vadd.f32 0.0, %v2280
    %2282 = vmatmul.f32.gmra.mxu0 %v2237
    %v2283 = vpop.f32.mrf.mxu0
    %v2284 = vadd.f32 0.0, %v2283
    %2285 = vmatmul.f32.gmra.mxu0 %v2240
    %v2286 = vpop.f32.mrf.mxu0
    %v2287 = vadd.f32 0.0, %v2286
    %2288 = vmatmul.f32.gmra.mxu0 %v2243
    %v2289 = vpop.f32.mrf.mxu0
    %v2290 = vadd.f32 0.0, %v2289
    %2291 = vmatmul.f32.gmra.mxu0 %v2246
    %v2292 = vpop.f32.mrf.mxu0
    %v2293 = vadd.f32 0.0, %v2292
    %2294 = vdwg.mxu0
    %2295 = vmatpush.msra.mxu0 0.0
    %2296 = vmatpush.msra.mxu0 0.0
    %2297 = vmatpush.msra.mxu0 0.0
    %2298 = vmatpush.msra.mxu0 0.0
    %2299 = vmatpush.msra.mxu0 0.0
    %2300 = vmatpush.msra.mxu0 0.0
    %2301 = vmatpush.msra.mxu0 0.0
    %2302 = vmatpush.msra.mxu0 0.0
    %2303 = vmatpush.msra.mxu0 0.0
    %2304 = vmatpush.msra.mxu0 0.0
    %2305 = vmatpush.msra.mxu0 0.0
    %2306 = vmatpush.msra.mxu0 0.0
    %2307 = vmatpush.msra.mxu0 0.0
    %2308 = vmatpush.msra.mxu0 0.0
    %2309 = vmatpush.msra.mxu0 0.0
    %2310 = vmatpush.msra.mxu0 %v2252
    %2311 = vmatmul.f32.gmra.mxu0 %v2225
    %v2312 = vpop.f32.mrf.mxu0
    %v2313 = vadd.f32 0.0, %v2312
    %2314 = vmatmul.f32.gmra.mxu0 %v2228
    %v2315 = vpop.f32.mrf.mxu0
    %v2316 = vadd.f32 0.0, %v2315
    %2317 = vmatmul.f32.gmra.mxu0 %v2231
    %v2318 = vpop.f32.mrf.mxu0
    %v2319 = vadd.f32 0.0, %v2318
    %2320 = vmatmul.f32.gmra.mxu0 %v2234
    %v2321 = vpop.f32.mrf.mxu0
    %v2322 = vadd.f32 0.0, %v2321
    %2323 = vmatmul.f32.gmra.mxu0 %v2237
    %v2324 = vpop.f32.mrf.mxu0
    %v2325 = vadd.f32 0.0, %v2324
    %2326 = vmatmul.f32.gmra.mxu0 %v2240
    %v2327 = vpop.f32.mrf.mxu0
    %v2328 = vadd.f32 0.0, %v2327
    %2329 = vmatmul.f32.gmra.mxu0 %v2243
    %v2330 = vpop.f32.mrf.mxu0
    %v2331 = vadd.f32 0.0, %v2330
    %2332 = vmatmul.f32.gmra.mxu0 %v2246
    %v2333 = vpop.f32.mrf.mxu0
    %v2334 = vadd.f32 0.0, %v2333
    %2335 = vdwg.mxu0
    %v2336 = vadd.f32 %v2187, %v2272
    %v2337 = vadd.f32 %v2188, %v2313
    %v2338 = vadd.f32 %v2189, %v2275
    %v2339 = vadd.f32 %v2190, %v2316
    %v2340 = vadd.f32 %v2191, %v2278
    %v2341 = vadd.f32 %v2192, %v2319
    %v2342 = vadd.f32 %v2193, %v2281
    %v2343 = vadd.f32 %v2194, %v2322
    %v2344 = vadd.f32 %v2195, %v2284
    %v2345 = vadd.f32 %v2196, %v2325
    %v2346 = vadd.f32 %v2197, %v2287
    %v2347 = vadd.f32 %v2198, %v2328
    %v2348 = vadd.f32 %v2199, %v2290
    %v2349 = vadd.f32 %v2200, %v2331
    %v2350 = vadd.f32 %v2201, %v2293
    %v2351 = vadd.f32 %v2202, %v2334
    %2352 = vst [vmem:[#allocation1] ss:$2 sm:$0xff] %v1500
    %v2353 = vld.sshfl [vmem:[#allocation1] sm:$0xff pattern:$0x75316420]
    %v2354 = vld.sshfl [vmem:[#allocation1 + $0x8] sm:$0xff pattern:$0x75316420]
    %2357 = vrot.lane.b32.xlu0 %v2353, 113
    %v2358 = vpop.permute.xlu0 %2357
    %2359 = vrot.lane.b32.xlu0 %v2354, 113
    %v2360 = vpop.permute.xlu0 %2359
    %v2361 = vsel %vm939, %v2358, %v2360
    %v2362 = vsel %vm939, %v2360, %v2358
    %v2363 = vsel %vm944, %v2361, 0.0
    %v2364 = vsel %vm945, %v2362, 0.0
    %v2365 = vld [vmem:[%s948] sm:$0xff]
    %v2366 = vld [vmem:[%s948 + $0x8] sm:$0xff]
    %v2367 = vld [vmem:[%s948 + $0x10] sm:$0xff]
    %v2368 = vld [vmem:[%s948 + $0x18] sm:$0xff]
    %v2369 = vld [vmem:[%s948 + $0x20] sm:$0xff]
    %v2370 = vld [vmem:[%s948 + $0x28] sm:$0xff]
    %v2371 = vld [vmem:[%s948 + $0x30] sm:$0xff]
    %v2372 = vld [vmem:[%s948 + $0x38] sm:$0xff]
    %v2374 = vsel %vm101, %v2365, 0
    %v2377 = vsel %vm101, %v2366, 0
    %v2380 = vsel %vm101, %v2367, 0
    %v2383 = vsel %vm101, %v2368, 0
    %v2386 = vsel %vm101, %v2369, 0
    %v2389 = vsel %vm101, %v2370, 0
    %v2392 = vsel %vm101, %v2371, 0
    %v2395 = vsel %vm101, %v2372, 0
    %v2398 = vsel %vm126, %v2363, 0
    %v2401 = vsel %vm126, %v2364, 0
    %2403 = vmatpush.msra.mxu0 0.0
    %2404 = vmatpush.msra.mxu0 0.0
    %2405 = vmatpush.msra.mxu0 0.0
    %2406 = vmatpush.msra.mxu0 0.0
    %2407 = vmatpush.msra.mxu0 0.0
    %2408 = vmatpush.msra.mxu0 0.0
    %2409 = vmatpush.msra.mxu0 0.0
    %2410 = vmatpush.msra.mxu0 0.0
    %2411 = vmatpush.msra.mxu0 0.0
    %2412 = vmatpush.msra.mxu0 0.0
    %2413 = vmatpush.msra.mxu0 0.0
    %2414 = vmatpush.msra.mxu0 0.0
    %2415 = vmatpush.msra.mxu0 0.0
    %2416 = vmatpush.msra.mxu0 0.0
    %2417 = vmatpush.msra.mxu0 0.0
    %2418 = vmatpush.msra.mxu0 %v2398
    %2419 = vmatmul.f32.gmra.mxu0 %v2374
    %v2420 = vpop.f32.mrf.mxu0
    %v2421 = vadd.f32 0.0, %v2420
    %2422 = vmatmul.f32.gmra.mxu0 %v2377
    %v2423 = vpop.f32.mrf.mxu0
    %v2424 = vadd.f32 0.0, %v2423
    %2425 = vmatmul.f32.gmra.mxu0 %v2380
    %v2426 = vpop.f32.mrf.mxu0
    %v2427 = vadd.f32 0.0, %v2426
    %2428 = vmatmul.f32.gmra.mxu0 %v2383
    %v2429 = vpop.f32.mrf.mxu0
    %v2430 = vadd.f32 0.0, %v2429
    %2431 = vmatmul.f32.gmra.mxu0 %v2386
    %v2432 = vpop.f32.mrf.mxu0
    %v2433 = vadd.f32 0.0, %v2432
    %2434 = vmatmul.f32.gmra.mxu0 %v2389
    %v2435 = vpop.f32.mrf.mxu0
    %v2436 = vadd.f32 0.0, %v2435
    %2437 = vmatmul.f32.gmra.mxu0 %v2392
    %v2438 = vpop.f32.mrf.mxu0
    %v2439 = vadd.f32 0.0, %v2438
    %2440 = vmatmul.f32.gmra.mxu0 %v2395
    %v2441 = vpop.f32.mrf.mxu0
    %v2442 = vadd.f32 0.0, %v2441
    %2443 = vdwg.mxu0
    %2444 = vmatpush.msra.mxu0 0.0
    %2445 = vmatpush.msra.mxu0 0.0
    %2446 = vmatpush.msra.mxu0 0.0
    %2447 = vmatpush.msra.mxu0 0.0
    %2448 = vmatpush.msra.mxu0 0.0
    %2449 = vmatpush.msra.mxu0 0.0
    %2450 = vmatpush.msra.mxu0 0.0
    %2451 = vmatpush.msra.mxu0 0.0
    %2452 = vmatpush.msra.mxu0 0.0
    %2453 = vmatpush.msra.mxu0 0.0
    %2454 = vmatpush.msra.mxu0 0.0
    %2455 = vmatpush.msra.mxu0 0.0
    %2456 = vmatpush.msra.mxu0 0.0
    %2457 = vmatpush.msra.mxu0 0.0
    %2458 = vmatpush.msra.mxu0 0.0
    %2459 = vmatpush.msra.mxu0 %v2401
    %2460 = vmatmul.f32.gmra.mxu0 %v2374
    %v2461 = vpop.f32.mrf.mxu0
    %v2462 = vadd.f32 0.0, %v2461
    %2463 = vmatmul.f32.gmra.mxu0 %v2377
    %v2464 = vpop.f32.mrf.mxu0
    %v2465 = vadd.f32 0.0, %v2464
    %2466 = vmatmul.f32.gmra.mxu0 %v2380
    %v2467 = vpop.f32.mrf.mxu0
    %v2468 = vadd.f32 0.0, %v2467
    %2469 = vmatmul.f32.gmra.mxu0 %v2383
    %v2470 = vpop.f32.mrf.mxu0
    %v2471 = vadd.f32 0.0, %v2470
    %2472 = vmatmul.f32.gmra.mxu0 %v2386
    %v2473 = vpop.f32.mrf.mxu0
    %v2474 = vadd.f32 0.0, %v2473
    %2475 = vmatmul.f32.gmra.mxu0 %v2389
    %v2476 = vpop.f32.mrf.mxu0
    %v2477 = vadd.f32 0.0, %v2476
    %2478 = vmatmul.f32.gmra.mxu0 %v2392
    %v2479 = vpop.f32.mrf.mxu0
    %v2480 = vadd.f32 0.0, %v2479
    %2481 = vmatmul.f32.gmra.mxu0 %v2395
    %v2482 = vpop.f32.mrf.mxu0
    %v2483 = vadd.f32 0.0, %v2482
    %2484 = vdwg.mxu0
    %v2485 = vadd.f32 %v2336, %v2421
    %v2486 = vadd.f32 %v2337, %v2462
    %v2487 = vadd.f32 %v2338, %v2424
    %v2488 = vadd.f32 %v2339, %v2465
    %v2489 = vadd.f32 %v2340, %v2427
    %v2490 = vadd.f32 %v2341, %v2468
    %v2491 = vadd.f32 %v2342, %v2430
    %v2492 = vadd.f32 %v2343, %v2471
    %v2493 = vadd.f32 %v2344, %v2433
    %v2494 = vadd.f32 %v2345, %v2474
    %v2495 = vadd.f32 %v2346, %v2436
    %v2496 = vadd.f32 %v2347, %v2477
    %v2497 = vadd.f32 %v2348, %v2439
    %v2498 = vadd.f32 %v2349, %v2480
    %v2499 = vadd.f32 %v2350, %v2442
    %v2500 = vadd.f32 %v2351, %v2483
    %2501 = vst [vmem:[#allocation1] ss:$2 sm:$0xff] %v1500
    %v2502 = vld.sshfl [vmem:[#allocation1] sm:$0xff pattern:$0x75316420]
    %v2503 = vld.sshfl [vmem:[#allocation1 + $0x8] sm:$0xff pattern:$0x75316420]
    %2506 = vrot.lane.b32.xlu0 %v2502, 112
    %v2507 = vpop.permute.xlu0 %2506
    %2508 = vrot.lane.b32.xlu0 %v2503, 112
    %v2509 = vpop.permute.xlu0 %2508
    %v2510 = vsel %vm1094, %v2507, %v2509
    %v2511 = vsel %vm1094, %v2509, %v2507
    %v2512 = vsel %vm1099, %v2510, 0.0
    %v2513 = vsel %vm1100, %v2511, 0.0
    %v2514 = vld [vmem:[%s1103] sm:$0xff]
    %v2515 = vld [vmem:[%s1103 + $0x8] sm:$0xff]
    %v2516 = vld [vmem:[%s1103 + $0x10] sm:$0xff]
    %v2517 = vld [vmem:[%s1103 + $0x18] sm:$0xff]
    %v2518 = vld [vmem:[%s1103 + $0x20] sm:$0xff]
    %v2519 = vld [vmem:[%s1103 + $0x28] sm:$0xff]
    %v2520 = vld [vmem:[%s1103 + $0x30] sm:$0xff]
    %v2521 = vld [vmem:[%s1103 + $0x38] sm:$0xff]
    %v2523 = vsel %vm101, %v2514, 0
    %v2526 = vsel %vm101, %v2515, 0
    %v2529 = vsel %vm101, %v2516, 0
    %v2532 = vsel %vm101, %v2517, 0
    %v2535 = vsel %vm101, %v2518, 0
    %v2538 = vsel %vm101, %v2519, 0
    %v2541 = vsel %vm101, %v2520, 0
    %v2544 = vsel %vm101, %v2521, 0
    %v2547 = vsel %vm126, %v2512, 0
    %v2550 = vsel %vm126, %v2513, 0
    %2552 = vmatpush.msra.mxu0 0.0
    %2553 = vmatpush.msra.mxu0 0.0
    %2554 = vmatpush.msra.mxu0 0.0
    %2555 = vmatpush.msra.mxu0 0.0
    %2556 = vmatpush.msra.mxu0 0.0
    %2557 = vmatpush.msra.mxu0 0.0
    %2558 = vmatpush.msra.mxu0 0.0
    %2559 = vmatpush.msra.mxu0 0.0
    %2560 = vmatpush.msra.mxu0 0.0
    %2561 = vmatpush.msra.mxu0 0.0
    %2562 = vmatpush.msra.mxu0 0.0
    %2563 = vmatpush.msra.mxu0 0.0
    %2564 = vmatpush.msra.mxu0 0.0
    %2565 = vmatpush.msra.mxu0 0.0
    %2566 = vmatpush.msra.mxu0 0.0
    %2567 = vmatpush.msra.mxu0 %v2547
    %2568 = vmatmul.f32.gmra.mxu0 %v2523
    %v2569 = vpop.f32.mrf.mxu0
    %v2570 = vadd.f32 0.0, %v2569
    %2571 = vmatmul.f32.gmra.mxu0 %v2526
    %v2572 = vpop.f32.mrf.mxu0
    %v2573 = vadd.f32 0.0, %v2572
    %2574 = vmatmul.f32.gmra.mxu0 %v2529
    %v2575 = vpop.f32.mrf.mxu0
    %v2576 = vadd.f32 0.0, %v2575
    %2577 = vmatmul.f32.gmra.mxu0 %v2532
    %v2578 = vpop.f32.mrf.mxu0
    %v2579 = vadd.f32 0.0, %v2578
    %2580 = vmatmul.f32.gmra.mxu0 %v2535
    %v2581 = vpop.f32.mrf.mxu0
    %v2582 = vadd.f32 0.0, %v2581
    %2583 = vmatmul.f32.gmra.mxu0 %v2538
    %v2584 = vpop.f32.mrf.mxu0
    %v2585 = vadd.f32 0.0, %v2584
    %2586 = vmatmul.f32.gmra.mxu0 %v2541
    %v2587 = vpop.f32.mrf.mxu0
    %v2588 = vadd.f32 0.0, %v2587
    %2589 = vmatmul.f32.gmra.mxu0 %v2544
    %v2590 = vpop.f32.mrf.mxu0
    %v2591 = vadd.f32 0.0, %v2590
    %2592 = vdwg.mxu0
    %2593 = vmatpush.msra.mxu0 0.0
    %2594 = vmatpush.msra.mxu0 0.0
    %2595 = vmatpush.msra.mxu0 0.0
    %2596 = vmatpush.msra.mxu0 0.0
    %2597 = vmatpush.msra.mxu0 0.0
    %2598 = vmatpush.msra.mxu0 0.0
    %2599 = vmatpush.msra.mxu0 0.0
    %2600 = vmatpush.msra.mxu0 0.0
    %2601 = vmatpush.msra.mxu0 0.0
    %2602 = vmatpush.msra.mxu0 0.0
    %2603 = vmatpush.msra.mxu0 0.0
    %2604 = vmatpush.msra.mxu0 0.0
    %2605 = vmatpush.msra.mxu0 0.0
    %2606 = vmatpush.msra.mxu0 0.0
    %2607 = vmatpush.msra.mxu0 0.0
    %2608 = vmatpush.msra.mxu0 %v2550
    %2609 = vmatmul.f32.gmra.mxu0 %v2523
    %v2610 = vpop.f32.mrf.mxu0
    %v2611 = vadd.f32 0.0, %v2610
    %2612 = vmatmul.f32.gmra.mxu0 %v2526
    %v2613 = vpop.f32.mrf.mxu0
    %v2614 = vadd.f32 0.0, %v2613
    %2615 = vmatmul.f32.gmra.mxu0 %v2529
    %v2616 = vpop.f32.mrf.mxu0
    %v2617 = vadd.f32 0.0, %v2616
    %2618 = vmatmul.f32.gmra.mxu0 %v2532
    %v2619 = vpop.f32.mrf.mxu0
    %v2620 = vadd.f32 0.0, %v2619
    %2621 = vmatmul.f32.gmra.mxu0 %v2535
    %v2622 = vpop.f32.mrf.mxu0
    %v2623 = vadd.f32 0.0, %v2622
    %2624 = vmatmul.f32.gmra.mxu0 %v2538
    %v2625 = vpop.f32.mrf.mxu0
    %v2626 = vadd.f32 0.0, %v2625
    %2627 = vmatmul.f32.gmra.mxu0 %v2541
    %v2628 = vpop.f32.mrf.mxu0
    %v2629 = vadd.f32 0.0, %v2628
    %2630 = vmatmul.f32.gmra.mxu0 %v2544
    %v2631 = vpop.f32.mrf.mxu0
    %v2632 = vadd.f32 0.0, %v2631
    %2633 = vdwg.mxu0
    %v2634 = vadd.f32 %v2485, %v2570
    %v2635 = vadd.f32 %v2486, %v2611
    %v2636 = vadd.f32 %v2487, %v2573
    %v2637 = vadd.f32 %v2488, %v2614
    %v2638 = vadd.f32 %v2489, %v2576
    %v2639 = vadd.f32 %v2490, %v2617
    %v2640 = vadd.f32 %v2491, %v2579
    %v2641 = vadd.f32 %v2492, %v2620
    %v2642 = vadd.f32 %v2493, %v2582
    %v2643 = vadd.f32 %v2494, %v2623
    %v2644 = vadd.f32 %v2495, %v2585
    %v2645 = vadd.f32 %v2496, %v2626
    %v2646 = vadd.f32 %v2497, %v2588
    %v2647 = vadd.f32 %v2498, %v2629
    %v2648 = vadd.f32 %v2499, %v2591
    %v2649 = vadd.f32 %v2500, %v2632
    %2650 = vst [vmem:[#allocation1] ss:$2 sm:$0xff] %v1500
    %v2651 = vld.sshfl [vmem:[#allocation1] sm:$0xff pattern:$0x75316420]
    %v2652 = vld.sshfl [vmem:[#allocation1 + $0x8] sm:$0xff pattern:$0x75316420]
    %2655 = vrot.lane.b32.xlu0 %v2651, 111
    %v2656 = vpop.permute.xlu0 %2655
    %2657 = vrot.lane.b32.xlu0 %v2652, 111
    %v2658 = vpop.permute.xlu0 %2657
    %v2659 = vsel %vm1249, %v2656, %v2658
    %v2660 = vsel %vm1249, %v2658, %v2656
    %v2661 = vsel %vm1254, %v2659, 0.0
    %v2662 = vsel %vm1255, %v2660, 0.0
    %v2663 = vld [vmem:[%s1258] sm:$0xff]
    %v2664 = vld [vmem:[%s1258 + $0x8] sm:$0xff]
    %v2665 = vld [vmem:[%s1258 + $0x10] sm:$0xff]
    %v2666 = vld [vmem:[%s1258 + $0x18] sm:$0xff]
    %v2667 = vld [vmem:[%s1258 + $0x20] sm:$0xff]
    %v2668 = vld [vmem:[%s1258 + $0x28] sm:$0xff]
    %v2669 = vld [vmem:[%s1258 + $0x30] sm:$0xff]
    %v2670 = vld [vmem:[%s1258 + $0x38] sm:$0xff]
    %v2672 = vsel %vm101, %v2663, 0
    %v2675 = vsel %vm101, %v2664, 0
    %v2678 = vsel %vm101, %v2665, 0
    %v2681 = vsel %vm101, %v2666, 0
    %v2684 = vsel %vm101, %v2667, 0
    %v2687 = vsel %vm101, %v2668, 0
    %v2690 = vsel %vm101, %v2669, 0
    %v2693 = vsel %vm101, %v2670, 0
    %v2696 = vsel %vm126, %v2661, 0
    %v2699 = vsel %vm126, %v2662, 0
    %2701 = vmatpush.msra.mxu0 0.0
    %2702 = vmatpush.msra.mxu0 0.0
    %2703 = vmatpush.msra.mxu0 0.0
    %2704 = vmatpush.msra.mxu0 0.0
    %2705 = vmatpush.msra.mxu0 0.0
    %2706 = vmatpush.msra.mxu0 0.0
    %2707 = vmatpush.msra.mxu0 0.0
    %2708 = vmatpush.msra.mxu0 0.0
    %2709 = vmatpush.msra.mxu0 0.0
    %2710 = vmatpush.msra.mxu0 0.0
    %2711 = vmatpush.msra.mxu0 0.0
    %2712 = vmatpush.msra.mxu0 0.0
    %2713 = vmatpush.msra.mxu0 0.0
    %2714 = vmatpush.msra.mxu0 0.0
    %2715 = vmatpush.msra.mxu0 0.0
    %2716 = vmatpush.msra.mxu0 %v2696
    %2717 = vmatmul.f32.gmra.mxu0 %v2672
    %v2718 = vpop.f32.mrf.mxu0
    %v2719 = vadd.f32 0.0, %v2718
    %2720 = vmatmul.f32.gmra.mxu0 %v2675
    %v2721 = vpop.f32.mrf.mxu0
    %v2722 = vadd.f32 0.0, %v2721
    %2723 = vmatmul.f32.gmra.mxu0 %v2678
    %v2724 = vpop.f32.mrf.mxu0
    %v2725 = vadd.f32 0.0, %v2724
    %2726 = vmatmul.f32.gmra.mxu0 %v2681
    %v2727 = vpop.f32.mrf.mxu0
    %v2728 = vadd.f32 0.0, %v2727
    %2729 = vmatmul.f32.gmra.mxu0 %v2684
    %v2730 = vpop.f32.mrf.mxu0
    %v2731 = vadd.f32 0.0, %v2730
    %2732 = vmatmul.f32.gmra.mxu0 %v2687
    %v2733 = vpop.f32.mrf.mxu0
    %v2734 = vadd.f32 0.0, %v2733
    %2735 = vmatmul.f32.gmra.mxu0 %v2690
    %v2736 = vpop.f32.mrf.mxu0
    %v2737 = vadd.f32 0.0, %v2736
    %2738 = vmatmul.f32.gmra.mxu0 %v2693
    %v2739 = vpop.f32.mrf.mxu0
    %v2740 = vadd.f32 0.0, %v2739
    %2741 = vdwg.mxu0
    %2742 = vmatpush.msra.mxu0 0.0
    %2743 = vmatpush.msra.mxu0 0.0
    %2744 = vmatpush.msra.mxu0 0.0
    %2745 = vmatpush.msra.mxu0 0.0
    %2746 = vmatpush.msra.mxu0 0.0
    %2747 = vmatpush.msra.mxu0 0.0
    %2748 = vmatpush.msra.mxu0 0.0
    %2749 = vmatpush.msra.mxu0 0.0
    %2750 = vmatpush.msra.mxu0 0.0
    %2751 = vmatpush.msra.mxu0 0.0
    %2752 = vmatpush.msra.mxu0 0.0
    %2753 = vmatpush.msra.mxu0 0.0
    %2754 = vmatpush.msra.mxu0 0.0
    %2755 = vmatpush.msra.mxu0 0.0
    %2756 = vmatpush.msra.mxu0 0.0
    %2757 = vmatpush.msra.mxu0 %v2699
    %2758 = vmatmul.f32.gmra.mxu0 %v2672
    %v2759 = vpop.f32.mrf.mxu0
    %v2760 = vadd.f32 0.0, %v2759
    %2761 = vmatmul.f32.gmra.mxu0 %v2675
    %v2762 = vpop.f32.mrf.mxu0
    %v2763 = vadd.f32 0.0, %v2762
    %2764 = vmatmul.f32.gmra.mxu0 %v2678
    %v2765 = vpop.f32.mrf.mxu0
    %v2766 = vadd.f32 0.0, %v2765
    %2767 = vmatmul.f32.gmra.mxu0 %v2681
    %v2768 = vpop.f32.mrf.mxu0
    %v2769 = vadd.f32 0.0, %v2768
    %2770 = vmatmul.f32.gmra.mxu0 %v2684
    %v2771 = vpop.f32.mrf.mxu0
    %v2772 = vadd.f32 0.0, %v2771
    %2773 = vmatmul.f32.gmra.mxu0 %v2687
    %v2774 = vpop.f32.mrf.mxu0
    %v2775 = vadd.f32 0.0, %v2774
    %2776 = vmatmul.f32.gmra.mxu0 %v2690
    %v2777 = vpop.f32.mrf.mxu0
    %v2778 = vadd.f32 0.0, %v2777
    %2779 = vmatmul.f32.gmra.mxu0 %v2693
    %v2780 = vpop.f32.mrf.mxu0
    %v2781 = vadd.f32 0.0, %v2780
    %2782 = vdwg.mxu0
    %v2783 = vadd.f32 %v2634, %v2719
    %v2784 = vadd.f32 %v2635, %v2760
    %v2785 = vadd.f32 %v2636, %v2722
    %v2786 = vadd.f32 %v2637, %v2763
    %v2787 = vadd.f32 %v2638, %v2725
    %v2788 = vadd.f32 %v2639, %v2766
    %v2789 = vadd.f32 %v2640, %v2728
    %v2790 = vadd.f32 %v2641, %v2769
    %v2791 = vadd.f32 %v2642, %v2731
    %v2792 = vadd.f32 %v2643, %v2772
    %v2793 = vadd.f32 %v2644, %v2734
    %v2794 = vadd.f32 %v2645, %v2775
    %v2795 = vadd.f32 %v2646, %v2737
    %v2796 = vadd.f32 %v2647, %v2778
    %v2797 = vadd.f32 %v2648, %v2740
    %v2798 = vadd.f32 %v2649, %v2781
    %v2799 = vadd.f32 %v2783, %v1398
    %v2800 = vadd.f32 %v2784, %v1398
    %v2801 = vadd.f32 %v2785, %v1403
    %v2802 = vadd.f32 %v2786, %v1403
    %v2803 = vadd.f32 %v2787, %v1408
    %v2804 = vadd.f32 %v2788, %v1408
    %v2805 = vadd.f32 %v2789, %v1413
    %v2806 = vadd.f32 %v2790, %v1413
    %v2807 = vadd.f32 %v2791, %v1418
    %v2808 = vadd.f32 %v2792, %v1418
    %v2809 = vadd.f32 %v2793, %v1423
    %v2810 = vadd.f32 %v2794, %v1423
    %v2811 = vadd.f32 %v2795, %v1428
    %v2812 = vadd.f32 %v2796, %v1428
    %v2813 = vadd.f32 %v2797, %v1433
    %v2814 = vadd.f32 %v2798, %v1433
    %v2815 = vmul.f32 %v2799, 0.01
    %v2816 = vmul.f32 %v2800, 0.01
    %v2817 = vmul.f32 %v2801, 0.01
    %v2818 = vmul.f32 %v2802, 0.01
    %v2819 = vmul.f32 %v2803, 0.01
    %v2820 = vmul.f32 %v2804, 0.01
    %v2821 = vmul.f32 %v2805, 0.01
    %v2822 = vmul.f32 %v2806, 0.01
    %v2823 = vmul.f32 %v2807, 0.01
    %v2824 = vmul.f32 %v2808, 0.01
    %v2825 = vmul.f32 %v2809, 0.01
    %v2826 = vmul.f32 %v2810, 0.01
    %v2827 = vmul.f32 %v2811, 0.01
    %v2828 = vmul.f32 %v2812, 0.01
    %v2829 = vmul.f32 %v2813, 0.01
    %v2830 = vmul.f32 %v2814, 0.01
    %v2831 = vmax.f32 %v2799, %v2815
    %v2832 = vmax.f32 %v2800, %v2816
    %v2833 = vmax.f32 %v2801, %v2817
    %v2834 = vmax.f32 %v2802, %v2818
    %v2835 = vmax.f32 %v2803, %v2819
    %v2836 = vmax.f32 %v2804, %v2820
    %v2837 = vmax.f32 %v2805, %v2821
    %v2838 = vmax.f32 %v2806, %v2822
    %v2839 = vmax.f32 %v2807, %v2823
    %v2840 = vmax.f32 %v2808, %v2824
    %v2841 = vmax.f32 %v2809, %v2825
    %v2842 = vmax.f32 %v2810, %v2826
    %v2843 = vmax.f32 %v2811, %v2827
    %v2844 = vmax.f32 %v2812, %v2828
    %v2845 = vmax.f32 %v2813, %v2829
    %v2846 = vmax.f32 %v2814, %v2830
    %s2847 = scalar_lea.vmem [#allocation2], 128
    %2848 = vst [vmem:[%s2847] sm:$0xff] %v2831
    %2849 = vst [vmem:[%s2847 + $0x8] sm:$0xff] %v2832
    %2850 = vst [vmem:[%s2847 + $0x10] sm:$0xff] %v2833
    %2851 = vst [vmem:[%s2847 + $0x18] sm:$0xff] %v2834
    %2852 = vst [vmem:[%s2847 + $0x20] sm:$0xff] %v2835
    %2853 = vst [vmem:[%s2847 + $0x28] sm:$0xff] %v2836
    %2854 = vst [vmem:[%s2847 + $0x30] sm:$0xff] %v2837
    %2855 = vst [vmem:[%s2847 + $0x38] sm:$0xff] %v2838
    %2856 = vst [vmem:[%s2847 + $0x40] sm:$0xff] %v2839
    %2857 = vst [vmem:[%s2847 + $0x48] sm:$0xff] %v2840
    %2858 = vst [vmem:[%s2847 + $0x50] sm:$0xff] %v2841
    %2859 = vst [vmem:[%s2847 + $0x58] sm:$0xff] %v2842
    %2860 = vst [vmem:[%s2847 + $0x60] sm:$0xff] %v2843
    %2861 = vst [vmem:[%s2847 + $0x68] sm:$0xff] %v2844
    %2862 = vst [vmem:[%s2847 + $0x70] sm:$0xff] %v2845
    %2863 = vst [vmem:[%s2847 + $0x78] sm:$0xff] %v2846
    %s2864 = scalar_lea.vmem %s0, 16
    %v2865 = vld [vmem:[%s2864] sm:$0x77]
    %2867 = vst [vmem:[#allocation1] ss:$2 sm:$0xff] %v2865
    %v2868 = vld.sshfl [vmem:[#allocation1] sm:$0xff pattern:$0x75316420]
    %v2869 = vld.sshfl [vmem:[#allocation1 + $0x8] sm:$0xff pattern:$0x75316420]
    %2872 = vrot.lane.b32.xlu0 %v2868, 17
    %v2873 = vpop.permute.xlu0 %2872
    %2874 = vrot.lane.b32.xlu0 %v2869, 17
    %v2875 = vpop.permute.xlu0 %2874
    %v2876 = vsel %vm57, %v2873, %v2875
    %v2877 = vsel %vm57, %v2875, %v2873
    %v2878 = vsel %vm62, %v2877, 0.0
    %v2879 = vsel %vm63, %v2876, 0.0
    %v2880 = vld [vmem:[%s1] sm:$0xff]
    %v2881 = vld [vmem:[%s1 + $0x8] sm:$0xff]
    %v2882 = vld [vmem:[%s1 + $0x10] sm:$0xff]
    %v2883 = vld [vmem:[%s1 + $0x18] sm:$0xff]
    %v2884 = vld [vmem:[%s1 + $0x20] sm:$0xff]
    %v2885 = vld [vmem:[%s1 + $0x28] sm:$0xff]
    %v2886 = vld [vmem:[%s1 + $0x30] sm:$0xff]
    %v2887 = vld [vmem:[%s1 + $0x38] sm:$0xff]
    %2888 = vst [vmem:[#allocation1] ss:$2 sm:$0xff] %v2865
    %v2889 = vld.sshfl [vmem:[#allocation1] sm:$0xff pattern:$0x75316420]
    %v2890 = vld.sshfl [vmem:[#allocation1 + $0x8] sm:$0xff pattern:$0x75316420]
    %2893 = vrot.lane.b32.xlu0 %v2889, 16
    %v2894 = vpop.permute.xlu0 %2893
    %2895 = vrot.lane.b32.xlu0 %v2890, 16
    %v2896 = vpop.permute.xlu0 %2895
    %v2897 = vsel %vm83, %v2894, %v2896
    %v2898 = vsel %vm83, %v2896, %v2894
    %v2899 = vsel %vm88, %v2898, 0.0
    %v2900 = vsel %vm89, %v2897, 0.0
    %v2901 = vld [vmem:[%s92] sm:$0xff]
    %v2902 = vld [vmem:[%s92 + $0x8] sm:$0xff]
    %v2903 = vld [vmem:[%s92 + $0x10] sm:$0xff]
    %v2904 = vld [vmem:[%s92 + $0x18] sm:$0xff]
    %v2905 = vld [vmem:[%s92 + $0x20] sm:$0xff]
    %v2906 = vld [vmem:[%s92 + $0x28] sm:$0xff]
    %v2907 = vld [vmem:[%s92 + $0x30] sm:$0xff]
    %v2908 = vld [vmem:[%s92 + $0x38] sm:$0xff]
    %v2910 = vsel %vm101, %v2901, 0
    %v2913 = vsel %vm101, %v2902, 0
    %v2916 = vsel %vm101, %v2903, 0
    %v2919 = vsel %vm101, %v2904, 0
    %v2922 = vsel %vm101, %v2905, 0
    %v2925 = vsel %vm101, %v2906, 0
    %v2928 = vsel %vm101, %v2907, 0
    %v2931 = vsel %vm101, %v2908, 0
    %v2934 = vsel %vm126, %v2899, 0
    %v2937 = vsel %vm126, %v2900, 0
    %2939 = vmatpush.msra.mxu0 0.0
    %2940 = vmatpush.msra.mxu0 0.0
    %2941 = vmatpush.msra.mxu0 0.0
    %2942 = vmatpush.msra.mxu0 0.0
    %2943 = vmatpush.msra.mxu0 0.0
    %2944 = vmatpush.msra.mxu0 0.0
    %2945 = vmatpush.msra.mxu0 0.0
    %2946 = vmatpush.msra.mxu0 0.0
    %2947 = vmatpush.msra.mxu0 0.0
    %2948 = vmatpush.msra.mxu0 0.0
    %2949 = vmatpush.msra.mxu0 0.0
    %2950 = vmatpush.msra.mxu0 0.0
    %2951 = vmatpush.msra.mxu0 0.0
    %2952 = vmatpush.msra.mxu0 0.0
    %2953 = vmatpush.msra.mxu0 0.0
    %2954 = vmatpush.msra.mxu0 %v2934
    %2955 = vmatmul.f32.gmra.mxu0 %v2910
    %v2956 = vpop.f32.mrf.mxu0
    %v2957 = vadd.f32 0.0, %v2956
    %2958 = vmatmul.f32.gmra.mxu0 %v2913
    %v2959 = vpop.f32.mrf.mxu0
    %v2960 = vadd.f32 0.0, %v2959
    %2961 = vmatmul.f32.gmra.mxu0 %v2916
    %v2962 = vpop.f32.mrf.mxu0
    %v2963 = vadd.f32 0.0, %v2962
    %2964 = vmatmul.f32.gmra.mxu0 %v2919
    %v2965 = vpop.f32.mrf.mxu0
    %v2966 = vadd.f32 0.0, %v2965
    %2967 = vmatmul.f32.gmra.mxu0 %v2922
    %v2968 = vpop.f32.mrf.mxu0
    %v2969 = vadd.f32 0.0, %v2968
    %2970 = vmatmul.f32.gmra.mxu0 %v2925
    %v2971 = vpop.f32.mrf.mxu0
    %v2972 = vadd.f32 0.0, %v2971
    %2973 = vmatmul.f32.gmra.mxu0 %v2928
    %v2974 = vpop.f32.mrf.mxu0
    %v2975 = vadd.f32 0.0, %v2974
    %2976 = vmatmul.f32.gmra.mxu0 %v2931
    %v2977 = vpop.f32.mrf.mxu0
    %v2978 = vadd.f32 0.0, %v2977
    %2979 = vdwg.mxu0
    %2980 = vmatpush.msra.mxu0 0.0
    %2981 = vmatpush.msra.mxu0 0.0
    %2982 = vmatpush.msra.mxu0 0.0
    %2983 = vmatpush.msra.mxu0 0.0
    %2984 = vmatpush.msra.mxu0 0.0
    %2985 = vmatpush.msra.mxu0 0.0
    %2986 = vmatpush.msra.mxu0 0.0
    %2987 = vmatpush.msra.mxu0 0.0
    %2988 = vmatpush.msra.mxu0 0.0
    %2989 = vmatpush.msra.mxu0 0.0
    %2990 = vmatpush.msra.mxu0 0.0
    %2991 = vmatpush.msra.mxu0 0.0
    %2992 = vmatpush.msra.mxu0 0.0
    %2993 = vmatpush.msra.mxu0 0.0
    %2994 = vmatpush.msra.mxu0 0.0
    %2995 = vmatpush.msra.mxu0 %v2937
    %2996 = vmatmul.f32.gmra.mxu0 %v2910
    %v2997 = vpop.f32.mrf.mxu0
    %v2998 = vadd.f32 0.0, %v2997
    %2999 = vmatmul.f32.gmra.mxu0 %v2913
    %v3000 = vpop.f32.mrf.mxu0
    %v3001 = vadd.f32 0.0, %v3000
    %3002 = vmatmul.f32.gmra.mxu0 %v2916
    %v3003 = vpop.f32.mrf.mxu0
    %v3004 = vadd.f32 0.0, %v3003
    %3005 = vmatmul.f32.gmra.mxu0 %v2919
    %v3006 = vpop.f32.mrf.mxu0
    %v3007 = vadd.f32 0.0, %v3006
    %3008 = vmatmul.f32.gmra.mxu0 %v2922
    %v3009 = vpop.f32.mrf.mxu0
    %v3010 = vadd.f32 0.0, %v3009
    %3011 = vmatmul.f32.gmra.mxu0 %v2925
    %v3012 = vpop.f32.mrf.mxu0
    %v3013 = vadd.f32 0.0, %v3012
    %3014 = vmatmul.f32.gmra.mxu0 %v2928
    %v3015 = vpop.f32.mrf.mxu0
    %v3016 = vadd.f32 0.0, %v3015
    %3017 = vmatmul.f32.gmra.mxu0 %v2931
    %v3018 = vpop.f32.mrf.mxu0
    %v3019 = vadd.f32 0.0, %v3018
    %3020 = vdwg.mxu0
    %v3022 = vsel %vm101, %v2880, 0
    %v3025 = vsel %vm101, %v2881, 0
    %v3028 = vsel %vm101, %v2882, 0
    %v3031 = vsel %vm101, %v2883, 0
    %v3034 = vsel %vm101, %v2884, 0
    %v3037 = vsel %vm101, %v2885, 0
    %v3040 = vsel %vm101, %v2886, 0
    %v3043 = vsel %vm101, %v2887, 0
    %v3046 = vsel %vm126, %v2878, 0
    %v3049 = vsel %vm126, %v2879, 0
    %3051 = vmatpush.msra.mxu0 0.0
    %3052 = vmatpush.msra.mxu0 0.0
    %3053 = vmatpush.msra.mxu0 0.0
    %3054 = vmatpush.msra.mxu0 0.0
    %3055 = vmatpush.msra.mxu0 0.0
    %3056 = vmatpush.msra.mxu0 0.0
    %3057 = vmatpush.msra.mxu0 0.0
    %3058 = vmatpush.msra.mxu0 0.0
    %3059 = vmatpush.msra.mxu0 0.0
    %3060 = vmatpush.msra.mxu0 0.0
    %3061 = vmatpush.msra.mxu0 0.0
    %3062 = vmatpush.msra.mxu0 0.0
    %3063 = vmatpush.msra.mxu0 0.0
    %3064 = vmatpush.msra.mxu0 0.0
    %3065 = vmatpush.msra.mxu0 0.0
    %3066 = vmatpush.msra.mxu0 %v3046
    %3067 = vmatmul.f32.gmra.mxu0 %v3022
    %v3068 = vpop.f32.mrf.mxu0
    %v3069 = vadd.f32 %v2957, %v3068
    %3070 = vmatmul.f32.gmra.mxu0 %v3025
    %v3071 = vpop.f32.mrf.mxu0
    %v3072 = vadd.f32 %v2960, %v3071
    %3073 = vmatmul.f32.gmra.mxu0 %v3028
    %v3074 = vpop.f32.mrf.mxu0
    %v3075 = vadd.f32 %v2963, %v3074
    %3076 = vmatmul.f32.gmra.mxu0 %v3031
    %v3077 = vpop.f32.mrf.mxu0
    %v3078 = vadd.f32 %v2966, %v3077
    %3079 = vmatmul.f32.gmra.mxu0 %v3034
    %v3080 = vpop.f32.mrf.mxu0
    %v3081 = vadd.f32 %v2969, %v3080
    %3082 = vmatmul.f32.gmra.mxu0 %v3037
    %v3083 = vpop.f32.mrf.mxu0
    %v3084 = vadd.f32 %v2972, %v3083
    %3085 = vmatmul.f32.gmra.mxu0 %v3040
    %v3086 = vpop.f32.mrf.mxu0
    %v3087 = vadd.f32 %v2975, %v3086
    %3088 = vmatmul.f32.gmra.mxu0 %v3043
    %v3089 = vpop.f32.mrf.mxu0
    %v3090 = vadd.f32 %v2978, %v3089
    %3091 = vdwg.mxu0
    %3092 = vmatpush.msra.mxu0 0.0
    %3093 = vmatpush.msra.mxu0 0.0
    %3094 = vmatpush.msra.mxu0 0.0
    %3095 = vmatpush.msra.mxu0 0.0
    %3096 = vmatpush.msra.mxu0 0.0
    %3097 = vmatpush.msra.mxu0 0.0
    %3098 = vmatpush.msra.mxu0 0.0
    %3099 = vmatpush.msra.mxu0 0.0
    %3100 = vmatpush.msra.mxu0 0.0
    %3101 = vmatpush.msra.mxu0 0.0
    %3102 = vmatpush.msra.mxu0 0.0
    %3103 = vmatpush.msra.mxu0 0.0
    %3104 = vmatpush.msra.mxu0 0.0
    %3105 = vmatpush.msra.mxu0 0.0
    %3106 = vmatpush.msra.mxu0 0.0
    %3107 = vmatpush.msra.mxu0 %v3049
    %3108 = vmatmul.f32.gmra.mxu0 %v3022
    %v3109 = vpop.f32.mrf.mxu0
    %v3110 = vadd.f32 %v2998, %v3109
    %3111 = vmatmul.f32.gmra.mxu0 %v3025
    %v3112 = vpop.f32.mrf.mxu0
    %v3113 = vadd.f32 %v3001, %v3112
    %3114 = vmatmul.f32.gmra.mxu0 %v3028
    %v3115 = vpop.f32.mrf.mxu0
    %v3116 = vadd.f32 %v3004, %v3115
    %3117 = vmatmul.f32.gmra.mxu0 %v3031
    %v3118 = vpop.f32.mrf.mxu0
    %v3119 = vadd.f32 %v3007, %v3118
    %3120 = vmatmul.f32.gmra.mxu0 %v3034
    %v3121 = vpop.f32.mrf.mxu0
    %v3122 = vadd.f32 %v3010, %v3121
    %3123 = vmatmul.f32.gmra.mxu0 %v3037
    %v3124 = vpop.f32.mrf.mxu0
    %v3125 = vadd.f32 %v3013, %v3124
    %3126 = vmatmul.f32.gmra.mxu0 %v3040
    %v3127 = vpop.f32.mrf.mxu0
    %v3128 = vadd.f32 %v3016, %v3127
    %3129 = vmatmul.f32.gmra.mxu0 %v3043
    %v3130 = vpop.f32.mrf.mxu0
    %v3131 = vadd.f32 %v3019, %v3130
    %3132 = vdwg.mxu0
    %3133 = vst [vmem:[#allocation1] ss:$2 sm:$0xff] %v2865
    %v3134 = vld.sshfl [vmem:[#allocation1] sm:$0xff pattern:$0x75316420]
    %v3135 = vld.sshfl [vmem:[#allocation1 + $0x8] sm:$0xff pattern:$0x75316420]
    %3138 = vrot.lane.b32.xlu0 %v3134, 15
    %v3139 = vpop.permute.xlu0 %3138
    %3140 = vrot.lane.b32.xlu0 %v3135, 15
    %v3141 = vpop.permute.xlu0 %3140
    %v3142 = vsel %vm336, %v3139, %v3141
    %v3143 = vsel %vm336, %v3141, %v3139
    %v3144 = vsel %vm341, %v3143, 0.0
    %v3145 = vsel %vm342, %v3142, 0.0
    %v3146 = vld [vmem:[%s345] sm:$0xff]
    %v3147 = vld [vmem:[%s345 + $0x8] sm:$0xff]
    %v3148 = vld [vmem:[%s345 + $0x10] sm:$0xff]
    %v3149 = vld [vmem:[%s345 + $0x18] sm:$0xff]
    %v3150 = vld [vmem:[%s345 + $0x20] sm:$0xff]
    %v3151 = vld [vmem:[%s345 + $0x28] sm:$0xff]
    %v3152 = vld [vmem:[%s345 + $0x30] sm:$0xff]
    %v3153 = vld [vmem:[%s345 + $0x38] sm:$0xff]
    %v3155 = vsel %vm101, %v3146, 0
    %v3158 = vsel %vm101, %v3147, 0
    %v3161 = vsel %vm101, %v3148, 0
    %v3164 = vsel %vm101, %v3149, 0
    %v3167 = vsel %vm101, %v3150, 0
    %v3170 = vsel %vm101, %v3151, 0
    %v3173 = vsel %vm101, %v3152, 0
    %v3176 = vsel %vm101, %v3153, 0
    %v3179 = vsel %vm126, %v3144, 0
    %v3182 = vsel %vm126, %v3145, 0
    %3184 = vmatpush.msra.mxu0 0.0
    %3185 = vmatpush.msra.mxu0 0.0
    %3186 = vmatpush.msra.mxu0 0.0
    %3187 = vmatpush.msra.mxu0 0.0
    %3188 = vmatpush.msra.mxu0 0.0
    %3189 = vmatpush.msra.mxu0 0.0
    %3190 = vmatpush.msra.mxu0 0.0
    %3191 = vmatpush.msra.mxu0 0.0
    %3192 = vmatpush.msra.mxu0 0.0
    %3193 = vmatpush.msra.mxu0 0.0
    %3194 = vmatpush.msra.mxu0 0.0
    %3195 = vmatpush.msra.mxu0 0.0
    %3196 = vmatpush.msra.mxu0 0.0
    %3197 = vmatpush.msra.mxu0 0.0
    %3198 = vmatpush.msra.mxu0 0.0
    %3199 = vmatpush.msra.mxu0 %v3179
    %3200 = vmatmul.f32.gmra.mxu0 %v3155
    %v3201 = vpop.f32.mrf.mxu0
    %v3202 = vadd.f32 0.0, %v3201
    %3203 = vmatmul.f32.gmra.mxu0 %v3158
    %v3204 = vpop.f32.mrf.mxu0
    %v3205 = vadd.f32 0.0, %v3204
    %3206 = vmatmul.f32.gmra.mxu0 %v3161
    %v3207 = vpop.f32.mrf.mxu0
    %v3208 = vadd.f32 0.0, %v3207
    %3209 = vmatmul.f32.gmra.mxu0 %v3164
    %v3210 = vpop.f32.mrf.mxu0
    %v3211 = vadd.f32 0.0, %v3210
    %3212 = vmatmul.f32.gmra.mxu0 %v3167
    %v3213 = vpop.f32.mrf.mxu0
    %v3214 = vadd.f32 0.0, %v3213
    %3215 = vmatmul.f32.gmra.mxu0 %v3170
    %v3216 = vpop.f32.mrf.mxu0
    %v3217 = vadd.f32 0.0, %v3216
    %3218 = vmatmul.f32.gmra.mxu0 %v3173
    %v3219 = vpop.f32.mrf.mxu0
    %v3220 = vadd.f32 0.0, %v3219
    %3221 = vmatmul.f32.gmra.mxu0 %v3176
    %v3222 = vpop.f32.mrf.mxu0
    %v3223 = vadd.f32 0.0, %v3222
    %3224 = vdwg.mxu0
    %3225 = vmatpush.msra.mxu0 0.0
    %3226 = vmatpush.msra.mxu0 0.0
    %3227 = vmatpush.msra.mxu0 0.0
    %3228 = vmatpush.msra.mxu0 0.0
    %3229 = vmatpush.msra.mxu0 0.0
    %3230 = vmatpush.msra.mxu0 0.0
    %3231 = vmatpush.msra.mxu0 0.0
    %3232 = vmatpush.msra.mxu0 0.0
    %3233 = vmatpush.msra.mxu0 0.0
    %3234 = vmatpush.msra.mxu0 0.0
    %3235 = vmatpush.msra.mxu0 0.0
    %3236 = vmatpush.msra.mxu0 0.0
    %3237 = vmatpush.msra.mxu0 0.0
    %3238 = vmatpush.msra.mxu0 0.0
    %3239 = vmatpush.msra.mxu0 0.0
    %3240 = vmatpush.msra.mxu0 %v3182
    %3241 = vmatmul.f32.gmra.mxu0 %v3155
    %v3242 = vpop.f32.mrf.mxu0
    %v3243 = vadd.f32 0.0, %v3242
    %3244 = vmatmul.f32.gmra.mxu0 %v3158
    %v3245 = vpop.f32.mrf.mxu0
    %v3246 = vadd.f32 0.0, %v3245
    %3247 = vmatmul.f32.gmra.mxu0 %v3161
    %v3248 = vpop.f32.mrf.mxu0
    %v3249 = vadd.f32 0.0, %v3248
    %3250 = vmatmul.f32.gmra.mxu0 %v3164
    %v3251 = vpop.f32.mrf.mxu0
    %v3252 = vadd.f32 0.0, %v3251
    %3253 = vmatmul.f32.gmra.mxu0 %v3167
    %v3254 = vpop.f32.mrf.mxu0
    %v3255 = vadd.f32 0.0, %v3254
    %3256 = vmatmul.f32.gmra.mxu0 %v3170
    %v3257 = vpop.f32.mrf.mxu0
    %v3258 = vadd.f32 0.0, %v3257
    %3259 = vmatmul.f32.gmra.mxu0 %v3173
    %v3260 = vpop.f32.mrf.mxu0
    %v3261 = vadd.f32 0.0, %v3260
    %3262 = vmatmul.f32.gmra.mxu0 %v3176
    %v3263 = vpop.f32.mrf.mxu0
    %v3264 = vadd.f32 0.0, %v3263
    %3265 = vdwg.mxu0
    %v3266 = vadd.f32 %v3069, %v3202
    %v3267 = vadd.f32 %v3110, %v3243
    %v3268 = vadd.f32 %v3072, %v3205
    %v3269 = vadd.f32 %v3113, %v3246
    %v3270 = vadd.f32 %v3075, %v3208
    %v3271 = vadd.f32 %v3116, %v3249
    %v3272 = vadd.f32 %v3078, %v3211
    %v3273 = vadd.f32 %v3119, %v3252
    %v3274 = vadd.f32 %v3081, %v3214
    %v3275 = vadd.f32 %v3122, %v3255
    %v3276 = vadd.f32 %v3084, %v3217
    %v3277 = vadd.f32 %v3125, %v3258
    %v3278 = vadd.f32 %v3087, %v3220
    %v3279 = vadd.f32 %v3128, %v3261
    %v3280 = vadd.f32 %v3090, %v3223
    %v3281 = vadd.f32 %v3131, %v3264
    %3282 = vst [vmem:[#allocation1] ss:$2 sm:$0xff] %v2865
    %v3283 = vld.sshfl [vmem:[#allocation1] sm:$0xff pattern:$0x75316420]
    %v3284 = vld.sshfl [vmem:[#allocation1 + $0x8] sm:$0xff pattern:$0x75316420]
    %3287 = vrot.lane.b32.xlu0 %v3283, 1
    %v3288 = vpop.permute.xlu0 %3287
    %3289 = vrot.lane.b32.xlu0 %v3284, 1
    %v3290 = vpop.permute.xlu0 %3289
    %v3291 = vsel %vm491, %v3288, %v3290
    %v3292 = vsel %vm491, %v3290, %v3288
    %v3293 = vsel %vm496, %v3292, 0.0
    %v3294 = vsel %vm497, %v3291, 0.0
    %v3295 = vld [vmem:[%s500] sm:$0xff]
    %v3296 = vld [vmem:[%s500 + $0x8] sm:$0xff]
    %v3297 = vld [vmem:[%s500 + $0x10] sm:$0xff]
    %v3298 = vld [vmem:[%s500 + $0x18] sm:$0xff]
    %v3299 = vld [vmem:[%s500 + $0x20] sm:$0xff]
    %v3300 = vld [vmem:[%s500 + $0x28] sm:$0xff]
    %v3301 = vld [vmem:[%s500 + $0x30] sm:$0xff]
    %v3302 = vld [vmem:[%s500 + $0x38] sm:$0xff]
    %v3304 = vsel %vm101, %v3295, 0
    %v3307 = vsel %vm101, %v3296, 0
    %v3310 = vsel %vm101, %v3297, 0
    %v3313 = vsel %vm101, %v3298, 0
    %v3316 = vsel %vm101, %v3299, 0
    %v3319 = vsel %vm101, %v3300, 0
    %v3322 = vsel %vm101, %v3301, 0
    %v3325 = vsel %vm101, %v3302, 0
    %v3328 = vsel %vm126, %v3293, 0
    %v3331 = vsel %vm126, %v3294, 0
    %3333 = vmatpush.msra.mxu0 0.0
    %3334 = vmatpush.msra.mxu0 0.0
    %3335 = vmatpush.msra.mxu0 0.0
    %3336 = vmatpush.msra.mxu0 0.0
    %3337 = vmatpush.msra.mxu0 0.0
    %3338 = vmatpush.msra.mxu0 0.0
    %3339 = vmatpush.msra.mxu0 0.0
    %3340 = vmatpush.msra.mxu0 0.0
    %3341 = vmatpush.msra.mxu0 0.0
    %3342 = vmatpush.msra.mxu0 0.0
    %3343 = vmatpush.msra.mxu0 0.0
    %3344 = vmatpush.msra.mxu0 0.0
    %3345 = vmatpush.msra.mxu0 0.0
    %3346 = vmatpush.msra.mxu0 0.0
    %3347 = vmatpush.msra.mxu0 0.0
    %3348 = vmatpush.msra.mxu0 %v3328
    %3349 = vmatmul.f32.gmra.mxu0 %v3304
    %v3350 = vpop.f32.mrf.mxu0
    %v3351 = vadd.f32 0.0, %v3350
    %3352 = vmatmul.f32.gmra.mxu0 %v3307
    %v3353 = vpop.f32.mrf.mxu0
    %v3354 = vadd.f32 0.0, %v3353
    %3355 = vmatmul.f32.gmra.mxu0 %v3310
    %v3356 = vpop.f32.mrf.mxu0
    %v3357 = vadd.f32 0.0, %v3356
    %3358 = vmatmul.f32.gmra.mxu0 %v3313
    %v3359 = vpop.f32.mrf.mxu0
    %v3360 = vadd.f32 0.0, %v3359
    %3361 = vmatmul.f32.gmra.mxu0 %v3316
    %v3362 = vpop.f32.mrf.mxu0
    %v3363 = vadd.f32 0.0, %v3362
    %3364 = vmatmul.f32.gmra.mxu0 %v3319
    %v3365 = vpop.f32.mrf.mxu0
    %v3366 = vadd.f32 0.0, %v3365
    %3367 = vmatmul.f32.gmra.mxu0 %v3322
    %v3368 = vpop.f32.mrf.mxu0
    %v3369 = vadd.f32 0.0, %v3368
    %3370 = vmatmul.f32.gmra.mxu0 %v3325
    %v3371 = vpop.f32.mrf.mxu0
    %v3372 = vadd.f32 0.0, %v3371
    %3373 = vdwg.mxu0
    %3374 = vmatpush.msra.mxu0 0.0
    %3375 = vmatpush.msra.mxu0 0.0
    %3376 = vmatpush.msra.mxu0 0.0
    %3377 = vmatpush.msra.mxu0 0.0
    %3378 = vmatpush.msra.mxu0 0.0
    %3379 = vmatpush.msra.mxu0 0.0
    %3380 = vmatpush.msra.mxu0 0.0
    %3381 = vmatpush.msra.mxu0 0.0
    %3382 = vmatpush.msra.mxu0 0.0
    %3383 = vmatpush.msra.mxu0 0.0
    %3384 = vmatpush.msra.mxu0 0.0
    %3385 = vmatpush.msra.mxu0 0.0
    %3386 = vmatpush.msra.mxu0 0.0
    %3387 = vmatpush.msra.mxu0 0.0
    %3388 = vmatpush.msra.mxu0 0.0
    %3389 = vmatpush.msra.mxu0 %v3331
    %3390 = vmatmul.f32.gmra.mxu0 %v3304
    %v3391 = vpop.f32.mrf.mxu0
    %v3392 = vadd.f32 0.0, %v3391
    %3393 = vmatmul.f32.gmra.mxu0 %v3307
    %v3394 = vpop.f32.mrf.mxu0
    %v3395 = vadd.f32 0.0, %v3394
    %3396 = vmatmul.f32.gmra.mxu0 %v3310
    %v3397 = vpop.f32.mrf.mxu0
    %v3398 = vadd.f32 0.0, %v3397
    %3399 = vmatmul.f32.gmra.mxu0 %v3313
    %v3400 = vpop.f32.mrf.mxu0
    %v3401 = vadd.f32 0.0, %v3400
    %3402 = vmatmul.f32.gmra.mxu0 %v3316
    %v3403 = vpop.f32.mrf.mxu0
    %v3404 = vadd.f32 0.0, %v3403
    %3405 = vmatmul.f32.gmra.mxu0 %v3319
    %v3406 = vpop.f32.mrf.mxu0
    %v3407 = vadd.f32 0.0, %v3406
    %3408 = vmatmul.f32.gmra.mxu0 %v3322
    %v3409 = vpop.f32.mrf.mxu0
    %v3410 = vadd.f32 0.0, %v3409
    %3411 = vmatmul.f32.gmra.mxu0 %v3325
    %v3412 = vpop.f32.mrf.mxu0
    %v3413 = vadd.f32 0.0, %v3412
    %3414 = vdwg.mxu0
    %v3415 = vadd.f32 %v3266, %v3351
    %v3416 = vadd.f32 %v3267, %v3392
    %v3417 = vadd.f32 %v3268, %v3354
    %v3418 = vadd.f32 %v3269, %v3395
    %v3419 = vadd.f32 %v3270, %v3357
    %v3420 = vadd.f32 %v3271, %v3398
    %v3421 = vadd.f32 %v3272, %v3360
    %v3422 = vadd.f32 %v3273, %v3401
    %v3423 = vadd.f32 %v3274, %v3363
    %v3424 = vadd.f32 %v3275, %v3404
    %v3425 = vadd.f32 %v3276, %v3366
    %v3426 = vadd.f32 %v3277, %v3407
    %v3427 = vadd.f32 %v3278, %v3369
    %v3428 = vadd.f32 %v3279, %v3410
    %v3429 = vadd.f32 %v3280, %v3372
    %v3430 = vadd.f32 %v3281, %v3413
    %v3431 = vld [vmem:[%s637] sm:$0xff]
    %v3432 = vld [vmem:[%s637 + $0x8] sm:$0xff]
    %v3433 = vld [vmem:[%s637 + $0x10] sm:$0xff]
    %v3434 = vld [vmem:[%s637 + $0x18] sm:$0xff]
    %v3435 = vld [vmem:[%s637 + $0x20] sm:$0xff]
    %v3436 = vld [vmem:[%s637 + $0x28] sm:$0xff]
    %v3437 = vld [vmem:[%s637 + $0x30] sm:$0xff]
    %v3438 = vld [vmem:[%s637 + $0x38] sm:$0xff]
    %3439 = vst [vmem:[#allocation1] ss:$2 sm:$0xff] %v2865
    %v3440 = vld.sshfl [vmem:[#allocation1] sm:$0xff pattern:$0x75316420]
    %v3441 = vld.sshfl [vmem:[#allocation1 + $0x8] sm:$0xff pattern:$0x75316420]
    %v3443 = vsel %vm101, %v3431, 0
    %v3446 = vsel %vm101, %v3432, 0
    %v3449 = vsel %vm101, %v3433, 0
    %v3452 = vsel %vm101, %v3434, 0
    %v3455 = vsel %vm101, %v3435, 0
    %v3458 = vsel %vm101, %v3436, 0
    %v3461 = vsel %vm101, %v3437, 0
    %v3464 = vsel %vm101, %v3438, 0
    %v3466 = vsel %vm126, %v3440, 0
    %v3468 = vsel %vm126, %v3441, 0
    %3470 = vmatpush.msra.mxu0 0.0
    %3471 = vmatpush.msra.mxu0 0.0
    %3472 = vmatpush.msra.mxu0 0.0
    %3473 = vmatpush.msra.mxu0 0.0
    %3474 = vmatpush.msra.mxu0 0.0
    %3475 = vmatpush.msra.mxu0 0.0
    %3476 = vmatpush.msra.mxu0 0.0
    %3477 = vmatpush.msra.mxu0 0.0
    %3478 = vmatpush.msra.mxu0 0.0
    %3479 = vmatpush.msra.mxu0 0.0
    %3480 = vmatpush.msra.mxu0 0.0
    %3481 = vmatpush.msra.mxu0 0.0
    %3482 = vmatpush.msra.mxu0 0.0
    %3483 = vmatpush.msra.mxu0 0.0
    %3484 = vmatpush.msra.mxu0 0.0
    %3485 = vmatpush.msra.mxu0 %v3466
    %3486 = vmatmul.f32.gmra.mxu0 %v3443
    %v3487 = vpop.f32.mrf.mxu0
    %v3488 = vadd.f32 0.0, %v3487
    %3489 = vmatmul.f32.gmra.mxu0 %v3446
    %v3490 = vpop.f32.mrf.mxu0
    %v3491 = vadd.f32 0.0, %v3490
    %3492 = vmatmul.f32.gmra.mxu0 %v3449
    %v3493 = vpop.f32.mrf.mxu0
    %v3494 = vadd.f32 0.0, %v3493
    %3495 = vmatmul.f32.gmra.mxu0 %v3452
    %v3496 = vpop.f32.mrf.mxu0
    %v3497 = vadd.f32 0.0, %v3496
    %3498 = vmatmul.f32.gmra.mxu0 %v3455
    %v3499 = vpop.f32.mrf.mxu0
    %v3500 = vadd.f32 0.0, %v3499
    %3501 = vmatmul.f32.gmra.mxu0 %v3458
    %v3502 = vpop.f32.mrf.mxu0
    %v3503 = vadd.f32 0.0, %v3502
    %3504 = vmatmul.f32.gmra.mxu0 %v3461
    %v3505 = vpop.f32.mrf.mxu0
    %v3506 = vadd.f32 0.0, %v3505
    %3507 = vmatmul.f32.gmra.mxu0 %v3464
    %v3508 = vpop.f32.mrf.mxu0
    %v3509 = vadd.f32 0.0, %v3508
    %3510 = vdwg.mxu0
    %3511 = vmatpush.msra.mxu0 0.0
    %3512 = vmatpush.msra.mxu0 0.0
    %3513 = vmatpush.msra.mxu0 0.0
    %3514 = vmatpush.msra.mxu0 0.0
    %3515 = vmatpush.msra.mxu0 0.0
    %3516 = vmatpush.msra.mxu0 0.0
    %3517 = vmatpush.msra.mxu0 0.0
    %3518 = vmatpush.msra.mxu0 0.0
    %3519 = vmatpush.msra.mxu0 0.0
    %3520 = vmatpush.msra.mxu0 0.0
    %3521 = vmatpush.msra.mxu0 0.0
    %3522 = vmatpush.msra.mxu0 0.0
    %3523 = vmatpush.msra.mxu0 0.0
    %3524 = vmatpush.msra.mxu0 0.0
    %3525 = vmatpush.msra.mxu0 0.0
    %3526 = vmatpush.msra.mxu0 %v3468
    %3527 = vmatmul.f32.gmra.mxu0 %v3443
    %v3528 = vpop.f32.mrf.mxu0
    %v3529 = vadd.f32 0.0, %v3528
    %3530 = vmatmul.f32.gmra.mxu0 %v3446
    %v3531 = vpop.f32.mrf.mxu0
    %v3532 = vadd.f32 0.0, %v3531
    %3533 = vmatmul.f32.gmra.mxu0 %v3449
    %v3534 = vpop.f32.mrf.mxu0
    %v3535 = vadd.f32 0.0, %v3534
    %3536 = vmatmul.f32.gmra.mxu0 %v3452
    %v3537 = vpop.f32.mrf.mxu0
    %v3538 = vadd.f32 0.0, %v3537
    %3539 = vmatmul.f32.gmra.mxu0 %v3455
    %v3540 = vpop.f32.mrf.mxu0
    %v3541 = vadd.f32 0.0, %v3540
    %3542 = vmatmul.f32.gmra.mxu0 %v3458
    %v3543 = vpop.f32.mrf.mxu0
    %v3544 = vadd.f32 0.0, %v3543
    %3545 = vmatmul.f32.gmra.mxu0 %v3461
    %v3546 = vpop.f32.mrf.mxu0
    %v3547 = vadd.f32 0.0, %v3546
    %3548 = vmatmul.f32.gmra.mxu0 %v3464
    %v3549 = vpop.f32.mrf.mxu0
    %v3550 = vadd.f32 0.0, %v3549
    %3551 = vdwg.mxu0
    %v3552 = vadd.f32 %v3415, %v3488
    %v3553 = vadd.f32 %v3416, %v3529
    %v3554 = vadd.f32 %v3417, %v3491
    %v3555 = vadd.f32 %v3418, %v3532
    %v3556 = vadd.f32 %v3419, %v3494
    %v3557 = vadd.f32 %v3420, %v3535
    %v3558 = vadd.f32 %v3421, %v3497
    %v3559 = vadd.f32 %v3422, %v3538
    %v3560 = vadd.f32 %v3423, %v3500
    %v3561 = vadd.f32 %v3424, %v3541
    %v3562 = vadd.f32 %v3425, %v3503
    %v3563 = vadd.f32 %v3426, %v3544
    %v3564 = vadd.f32 %v3427, %v3506
    %v3565 = vadd.f32 %v3428, %v3547
    %v3566 = vadd.f32 %v3429, %v3509
    %v3567 = vadd.f32 %v3430, %v3550
    %3568 = vst [vmem:[#allocation1] ss:$2 sm:$0xff] %v2865
    %v3569 = vld.sshfl [vmem:[#allocation1] sm:$0xff pattern:$0x75316420]
    %v3570 = vld.sshfl [vmem:[#allocation1 + $0x8] sm:$0xff pattern:$0x75316420]
    %3573 = vrot.lane.b32.xlu0 %v3569, 127
    %v3574 = vpop.permute.xlu0 %3573
    %3575 = vrot.lane.b32.xlu0 %v3570, 127
    %v3576 = vpop.permute.xlu0 %3575
    %v3577 = vsel %vm784, %v3574, %v3576
    %v3578 = vsel %vm784, %v3576, %v3574
    %v3579 = vsel %vm789, %v3577, 0.0
    %v3580 = vsel %vm790, %v3578, 0.0
    %v3581 = vld [vmem:[%s793] sm:$0xff]
    %v3582 = vld [vmem:[%s793 + $0x8] sm:$0xff]
    %v3583 = vld [vmem:[%s793 + $0x10] sm:$0xff]
    %v3584 = vld [vmem:[%s793 + $0x18] sm:$0xff]
    %v3585 = vld [vmem:[%s793 + $0x20] sm:$0xff]
    %v3586 = vld [vmem:[%s793 + $0x28] sm:$0xff]
    %v3587 = vld [vmem:[%s793 + $0x30] sm:$0xff]
    %v3588 = vld [vmem:[%s793 + $0x38] sm:$0xff]
    %v3590 = vsel %vm101, %v3581, 0
    %v3593 = vsel %vm101, %v3582, 0
    %v3596 = vsel %vm101, %v3583, 0
    %v3599 = vsel %vm101, %v3584, 0
    %v3602 = vsel %vm101, %v3585, 0
    %v3605 = vsel %vm101, %v3586, 0
    %v3608 = vsel %vm101, %v3587, 0
    %v3611 = vsel %vm101, %v3588, 0
    %v3614 = vsel %vm126, %v3579, 0
    %v3617 = vsel %vm126, %v3580, 0
    %3619 = vmatpush.msra.mxu0 0.0
    %3620 = vmatpush.msra.mxu0 0.0
    %3621 = vmatpush.msra.mxu0 0.0
    %3622 = vmatpush.msra.mxu0 0.0
    %3623 = vmatpush.msra.mxu0 0.0
    %3624 = vmatpush.msra.mxu0 0.0
    %3625 = vmatpush.msra.mxu0 0.0
    %3626 = vmatpush.msra.mxu0 0.0
    %3627 = vmatpush.msra.mxu0 0.0
    %3628 = vmatpush.msra.mxu0 0.0
    %3629 = vmatpush.msra.mxu0 0.0
    %3630 = vmatpush.msra.mxu0 0.0
    %3631 = vmatpush.msra.mxu0 0.0
    %3632 = vmatpush.msra.mxu0 0.0
    %3633 = vmatpush.msra.mxu0 0.0
    %3634 = vmatpush.msra.mxu0 %v3614
    %3635 = vmatmul.f32.gmra.mxu0 %v3590
    %v3636 = vpop.f32.mrf.mxu0
    %v3637 = vadd.f32 0.0, %v3636
    %3638 = vmatmul.f32.gmra.mxu0 %v3593
    %v3639 = vpop.f32.mrf.mxu0
    %v3640 = vadd.f32 0.0, %v3639
    %3641 = vmatmul.f32.gmra.mxu0 %v3596
    %v3642 = vpop.f32.mrf.mxu0
    %v3643 = vadd.f32 0.0, %v3642
    %3644 = vmatmul.f32.gmra.mxu0 %v3599
    %v3645 = vpop.f32.mrf.mxu0
    %v3646 = vadd.f32 0.0, %v3645
    %3647 = vmatmul.f32.gmra.mxu0 %v3602
    %v3648 = vpop.f32.mrf.mxu0
    %v3649 = vadd.f32 0.0, %v3648
    %3650 = vmatmul.f32.gmra.mxu0 %v3605
    %v3651 = vpop.f32.mrf.mxu0
    %v3652 = vadd.f32 0.0, %v3651
    %3653 = vmatmul.f32.gmra.mxu0 %v3608
    %v3654 = vpop.f32.mrf.mxu0
    %v3655 = vadd.f32 0.0, %v3654
    %3656 = vmatmul.f32.gmra.mxu0 %v3611
    %v3657 = vpop.f32.mrf.mxu0
    %v3658 = vadd.f32 0.0, %v3657
    %3659 = vdwg.mxu0
    %3660 = vmatpush.msra.mxu0 0.0
    %3661 = vmatpush.msra.mxu0 0.0
    %3662 = vmatpush.msra.mxu0 0.0
    %3663 = vmatpush.msra.mxu0 0.0
    %3664 = vmatpush.msra.mxu0 0.0
    %3665 = vmatpush.msra.mxu0 0.0
    %3666 = vmatpush.msra.mxu0 0.0
    %3667 = vmatpush.msra.mxu0 0.0
    %3668 = vmatpush.msra.mxu0 0.0
    %3669 = vmatpush.msra.mxu0 0.0
    %3670 = vmatpush.msra.mxu0 0.0
    %3671 = vmatpush.msra.mxu0 0.0
    %3672 = vmatpush.msra.mxu0 0.0
    %3673 = vmatpush.msra.mxu0 0.0
    %3674 = vmatpush.msra.mxu0 0.0
    %3675 = vmatpush.msra.mxu0 %v3617
    %3676 = vmatmul.f32.gmra.mxu0 %v3590
    %v3677 = vpop.f32.mrf.mxu0
    %v3678 = vadd.f32 0.0, %v3677
    %3679 = vmatmul.f32.gmra.mxu0 %v3593
    %v3680 = vpop.f32.mrf.mxu0
    %v3681 = vadd.f32 0.0, %v3680
    %3682 = vmatmul.f32.gmra.mxu0 %v3596
    %v3683 = vpop.f32.mrf.mxu0
    %v3684 = vadd.f32 0.0, %v3683
    %3685 = vmatmul.f32.gmra.mxu0 %v3599
    %v3686 = vpop.f32.mrf.mxu0
    %v3687 = vadd.f32 0.0, %v3686
    %3688 = vmatmul.f32.gmra.mxu0 %v3602
    %v3689 = vpop.f32.mrf.mxu0
    %v3690 = vadd.f32 0.0, %v3689
    %3691 = vmatmul.f32.gmra.mxu0 %v3605
    %v3692 = vpop.f32.mrf.mxu0
    %v3693 = vadd.f32 0.0, %v3692
    %3694 = vmatmul.f32.gmra.mxu0 %v3608
    %v3695 = vpop.f32.mrf.mxu0
    %v3696 = vadd.f32 0.0, %v3695
    %3697 = vmatmul.f32.gmra.mxu0 %v3611
    %v3698 = vpop.f32.mrf.mxu0
    %v3699 = vadd.f32 0.0, %v3698
    %3700 = vdwg.mxu0
    %v3701 = vadd.f32 %v3552, %v3637
    %v3702 = vadd.f32 %v3553, %v3678
    %v3703 = vadd.f32 %v3554, %v3640
    %v3704 = vadd.f32 %v3555, %v3681
    %v3705 = vadd.f32 %v3556, %v3643
    %v3706 = vadd.f32 %v3557, %v3684
    %v3707 = vadd.f32 %v3558, %v3646
    %v3708 = vadd.f32 %v3559, %v3687
    %v3709 = vadd.f32 %v3560, %v3649
    %v3710 = vadd.f32 %v3561, %v3690
    %v3711 = vadd.f32 %v3562, %v3652
    %v3712 = vadd.f32 %v3563, %v3693
    %v3713 = vadd.f32 %v3564, %v3655
    %v3714 = vadd.f32 %v3565, %v3696
    %v3715 = vadd.f32 %v3566, %v3658
    %v3716 = vadd.f32 %v3567, %v3699
    %3717 = vst [vmem:[#allocation1] ss:$2 sm:$0xff] %v2865
    %v3718 = vld.sshfl [vmem:[#allocation1] sm:$0xff pattern:$0x75316420]
    %v3719 = vld.sshfl [vmem:[#allocation1 + $0x8] sm:$0xff pattern:$0x75316420]
    %3722 = vrot.lane.b32.xlu0 %v3718, 113
    %v3723 = vpop.permute.xlu0 %3722
    %3724 = vrot.lane.b32.xlu0 %v3719, 113
    %v3725 = vpop.permute.xlu0 %3724
    %v3726 = vsel %vm939, %v3723, %v3725
    %v3727 = vsel %vm939, %v3725, %v3723
    %v3728 = vsel %vm944, %v3726, 0.0
    %v3729 = vsel %vm945, %v3727, 0.0
    %v3730 = vld [vmem:[%s948] sm:$0xff]
    %v3731 = vld [vmem:[%s948 + $0x8] sm:$0xff]
    %v3732 = vld [vmem:[%s948 + $0x10] sm:$0xff]
    %v3733 = vld [vmem:[%s948 + $0x18] sm:$0xff]
    %v3734 = vld [vmem:[%s948 + $0x20] sm:$0xff]
    %v3735 = vld [vmem:[%s948 + $0x28] sm:$0xff]
    %v3736 = vld [vmem:[%s948 + $0x30] sm:$0xff]
    %v3737 = vld [vmem:[%s948 + $0x38] sm:$0xff]
    %v3739 = vsel %vm101, %v3730, 0
    %v3742 = vsel %vm101, %v3731, 0
    %v3745 = vsel %vm101, %v3732, 0
    %v3748 = vsel %vm101, %v3733, 0
    %v3751 = vsel %vm101, %v3734, 0
    %v3754 = vsel %vm101, %v3735, 0
    %v3757 = vsel %vm101, %v3736, 0
    %v3760 = vsel %vm101, %v3737, 0
    %v3763 = vsel %vm126, %v3728, 0
    %v3766 = vsel %vm126, %v3729, 0
    %3768 = vmatpush.msra.mxu0 0.0
    %3769 = vmatpush.msra.mxu0 0.0
    %3770 = vmatpush.msra.mxu0 0.0
    %3771 = vmatpush.msra.mxu0 0.0
    %3772 = vmatpush.msra.mxu0 0.0
    %3773 = vmatpush.msra.mxu0 0.0
    %3774 = vmatpush.msra.mxu0 0.0
    %3775 = vmatpush.msra.mxu0 0.0
    %3776 = vmatpush.msra.mxu0 0.0
    %3777 = vmatpush.msra.mxu0 0.0
    %3778 = vmatpush.msra.mxu0 0.0
    %3779 = vmatpush.msra.mxu0 0.0
    %3780 = vmatpush.msra.mxu0 0.0
    %3781 = vmatpush.msra.mxu0 0.0
    %3782 = vmatpush.msra.mxu0 0.0
    %3783 = vmatpush.msra.mxu0 %v3763
    %3784 = vmatmul.f32.gmra.mxu0 %v3739
    %v3785 = vpop.f32.mrf.mxu0
    %v3786 = vadd.f32 0.0, %v3785
    %3787 = vmatmul.f32.gmra.mxu0 %v3742
    %v3788 = vpop.f32.mrf.mxu0
    %v3789 = vadd.f32 0.0, %v3788
    %3790 = vmatmul.f32.gmra.mxu0 %v3745
    %v3791 = vpop.f32.mrf.mxu0
    %v3792 = vadd.f32 0.0, %v3791
    %3793 = vmatmul.f32.gmra.mxu0 %v3748
    %v3794 = vpop.f32.mrf.mxu0
    %v3795 = vadd.f32 0.0, %v3794
    %3796 = vmatmul.f32.gmra.mxu0 %v3751
    %v3797 = vpop.f32.mrf.mxu0
    %v3798 = vadd.f32 0.0, %v3797
    %3799 = vmatmul.f32.gmra.mxu0 %v3754
    %v3800 = vpop.f32.mrf.mxu0
    %v3801 = vadd.f32 0.0, %v3800
    %3802 = vmatmul.f32.gmra.mxu0 %v3757
    %v3803 = vpop.f32.mrf.mxu0
    %v3804 = vadd.f32 0.0, %v3803
    %3805 = vmatmul.f32.gmra.mxu0 %v3760
    %v3806 = vpop.f32.mrf.mxu0
    %v3807 = vadd.f32 0.0, %v3806
    %3808 = vdwg.mxu0
    %3809 = vmatpush.msra.mxu0 0.0
    %3810 = vmatpush.msra.mxu0 0.0
    %3811 = vmatpush.msra.mxu0 0.0
    %3812 = vmatpush.msra.mxu0 0.0
    %3813 = vmatpush.msra.mxu0 0.0
    %3814 = vmatpush.msra.mxu0 0.0
    %3815 = vmatpush.msra.mxu0 0.0
    %3816 = vmatpush.msra.mxu0 0.0
    %3817 = vmatpush.msra.mxu0 0.0
    %3818 = vmatpush.msra.mxu0 0.0
    %3819 = vmatpush.msra.mxu0 0.0
    %3820 = vmatpush.msra.mxu0 0.0
    %3821 = vmatpush.msra.mxu0 0.0
    %3822 = vmatpush.msra.mxu0 0.0
    %3823 = vmatpush.msra.mxu0 0.0
    %3824 = vmatpush.msra.mxu0 %v3766
    %3825 = vmatmul.f32.gmra.mxu0 %v3739
    %v3826 = vpop.f32.mrf.mxu0
    %v3827 = vadd.f32 0.0, %v3826
    %3828 = vmatmul.f32.gmra.mxu0 %v3742
    %v3829 = vpop.f32.mrf.mxu0
    %v3830 = vadd.f32 0.0, %v3829
    %3831 = vmatmul.f32.gmra.mxu0 %v3745
    %v3832 = vpop.f32.mrf.mxu0
    %v3833 = vadd.f32 0.0, %v3832
    %3834 = vmatmul.f32.gmra.mxu0 %v3748
    %v3835 = vpop.f32.mrf.mxu0
    %v3836 = vadd.f32 0.0, %v3835
    %3837 = vmatmul.f32.gmra.mxu0 %v3751
    %v3838 = vpop.f32.mrf.mxu0
    %v3839 = vadd.f32 0.0, %v3838
    %3840 = vmatmul.f32.gmra.mxu0 %v3754
    %v3841 = vpop.f32.mrf.mxu0
    %v3842 = vadd.f32 0.0, %v3841
    %3843 = vmatmul.f32.gmra.mxu0 %v3757
    %v3844 = vpop.f32.mrf.mxu0
    %v3845 = vadd.f32 0.0, %v3844
    %3846 = vmatmul.f32.gmra.mxu0 %v3760
    %v3847 = vpop.f32.mrf.mxu0
    %v3848 = vadd.f32 0.0, %v3847
    %3849 = vdwg.mxu0
    %v3850 = vadd.f32 %v3701, %v3786
    %v3851 = vadd.f32 %v3702, %v3827
    %v3852 = vadd.f32 %v3703, %v3789
    %v3853 = vadd.f32 %v3704, %v3830
    %v3854 = vadd.f32 %v3705, %v3792
    %v3855 = vadd.f32 %v3706, %v3833
    %v3856 = vadd.f32 %v3707, %v3795
    %v3857 = vadd.f32 %v3708, %v3836
    %v3858 = vadd.f32 %v3709, %v3798
    %v3859 = vadd.f32 %v3710, %v3839
    %v3860 = vadd.f32 %v3711, %v3801
    %v3861 = vadd.f32 %v3712, %v3842
    %v3862 = vadd.f32 %v3713, %v3804
    %v3863 = vadd.f32 %v3714, %v3845
    %v3864 = vadd.f32 %v3715, %v3807
    %v3865 = vadd.f32 %v3716, %v3848
    %3866 = vst [vmem:[#allocation1] ss:$2 sm:$0xff] %v2865
    %v3867 = vld.sshfl [vmem:[#allocation1] sm:$0xff pattern:$0x75316420]
    %v3868 = vld.sshfl [vmem:[#allocation1 + $0x8] sm:$0xff pattern:$0x75316420]
    %3871 = vrot.lane.b32.xlu0 %v3867, 112
    %v3872 = vpop.permute.xlu0 %3871
    %3873 = vrot.lane.b32.xlu0 %v3868, 112
    %v3874 = vpop.permute.xlu0 %3873
    %v3875 = vsel %vm1094, %v3872, %v3874
    %v3876 = vsel %vm1094, %v3874, %v3872
    %v3877 = vsel %vm1099, %v3875, 0.0
    %v3878 = vsel %vm1100, %v3876, 0.0
    %v3879 = vld [vmem:[%s1103] sm:$0xff]
    %v3880 = vld [vmem:[%s1103 + $0x8] sm:$0xff]
    %v3881 = vld [vmem:[%s1103 + $0x10] sm:$0xff]
    %v3882 = vld [vmem:[%s1103 + $0x18] sm:$0xff]
    %v3883 = vld [vmem:[%s1103 + $0x20] sm:$0xff]
    %v3884 = vld [vmem:[%s1103 + $0x28] sm:$0xff]
    %v3885 = vld [vmem:[%s1103 + $0x30] sm:$0xff]
    %v3886 = vld [vmem:[%s1103 + $0x38] sm:$0xff]
    %v3888 = vsel %vm101, %v3879, 0
    %v3891 = vsel %vm101, %v3880, 0
    %v3894 = vsel %vm101, %v3881, 0
    %v3897 = vsel %vm101, %v3882, 0
    %v3900 = vsel %vm101, %v3883, 0
    %v3903 = vsel %vm101, %v3884, 0
    %v3906 = vsel %vm101, %v3885, 0
    %v3909 = vsel %vm101, %v3886, 0
    %v3912 = vsel %vm126, %v3877, 0
    %v3915 = vsel %vm126, %v3878, 0
    %3917 = vmatpush.msra.mxu0 0.0
    %3918 = vmatpush.msra.mxu0 0.0
    %3919 = vmatpush.msra.mxu0 0.0
    %3920 = vmatpush.msra.mxu0 0.0
    %3921 = vmatpush.msra.mxu0 0.0
    %3922 = vmatpush.msra.mxu0 0.0
    %3923 = vmatpush.msra.mxu0 0.0
    %3924 = vmatpush.msra.mxu0 0.0
    %3925 = vmatpush.msra.mxu0 0.0
    %3926 = vmatpush.msra.mxu0 0.0
    %3927 = vmatpush.msra.mxu0 0.0
    %3928 = vmatpush.msra.mxu0 0.0
    %3929 = vmatpush.msra.mxu0 0.0
    %3930 = vmatpush.msra.mxu0 0.0
    %3931 = vmatpush.msra.mxu0 0.0
    %3932 = vmatpush.msra.mxu0 %v3912
    %3933 = vmatmul.f32.gmra.mxu0 %v3888
    %v3934 = vpop.f32.mrf.mxu0
    %v3935 = vadd.f32 0.0, %v3934
    %3936 = vmatmul.f32.gmra.mxu0 %v3891
    %v3937 = vpop.f32.mrf.mxu0
    %v3938 = vadd.f32 0.0, %v3937
    %3939 = vmatmul.f32.gmra.mxu0 %v3894
    %v3940 = vpop.f32.mrf.mxu0
    %v3941 = vadd.f32 0.0, %v3940
    %3942 = vmatmul.f32.gmra.mxu0 %v3897
    %v3943 = vpop.f32.mrf.mxu0
    %v3944 = vadd.f32 0.0, %v3943
    %3945 = vmatmul.f32.gmra.mxu0 %v3900
    %v3946 = vpop.f32.mrf.mxu0
    %v3947 = vadd.f32 0.0, %v3946
    %3948 = vmatmul.f32.gmra.mxu0 %v3903
    %v3949 = vpop.f32.mrf.mxu0
    %v3950 = vadd.f32 0.0, %v3949
    %3951 = vmatmul.f32.gmra.mxu0 %v3906
    %v3952 = vpop.f32.mrf.mxu0
    %v3953 = vadd.f32 0.0, %v3952
    %3954 = vmatmul.f32.gmra.mxu0 %v3909
    %v3955 = vpop.f32.mrf.mxu0
    %v3956 = vadd.f32 0.0, %v3955
    %3957 = vdwg.mxu0
    %3958 = vmatpush.msra.mxu0 0.0
    %3959 = vmatpush.msra.mxu0 0.0
    %3960 = vmatpush.msra.mxu0 0.0
    %3961 = vmatpush.msra.mxu0 0.0
    %3962 = vmatpush.msra.mxu0 0.0
    %3963 = vmatpush.msra.mxu0 0.0
    %3964 = vmatpush.msra.mxu0 0.0
    %3965 = vmatpush.msra.mxu0 0.0
    %3966 = vmatpush.msra.mxu0 0.0
    %3967 = vmatpush.msra.mxu0 0.0
    %3968 = vmatpush.msra.mxu0 0.0
    %3969 = vmatpush.msra.mxu0 0.0
    %3970 = vmatpush.msra.mxu0 0.0
    %3971 = vmatpush.msra.mxu0 0.0
    %3972 = vmatpush.msra.mxu0 0.0
    %3973 = vmatpush.msra.mxu0 %v3915
    %3974 = vmatmul.f32.gmra.mxu0 %v3888
    %v3975 = vpop.f32.mrf.mxu0
    %v3976 = vadd.f32 0.0, %v3975
    %3977 = vmatmul.f32.gmra.mxu0 %v3891
    %v3978 = vpop.f32.mrf.mxu0
    %v3979 = vadd.f32 0.0, %v3978
    %3980 = vmatmul.f32.gmra.mxu0 %v3894
    %v3981 = vpop.f32.mrf.mxu0
    %v3982 = vadd.f32 0.0, %v3981
    %3983 = vmatmul.f32.gmra.mxu0 %v3897
    %v3984 = vpop.f32.mrf.mxu0
    %v3985 = vadd.f32 0.0, %v3984
    %3986 = vmatmul.f32.gmra.mxu0 %v3900
    %v3987 = vpop.f32.mrf.mxu0
    %v3988 = vadd.f32 0.0, %v3987
    %3989 = vmatmul.f32.gmra.mxu0 %v3903
    %v3990 = vpop.f32.mrf.mxu0
    %v3991 = vadd.f32 0.0, %v3990
    %3992 = vmatmul.f32.gmra.mxu0 %v3906
    %v3993 = vpop.f32.mrf.mxu0
    %v3994 = vadd.f32 0.0, %v3993
    %3995 = vmatmul.f32.gmra.mxu0 %v3909
    %v3996 = vpop.f32.mrf.mxu0
    %v3997 = vadd.f32 0.0, %v3996
    %3998 = vdwg.mxu0
    %v3999 = vadd.f32 %v3850, %v3935
    %v4000 = vadd.f32 %v3851, %v3976
    %v4001 = vadd.f32 %v3852, %v3938
    %v4002 = vadd.f32 %v3853, %v3979
    %v4003 = vadd.f32 %v3854, %v3941
    %v4004 = vadd.f32 %v3855, %v3982
    %v4005 = vadd.f32 %v3856, %v3944
    %v4006 = vadd.f32 %v3857, %v3985
    %v4007 = vadd.f32 %v3858, %v3947
    %v4008 = vadd.f32 %v3859, %v3988
    %v4009 = vadd.f32 %v3860, %v3950
    %v4010 = vadd.f32 %v3861, %v3991
    %v4011 = vadd.f32 %v3862, %v3953
    %v4012 = vadd.f32 %v3863, %v3994
    %v4013 = vadd.f32 %v3864, %v3956
    %v4014 = vadd.f32 %v3865, %v3997
    %4015 = vst [vmem:[#allocation1] ss:$2 sm:$0xff] %v2865
    %v4016 = vld.sshfl [vmem:[#allocation1] sm:$0xff pattern:$0x75316420]
    %v4017 = vld.sshfl [vmem:[#allocation1 + $0x8] sm:$0xff pattern:$0x75316420]
    %4020 = vrot.lane.b32.xlu0 %v4016, 111
    %v4021 = vpop.permute.xlu0 %4020
    %4022 = vrot.lane.b32.xlu0 %v4017, 111
    %v4023 = vpop.permute.xlu0 %4022
    %v4024 = vsel %vm1249, %v4021, %v4023
    %v4025 = vsel %vm1249, %v4023, %v4021
    %v4026 = vsel %vm1254, %v4024, 0.0
    %v4027 = vsel %vm1255, %v4025, 0.0
    %v4028 = vld [vmem:[%s1258] sm:$0xff]
    %v4029 = vld [vmem:[%s1258 + $0x8] sm:$0xff]
    %v4030 = vld [vmem:[%s1258 + $0x10] sm:$0xff]
    %v4031 = vld [vmem:[%s1258 + $0x18] sm:$0xff]
    %v4032 = vld [vmem:[%s1258 + $0x20] sm:$0xff]
    %v4033 = vld [vmem:[%s1258 + $0x28] sm:$0xff]
    %v4034 = vld [vmem:[%s1258 + $0x30] sm:$0xff]
    %v4035 = vld [vmem:[%s1258 + $0x38] sm:$0xff]
    %v4037 = vsel %vm101, %v4028, 0
    %v4040 = vsel %vm101, %v4029, 0
    %v4043 = vsel %vm101, %v4030, 0
    %v4046 = vsel %vm101, %v4031, 0
    %v4049 = vsel %vm101, %v4032, 0
    %v4052 = vsel %vm101, %v4033, 0
    %v4055 = vsel %vm101, %v4034, 0
    %v4058 = vsel %vm101, %v4035, 0
    %v4061 = vsel %vm126, %v4026, 0
    %v4064 = vsel %vm126, %v4027, 0
    %4066 = vmatpush.msra.mxu0 0.0
    %4067 = vmatpush.msra.mxu0 0.0
    %4068 = vmatpush.msra.mxu0 0.0
    %4069 = vmatpush.msra.mxu0 0.0
    %4070 = vmatpush.msra.mxu0 0.0
    %4071 = vmatpush.msra.mxu0 0.0
    %4072 = vmatpush.msra.mxu0 0.0
    %4073 = vmatpush.msra.mxu0 0.0
    %4074 = vmatpush.msra.mxu0 0.0
    %4075 = vmatpush.msra.mxu0 0.0
    %4076 = vmatpush.msra.mxu0 0.0
    %4077 = vmatpush.msra.mxu0 0.0
    %4078 = vmatpush.msra.mxu0 0.0
    %4079 = vmatpush.msra.mxu0 0.0
    %4080 = vmatpush.msra.mxu0 0.0
    %4081 = vmatpush.msra.mxu0 %v4061
    %4082 = vmatmul.f32.gmra.mxu0 %v4037
    %v4083 = vpop.f32.mrf.mxu0
    %v4084 = vadd.f32 0.0, %v4083
    %4085 = vmatmul.f32.gmra.mxu0 %v4040
    %v4086 = vpop.f32.mrf.mxu0
    %v4087 = vadd.f32 0.0, %v4086
    %4088 = vmatmul.f32.gmra.mxu0 %v4043
    %v4089 = vpop.f32.mrf.mxu0
    %v4090 = vadd.f32 0.0, %v4089
    %4091 = vmatmul.f32.gmra.mxu0 %v4046
    %v4092 = vpop.f32.mrf.mxu0
    %v4093 = vadd.f32 0.0, %v4092
    %4094 = vmatmul.f32.gmra.mxu0 %v4049
    %v4095 = vpop.f32.mrf.mxu0
    %v4096 = vadd.f32 0.0, %v4095
    %4097 = vmatmul.f32.gmra.mxu0 %v4052
    %v4098 = vpop.f32.mrf.mxu0
    %v4099 = vadd.f32 0.0, %v4098
    %4100 = vmatmul.f32.gmra.mxu0 %v4055
    %v4101 = vpop.f32.mrf.mxu0
    %v4102 = vadd.f32 0.0, %v4101
    %4103 = vmatmul.f32.gmra.mxu0 %v4058
    %v4104 = vpop.f32.mrf.mxu0
    %v4105 = vadd.f32 0.0, %v4104
    %4106 = vdwg.mxu0
    %4107 = vmatpush.msra.mxu0 0.0
    %4108 = vmatpush.msra.mxu0 0.0
    %4109 = vmatpush.msra.mxu0 0.0
    %4110 = vmatpush.msra.mxu0 0.0
    %4111 = vmatpush.msra.mxu0 0.0
    %4112 = vmatpush.msra.mxu0 0.0
    %4113 = vmatpush.msra.mxu0 0.0
    %4114 = vmatpush.msra.mxu0 0.0
    %4115 = vmatpush.msra.mxu0 0.0
    %4116 = vmatpush.msra.mxu0 0.0
    %4117 = vmatpush.msra.mxu0 0.0
    %4118 = vmatpush.msra.mxu0 0.0
    %4119 = vmatpush.msra.mxu0 0.0
    %4120 = vmatpush.msra.mxu0 0.0
    %4121 = vmatpush.msra.mxu0 0.0
    %4122 = vmatpush.msra.mxu0 %v4064
    %4123 = vmatmul.f32.gmra.mxu0 %v4037
    %v4124 = vpop.f32.mrf.mxu0
    %v4125 = vadd.f32 0.0, %v4124
    %4126 = vmatmul.f32.gmra.mxu0 %v4040
    %v4127 = vpop.f32.mrf.mxu0
    %v4128 = vadd.f32 0.0, %v4127
    %4129 = vmatmul.f32.gmra.mxu0 %v4043
    %v4130 = vpop.f32.mrf.mxu0
    %v4131 = vadd.f32 0.0, %v4130
    %4132 = vmatmul.f32.gmra.mxu0 %v4046
    %v4133 = vpop.f32.mrf.mxu0
    %v4134 = vadd.f32 0.0, %v4133
    %4135 = vmatmul.f32.gmra.mxu0 %v4049
    %v4136 = vpop.f32.mrf.mxu0
    %v4137 = vadd.f32 0.0, %v4136
    %4138 = vmatmul.f32.gmra.mxu0 %v4052
    %v4139 = vpop.f32.mrf.mxu0
    %v4140 = vadd.f32 0.0, %v4139
    %4141 = vmatmul.f32.gmra.mxu0 %v4055
    %v4142 = vpop.f32.mrf.mxu0
    %v4143 = vadd.f32 0.0, %v4142
    %4144 = vmatmul.f32.gmra.mxu0 %v4058
    %v4145 = vpop.f32.mrf.mxu0
    %v4146 = vadd.f32 0.0, %v4145
    %4147 = vdwg.mxu0
    %v4148 = vadd.f32 %v3999, %v4084
    %v4149 = vadd.f32 %v4000, %v4125
    %v4150 = vadd.f32 %v4001, %v4087
    %v4151 = vadd.f32 %v4002, %v4128
    %v4152 = vadd.f32 %v4003, %v4090
    %v4153 = vadd.f32 %v4004, %v4131
    %v4154 = vadd.f32 %v4005, %v4093
    %v4155 = vadd.f32 %v4006, %v4134
    %v4156 = vadd.f32 %v4007, %v4096
    %v4157 = vadd.f32 %v4008, %v4137
    %v4158 = vadd.f32 %v4009, %v4099
    %v4159 = vadd.f32 %v4010, %v4140
    %v4160 = vadd.f32 %v4011, %v4102
    %v4161 = vadd.f32 %v4012, %v4143
    %v4162 = vadd.f32 %v4013, %v4105
    %v4163 = vadd.f32 %v4014, %v4146
    %v4164 = vadd.f32 %v4148, %v1398
    %v4165 = vadd.f32 %v4149, %v1398
    %v4166 = vadd.f32 %v4150, %v1403
    %v4167 = vadd.f32 %v4151, %v1403
    %v4168 = vadd.f32 %v4152, %v1408
    %v4169 = vadd.f32 %v4153, %v1408
    %v4170 = vadd.f32 %v4154, %v1413
    %v4171 = vadd.f32 %v4155, %v1413
    %v4172 = vadd.f32 %v4156, %v1418
    %v4173 = vadd.f32 %v4157, %v1418
    %v4174 = vadd.f32 %v4158, %v1423
    %v4175 = vadd.f32 %v4159, %v1423
    %v4176 = vadd.f32 %v4160, %v1428
    %v4177 = vadd.f32 %v4161, %v1428
    %v4178 = vadd.f32 %v4162, %v1433
    %v4179 = vadd.f32 %v4163, %v1433
    %v4180 = vmul.f32 %v4164, 0.01
    %v4181 = vmul.f32 %v4165, 0.01
    %v4182 = vmul.f32 %v4166, 0.01
    %v4183 = vmul.f32 %v4167, 0.01
    %v4184 = vmul.f32 %v4168, 0.01
    %v4185 = vmul.f32 %v4169, 0.01
    %v4186 = vmul.f32 %v4170, 0.01
    %v4187 = vmul.f32 %v4171, 0.01
    %v4188 = vmul.f32 %v4172, 0.01
    %v4189 = vmul.f32 %v4173, 0.01
    %v4190 = vmul.f32 %v4174, 0.01
    %v4191 = vmul.f32 %v4175, 0.01
    %v4192 = vmul.f32 %v4176, 0.01
    %v4193 = vmul.f32 %v4177, 0.01
    %v4194 = vmul.f32 %v4178, 0.01
    %v4195 = vmul.f32 %v4179, 0.01
    %v4196 = vmax.f32 %v4164, %v4180
    %v4197 = vmax.f32 %v4165, %v4181
    %v4198 = vmax.f32 %v4166, %v4182
    %v4199 = vmax.f32 %v4167, %v4183
    %v4200 = vmax.f32 %v4168, %v4184
    %v4201 = vmax.f32 %v4169, %v4185
    %v4202 = vmax.f32 %v4170, %v4186
    %v4203 = vmax.f32 %v4171, %v4187
    %v4204 = vmax.f32 %v4172, %v4188
    %v4205 = vmax.f32 %v4173, %v4189
    %v4206 = vmax.f32 %v4174, %v4190
    %v4207 = vmax.f32 %v4175, %v4191
    %v4208 = vmax.f32 %v4176, %v4192
    %v4209 = vmax.f32 %v4177, %v4193
    %v4210 = vmax.f32 %v4178, %v4194
    %v4211 = vmax.f32 %v4179, %v4195
    %s4212 = scalar_lea.vmem [#allocation2], 256
    %4213 = vst [vmem:[%s4212] sm:$0xff] %v4196
    %4214 = vst [vmem:[%s4212 + $0x8] sm:$0xff] %v4197
    %4215 = vst [vmem:[%s4212 + $0x10] sm:$0xff] %v4198
    %4216 = vst [vmem:[%s4212 + $0x18] sm:$0xff] %v4199
    %4217 = vst [vmem:[%s4212 + $0x20] sm:$0xff] %v4200
    %4218 = vst [vmem:[%s4212 + $0x28] sm:$0xff] %v4201
    %4219 = vst [vmem:[%s4212 + $0x30] sm:$0xff] %v4202
    %4220 = vst [vmem:[%s4212 + $0x38] sm:$0xff] %v4203
    %4221 = vst [vmem:[%s4212 + $0x40] sm:$0xff] %v4204
    %4222 = vst [vmem:[%s4212 + $0x48] sm:$0xff] %v4205
    %4223 = vst [vmem:[%s4212 + $0x50] sm:$0xff] %v4206
    %4224 = vst [vmem:[%s4212 + $0x58] sm:$0xff] %v4207
    %4225 = vst [vmem:[%s4212 + $0x60] sm:$0xff] %v4208
    %4226 = vst [vmem:[%s4212 + $0x68] sm:$0xff] %v4209
    %4227 = vst [vmem:[%s4212 + $0x70] sm:$0xff] %v4210
    %4228 = vst [vmem:[%s4212 + $0x78] sm:$0xff] %v4211
    %s4229 = scalar_lea.vmem %s0, 24
    %v4230 = vld [vmem:[%s4229] sm:$0x77]
    %4232 = vst [vmem:[#allocation1] ss:$2 sm:$0xff] %v4230
    %v4233 = vld.sshfl [vmem:[#allocation1] sm:$0xff pattern:$0x75316420]
    %v4234 = vld.sshfl [vmem:[#allocation1 + $0x8] sm:$0xff pattern:$0x75316420]
    %4237 = vrot.lane.b32.xlu0 %v4233, 17
    %v4238 = vpop.permute.xlu0 %4237
    %4239 = vrot.lane.b32.xlu0 %v4234, 17
    %v4240 = vpop.permute.xlu0 %4239
    %v4241 = vsel %vm57, %v4238, %v4240
    %v4242 = vsel %vm57, %v4240, %v4238
    %v4243 = vsel %vm62, %v4242, 0.0
    %v4244 = vsel %vm63, %v4241, 0.0
    %v4245 = vld [vmem:[%s1] sm:$0xff]
    %v4246 = vld [vmem:[%s1 + $0x8] sm:$0xff]
    %v4247 = vld [vmem:[%s1 + $0x10] sm:$0xff]
    %v4248 = vld [vmem:[%s1 + $0x18] sm:$0xff]
    %v4249 = vld [vmem:[%s1 + $0x20] sm:$0xff]
    %v4250 = vld [vmem:[%s1 + $0x28] sm:$0xff]
    %v4251 = vld [vmem:[%s1 + $0x30] sm:$0xff]
    %v4252 = vld [vmem:[%s1 + $0x38] sm:$0xff]
    %4253 = vst [vmem:[#allocation1] ss:$2 sm:$0xff] %v4230
    %v4254 = vld.sshfl [vmem:[#allocation1] sm:$0xff pattern:$0x75316420]
    %v4255 = vld.sshfl [vmem:[#allocation1 + $0x8] sm:$0xff pattern:$0x75316420]
    %4258 = vrot.lane.b32.xlu0 %v4254, 16
    %v4259 = vpop.permute.xlu0 %4258
    %4260 = vrot.lane.b32.xlu0 %v4255, 16
    %v4261 = vpop.permute.xlu0 %4260
    %v4262 = vsel %vm83, %v4259, %v4261
    %v4263 = vsel %vm83, %v4261, %v4259
    %v4264 = vsel %vm88, %v4263, 0.0
    %v4265 = vsel %vm89, %v4262, 0.0
    %v4266 = vld [vmem:[%s92] sm:$0xff]
    %v4267 = vld [vmem:[%s92 + $0x8] sm:$0xff]
    %v4268 = vld [vmem:[%s92 + $0x10] sm:$0xff]
    %v4269 = vld [vmem:[%s92 + $0x18] sm:$0xff]
    %v4270 = vld [vmem:[%s92 + $0x20] sm:$0xff]
    %v4271 = vld [vmem:[%s92 + $0x28] sm:$0xff]
    %v4272 = vld [vmem:[%s92 + $0x30] sm:$0xff]
    %v4273 = vld [vmem:[%s92 + $0x38] sm:$0xff]
    %v4275 = vsel %vm101, %v4266, 0
    %v4278 = vsel %vm101, %v4267, 0
    %v4281 = vsel %vm101, %v4268, 0
    %v4284 = vsel %vm101, %v4269, 0
    %v4287 = vsel %vm101, %v4270, 0
    %v4290 = vsel %vm101, %v4271, 0
    %v4293 = vsel %vm101, %v4272, 0
    %v4296 = vsel %vm101, %v4273, 0
    %v4299 = vsel %vm126, %v4264, 0
    %v4302 = vsel %vm126, %v4265, 0
    %4304 = vmatpush.msra.mxu0 0.0
    %4305 = vmatpush.msra.mxu0 0.0
    %4306 = vmatpush.msra.mxu0 0.0
    %4307 = vmatpush.msra.mxu0 0.0
    %4308 = vmatpush.msra.mxu0 0.0
    %4309 = vmatpush.msra.mxu0 0.0
    %4310 = vmatpush.msra.mxu0 0.0
    %4311 = vmatpush.msra.mxu0 0.0
    %4312 = vmatpush.msra.mxu0 0.0
    %4313 = vmatpush.msra.mxu0 0.0
    %4314 = vmatpush.msra.mxu0 0.0
    %4315 = vmatpush.msra.mxu0 0.0
    %4316 = vmatpush.msra.mxu0 0.0
    %4317 = vmatpush.msra.mxu0 0.0
    %4318 = vmatpush.msra.mxu0 0.0
    %4319 = vmatpush.msra.mxu0 %v4299
    %4320 = vmatmul.f32.gmra.mxu0 %v4275
    %v4321 = vpop.f32.mrf.mxu0
    %v4322 = vadd.f32 0.0, %v4321
    %4323 = vmatmul.f32.gmra.mxu0 %v4278
    %v4324 = vpop.f32.mrf.mxu0
    %v4325 = vadd.f32 0.0, %v4324
    %4326 = vmatmul.f32.gmra.mxu0 %v4281
    %v4327 = vpop.f32.mrf.mxu0
    %v4328 = vadd.f32 0.0, %v4327
    %4329 = vmatmul.f32.gmra.mxu0 %v4284
    %v4330 = vpop.f32.mrf.mxu0
    %v4331 = vadd.f32 0.0, %v4330
    %4332 = vmatmul.f32.gmra.mxu0 %v4287
    %v4333 = vpop.f32.mrf.mxu0
    %v4334 = vadd.f32 0.0, %v4333
    %4335 = vmatmul.f32.gmra.mxu0 %v4290
    %v4336 = vpop.f32.mrf.mxu0
    %v4337 = vadd.f32 0.0, %v4336
    %4338 = vmatmul.f32.gmra.mxu0 %v4293
    %v4339 = vpop.f32.mrf.mxu0
    %v4340 = vadd.f32 0.0, %v4339
    %4341 = vmatmul.f32.gmra.mxu0 %v4296
    %v4342 = vpop.f32.mrf.mxu0
    %v4343 = vadd.f32 0.0, %v4342
    %4344 = vdwg.mxu0
    %4345 = vmatpush.msra.mxu0 0.0
    %4346 = vmatpush.msra.mxu0 0.0
    %4347 = vmatpush.msra.mxu0 0.0
    %4348 = vmatpush.msra.mxu0 0.0
    %4349 = vmatpush.msra.mxu0 0.0
    %4350 = vmatpush.msra.mxu0 0.0
    %4351 = vmatpush.msra.mxu0 0.0
    %4352 = vmatpush.msra.mxu0 0.0
    %4353 = vmatpush.msra.mxu0 0.0
    %4354 = vmatpush.msra.mxu0 0.0
    %4355 = vmatpush.msra.mxu0 0.0
    %4356 = vmatpush.msra.mxu0 0.0
    %4357 = vmatpush.msra.mxu0 0.0
    %4358 = vmatpush.msra.mxu0 0.0
    %4359 = vmatpush.msra.mxu0 0.0
    %4360 = vmatpush.msra.mxu0 %v4302
    %4361 = vmatmul.f32.gmra.mxu0 %v4275
    %v4362 = vpop.f32.mrf.mxu0
    %v4363 = vadd.f32 0.0, %v4362
    %4364 = vmatmul.f32.gmra.mxu0 %v4278
    %v4365 = vpop.f32.mrf.mxu0
    %v4366 = vadd.f32 0.0, %v4365
    %4367 = vmatmul.f32.gmra.mxu0 %v4281
    %v4368 = vpop.f32.mrf.mxu0
    %v4369 = vadd.f32 0.0, %v4368
    %4370 = vmatmul.f32.gmra.mxu0 %v4284
    %v4371 = vpop.f32.mrf.mxu0
    %v4372 = vadd.f32 0.0, %v4371
    %4373 = vmatmul.f32.gmra.mxu0 %v4287
    %v4374 = vpop.f32.mrf.mxu0
    %v4375 = vadd.f32 0.0, %v4374
    %4376 = vmatmul.f32.gmra.mxu0 %v4290
    %v4377 = vpop.f32.mrf.mxu0
    %v4378 = vadd.f32 0.0, %v4377
    %4379 = vmatmul.f32.gmra.mxu0 %v4293
    %v4380 = vpop.f32.mrf.mxu0
    %v4381 = vadd.f32 0.0, %v4380
    %4382 = vmatmul.f32.gmra.mxu0 %v4296
    %v4383 = vpop.f32.mrf.mxu0
    %v4384 = vadd.f32 0.0, %v4383
    %4385 = vdwg.mxu0
    %v4387 = vsel %vm101, %v4245, 0
    %v4390 = vsel %vm101, %v4246, 0
    %v4393 = vsel %vm101, %v4247, 0
    %v4396 = vsel %vm101, %v4248, 0
    %v4399 = vsel %vm101, %v4249, 0
    %v4402 = vsel %vm101, %v4250, 0
    %v4405 = vsel %vm101, %v4251, 0
    %v4408 = vsel %vm101, %v4252, 0
    %v4411 = vsel %vm126, %v4243, 0
    %v4414 = vsel %vm126, %v4244, 0
    %4416 = vmatpush.msra.mxu0 0.0
    %4417 = vmatpush.msra.mxu0 0.0
    %4418 = vmatpush.msra.mxu0 0.0
    %4419 = vmatpush.msra.mxu0 0.0
    %4420 = vmatpush.msra.mxu0 0.0
    %4421 = vmatpush.msra.mxu0 0.0
    %4422 = vmatpush.msra.mxu0 0.0
    %4423 = vmatpush.msra.mxu0 0.0
    %4424 = vmatpush.msra.mxu0 0.0
    %4425 = vmatpush.msra.mxu0 0.0
    %4426 = vmatpush.msra.mxu0 0.0
    %4427 = vmatpush.msra.mxu0 0.0
    %4428 = vmatpush.msra.mxu0 0.0
    %4429 = vmatpush.msra.mxu0 0.0
    %4430 = vmatpush.msra.mxu0 0.0
    %4431 = vmatpush.msra.mxu0 %v4411
    %4432 = vmatmul.f32.gmra.mxu0 %v4387
    %v4433 = vpop.f32.mrf.mxu0
    %v4434 = vadd.f32 %v4322, %v4433
    %4435 = vmatmul.f32.gmra.mxu0 %v4390
    %v4436 = vpop.f32.mrf.mxu0
    %v4437 = vadd.f32 %v4325, %v4436
    %4438 = vmatmul.f32.gmra.mxu0 %v4393
    %v4439 = vpop.f32.mrf.mxu0
    %v4440 = vadd.f32 %v4328, %v4439
    %4441 = vmatmul.f32.gmra.mxu0 %v4396
    %v4442 = vpop.f32.mrf.mxu0
    %v4443 = vadd.f32 %v4331, %v4442
    %4444 = vmatmul.f32.gmra.mxu0 %v4399
    %v4445 = vpop.f32.mrf.mxu0
    %v4446 = vadd.f32 %v4334, %v4445
    %4447 = vmatmul.f32.gmra.mxu0 %v4402
    %v4448 = vpop.f32.mrf.mxu0
    %v4449 = vadd.f32 %v4337, %v4448
    %4450 = vmatmul.f32.gmra.mxu0 %v4405
    %v4451 = vpop.f32.mrf.mxu0
    %v4452 = vadd.f32 %v4340, %v4451
    %4453 = vmatmul.f32.gmra.mxu0 %v4408
    %v4454 = vpop.f32.mrf.mxu0
    %v4455 = vadd.f32 %v4343, %v4454
    %4456 = vdwg.mxu0
    %4457 = vmatpush.msra.mxu0 0.0
    %4458 = vmatpush.msra.mxu0 0.0
    %4459 = vmatpush.msra.mxu0 0.0
    %4460 = vmatpush.msra.mxu0 0.0
    %4461 = vmatpush.msra.mxu0 0.0
    %4462 = vmatpush.msra.mxu0 0.0
    %4463 = vmatpush.msra.mxu0 0.0
    %4464 = vmatpush.msra.mxu0 0.0
    %4465 = vmatpush.msra.mxu0 0.0
    %4466 = vmatpush.msra.mxu0 0.0
    %4467 = vmatpush.msra.mxu0 0.0
    %4468 = vmatpush.msra.mxu0 0.0
    %4469 = vmatpush.msra.mxu0 0.0
    %4470 = vmatpush.msra.mxu0 0.0
    %4471 = vmatpush.msra.mxu0 0.0
    %4472 = vmatpush.msra.mxu0 %v4414
    %4473 = vmatmul.f32.gmra.mxu0 %v4387
    %v4474 = vpop.f32.mrf.mxu0
    %v4475 = vadd.f32 %v4363, %v4474
    %4476 = vmatmul.f32.gmra.mxu0 %v4390
    %v4477 = vpop.f32.mrf.mxu0
    %v4478 = vadd.f32 %v4366, %v4477
    %4479 = vmatmul.f32.gmra.mxu0 %v4393
    %v4480 = vpop.f32.mrf.mxu0
    %v4481 = vadd.f32 %v4369, %v4480
    %4482 = vmatmul.f32.gmra.mxu0 %v4396
    %v4483 = vpop.f32.mrf.mxu0
    %v4484 = vadd.f32 %v4372, %v4483
    %4485 = vmatmul.f32.gmra.mxu0 %v4399
    %v4486 = vpop.f32.mrf.mxu0
    %v4487 = vadd.f32 %v4375, %v4486
    %4488 = vmatmul.f32.gmra.mxu0 %v4402
    %v4489 = vpop.f32.mrf.mxu0
    %v4490 = vadd.f32 %v4378, %v4489
    %4491 = vmatmul.f32.gmra.mxu0 %v4405
    %v4492 = vpop.f32.mrf.mxu0
    %v4493 = vadd.f32 %v4381, %v4492
    %4494 = vmatmul.f32.gmra.mxu0 %v4408
    %v4495 = vpop.f32.mrf.mxu0
    %v4496 = vadd.f32 %v4384, %v4495
    %4497 = vdwg.mxu0
    %4498 = vst [vmem:[#allocation1] ss:$2 sm:$0xff] %v4230
    %v4499 = vld.sshfl [vmem:[#allocation1] sm:$0xff pattern:$0x75316420]
    %v4500 = vld.sshfl [vmem:[#allocation1 + $0x8] sm:$0xff pattern:$0x75316420]
    %4503 = vrot.lane.b32.xlu0 %v4499, 15
    %v4504 = vpop.permute.xlu0 %4503
    %4505 = vrot.lane.b32.xlu0 %v4500, 15
    %v4506 = vpop.permute.xlu0 %4505
    %v4507 = vsel %vm336, %v4504, %v4506
    %v4508 = vsel %vm336, %v4506, %v4504
    %v4509 = vsel %vm341, %v4508, 0.0
    %v4510 = vsel %vm342, %v4507, 0.0
    %v4511 = vld [vmem:[%s345] sm:$0xff]
    %v4512 = vld [vmem:[%s345 + $0x8] sm:$0xff]
    %v4513 = vld [vmem:[%s345 + $0x10] sm:$0xff]
    %v4514 = vld [vmem:[%s345 + $0x18] sm:$0xff]
    %v4515 = vld [vmem:[%s345 + $0x20] sm:$0xff]
    %v4516 = vld [vmem:[%s345 + $0x28] sm:$0xff]
    %v4517 = vld [vmem:[%s345 + $0x30] sm:$0xff]
    %v4518 = vld [vmem:[%s345 + $0x38] sm:$0xff]
    %v4520 = vsel %vm101, %v4511, 0
    %v4523 = vsel %vm101, %v4512, 0
    %v4526 = vsel %vm101, %v4513, 0
    %v4529 = vsel %vm101, %v4514, 0
    %v4532 = vsel %vm101, %v4515, 0
    %v4535 = vsel %vm101, %v4516, 0
    %v4538 = vsel %vm101, %v4517, 0
    %v4541 = vsel %vm101, %v4518, 0
    %v4544 = vsel %vm126, %v4509, 0
    %v4547 = vsel %vm126, %v4510, 0
    %4549 = vmatpush.msra.mxu0 0.0
    %4550 = vmatpush.msra.mxu0 0.0
    %4551 = vmatpush.msra.mxu0 0.0
    %4552 = vmatpush.msra.mxu0 0.0
    %4553 = vmatpush.msra.mxu0 0.0
    %4554 = vmatpush.msra.mxu0 0.0
    %4555 = vmatpush.msra.mxu0 0.0
    %4556 = vmatpush.msra.mxu0 0.0
    %4557 = vmatpush.msra.mxu0 0.0
    %4558 = vmatpush.msra.mxu0 0.0
    %4559 = vmatpush.msra.mxu0 0.0
    %4560 = vmatpush.msra.mxu0 0.0
    %4561 = vmatpush.msra.mxu0 0.0
    %4562 = vmatpush.msra.mxu0 0.0
    %4563 = vmatpush.msra.mxu0 0.0
    %4564 = vmatpush.msra.mxu0 %v4544
    %4565 = vmatmul.f32.gmra.mxu0 %v4520
    %v4566 = vpop.f32.mrf.mxu0
    %v4567 = vadd.f32 0.0, %v4566
    %4568 = vmatmul.f32.gmra.mxu0 %v4523
    %v4569 = vpop.f32.mrf.mxu0
    %v4570 = vadd.f32 0.0, %v4569
    %4571 = vmatmul.f32.gmra.mxu0 %v4526
    %v4572 = vpop.f32.mrf.mxu0
    %v4573 = vadd.f32 0.0, %v4572
    %4574 = vmatmul.f32.gmra.mxu0 %v4529
    %v4575 = vpop.f32.mrf.mxu0
    %v4576 = vadd.f32 0.0, %v4575
    %4577 = vmatmul.f32.gmra.mxu0 %v4532
    %v4578 = vpop.f32.mrf.mxu0
    %v4579 = vadd.f32 0.0, %v4578
    %4580 = vmatmul.f32.gmra.mxu0 %v4535
    %v4581 = vpop.f32.mrf.mxu0
    %v4582 = vadd.f32 0.0, %v4581
    %4583 = vmatmul.f32.gmra.mxu0 %v4538
    %v4584 = vpop.f32.mrf.mxu0
    %v4585 = vadd.f32 0.0, %v4584
    %4586 = vmatmul.f32.gmra.mxu0 %v4541
    %v4587 = vpop.f32.mrf.mxu0
    %v4588 = vadd.f32 0.0, %v4587
    %4589 = vdwg.mxu0
    %4590 = vmatpush.msra.mxu0 0.0
    %4591 = vmatpush.msra.mxu0 0.0
    %4592 = vmatpush.msra.mxu0 0.0
    %4593 = vmatpush.msra.mxu0 0.0
    %4594 = vmatpush.msra.mxu0 0.0
    %4595 = vmatpush.msra.mxu0 0.0
    %4596 = vmatpush.msra.mxu0 0.0
    %4597 = vmatpush.msra.mxu0 0.0
    %4598 = vmatpush.msra.mxu0 0.0
    %4599 = vmatpush.msra.mxu0 0.0
    %4600 = vmatpush.msra.mxu0 0.0
    %4601 = vmatpush.msra.mxu0 0.0
    %4602 = vmatpush.msra.mxu0 0.0
    %4603 = vmatpush.msra.mxu0 0.0
    %4604 = vmatpush.msra.mxu0 0.0
    %4605 = vmatpush.msra.mxu0 %v4547
    %4606 = vmatmul.f32.gmra.mxu0 %v4520
    %v4607 = vpop.f32.mrf.mxu0
    %v4608 = vadd.f32 0.0, %v4607
    %4609 = vmatmul.f32.gmra.mxu0 %v4523
    %v4610 = vpop.f32.mrf.mxu0
    %v4611 = vadd.f32 0.0, %v4610
    %4612 = vmatmul.f32.gmra.mxu0 %v4526
    %v4613 = vpop.f32.mrf.mxu0
    %v4614 = vadd.f32 0.0, %v4613
    %4615 = vmatmul.f32.gmra.mxu0 %v4529
    %v4616 = vpop.f32.mrf.mxu0
    %v4617 = vadd.f32 0.0, %v4616
    %4618 = vmatmul.f32.gmra.mxu0 %v4532
    %v4619 = vpop.f32.mrf.mxu0
    %v4620 = vadd.f32 0.0, %v4619
    %4621 = vmatmul.f32.gmra.mxu0 %v4535
    %v4622 = vpop.f32.mrf.mxu0
    %v4623 = vadd.f32 0.0, %v4622
    %4624 = vmatmul.f32.gmra.mxu0 %v4538
    %v4625 = vpop.f32.mrf.mxu0
    %v4626 = vadd.f32 0.0, %v4625
    %4627 = vmatmul.f32.gmra.mxu0 %v4541
    %v4628 = vpop.f32.mrf.mxu0
    %v4629 = vadd.f32 0.0, %v4628
    %4630 = vdwg.mxu0
    %v4631 = vadd.f32 %v4434, %v4567
    %v4632 = vadd.f32 %v4475, %v4608
    %v4633 = vadd.f32 %v4437, %v4570
    %v4634 = vadd.f32 %v4478, %v4611
    %v4635 = vadd.f32 %v4440, %v4573
    %v4636 = vadd.f32 %v4481, %v4614
    %v4637 = vadd.f32 %v4443, %v4576
    %v4638 = vadd.f32 %v4484, %v4617
    %v4639 = vadd.f32 %v4446, %v4579
    %v4640 = vadd.f32 %v4487, %v4620
    %v4641 = vadd.f32 %v4449, %v4582
    %v4642 = vadd.f32 %v4490, %v4623
    %v4643 = vadd.f32 %v4452, %v4585
    %v4644 = vadd.f32 %v4493, %v4626
    %v4645 = vadd.f32 %v4455, %v4588
    %v4646 = vadd.f32 %v4496, %v4629
    %4647 = vst [vmem:[#allocation1] ss:$2 sm:$0xff] %v4230
    %v4648 = vld.sshfl [vmem:[#allocation1] sm:$0xff pattern:$0x75316420]
    %v4649 = vld.sshfl [vmem:[#allocation1 + $0x8] sm:$0xff pattern:$0x75316420]
    %4652 = vrot.lane.b32.xlu0 %v4648, 1
    %v4653 = vpop.permute.xlu0 %4652
    %4654 = vrot.lane.b32.xlu0 %v4649, 1
    %v4655 = vpop.permute.xlu0 %4654
    %v4656 = vsel %vm491, %v4653, %v4655
    %v4657 = vsel %vm491, %v4655, %v4653
    %v4658 = vsel %vm496, %v4657, 0.0
    %v4659 = vsel %vm497, %v4656, 0.0
    %v4660 = vld [vmem:[%s500] sm:$0xff]
    %v4661 = vld [vmem:[%s500 + $0x8] sm:$0xff]
    %v4662 = vld [vmem:[%s500 + $0x10] sm:$0xff]
    %v4663 = vld [vmem:[%s500 + $0x18] sm:$0xff]
    %v4664 = vld [vmem:[%s500 + $0x20] sm:$0xff]
    %v4665 = vld [vmem:[%s500 + $0x28] sm:$0xff]
    %v4666 = vld [vmem:[%s500 + $0x30] sm:$0xff]
    %v4667 = vld [vmem:[%s500 + $0x38] sm:$0xff]
    %v4669 = vsel %vm101, %v4660, 0
    %v4672 = vsel %vm101, %v4661, 0
    %v4675 = vsel %vm101, %v4662, 0
    %v4678 = vsel %vm101, %v4663, 0
    %v4681 = vsel %vm101, %v4664, 0
    %v4684 = vsel %vm101, %v4665, 0
    %v4687 = vsel %vm101, %v4666, 0
    %v4690 = vsel %vm101, %v4667, 0
    %v4693 = vsel %vm126, %v4658, 0
    %v4696 = vsel %vm126, %v4659, 0
    %4698 = vmatpush.msra.mxu0 0.0
    %4699 = vmatpush.msra.mxu0 0.0
    %4700 = vmatpush.msra.mxu0 0.0
    %4701 = vmatpush.msra.mxu0 0.0
    %4702 = vmatpush.msra.mxu0 0.0
    %4703 = vmatpush.msra.mxu0 0.0
    %4704 = vmatpush.msra.mxu0 0.0
    %4705 = vmatpush.msra.mxu0 0.0
    %4706 = vmatpush.msra.mxu0 0.0
    %4707 = vmatpush.msra.mxu0 0.0
    %4708 = vmatpush.msra.mxu0 0.0
    %4709 = vmatpush.msra.mxu0 0.0
    %4710 = vmatpush.msra.mxu0 0.0
    %4711 = vmatpush.msra.mxu0 0.0
    %4712 = vmatpush.msra.mxu0 0.0
    %4713 = vmatpush.msra.mxu0 %v4693
    %4714 = vmatmul.f32.gmra.mxu0 %v4669
    %v4715 = vpop.f32.mrf.mxu0
    %v4716 = vadd.f32 0.0, %v4715
    %4717 = vmatmul.f32.gmra.mxu0 %v4672
    %v4718 = vpop.f32.mrf.mxu0
    %v4719 = vadd.f32 0.0, %v4718
    %4720 = vmatmul.f32.gmra.mxu0 %v4675
    %v4721 = vpop.f32.mrf.mxu0
    %v4722 = vadd.f32 0.0, %v4721
    %4723 = vmatmul.f32.gmra.mxu0 %v4678
    %v4724 = vpop.f32.mrf.mxu0
    %v4725 = vadd.f32 0.0, %v4724
    %4726 = vmatmul.f32.gmra.mxu0 %v4681
    %v4727 = vpop.f32.mrf.mxu0
    %v4728 = vadd.f32 0.0, %v4727
    %4729 = vmatmul.f32.gmra.mxu0 %v4684
    %v4730 = vpop.f32.mrf.mxu0
    %v4731 = vadd.f32 0.0, %v4730
    %4732 = vmatmul.f32.gmra.mxu0 %v4687
    %v4733 = vpop.f32.mrf.mxu0
    %v4734 = vadd.f32 0.0, %v4733
    %4735 = vmatmul.f32.gmra.mxu0 %v4690
    %v4736 = vpop.f32.mrf.mxu0
    %v4737 = vadd.f32 0.0, %v4736
    %4738 = vdwg.mxu0
    %4739 = vmatpush.msra.mxu0 0.0
    %4740 = vmatpush.msra.mxu0 0.0
    %4741 = vmatpush.msra.mxu0 0.0
    %4742 = vmatpush.msra.mxu0 0.0
    %4743 = vmatpush.msra.mxu0 0.0
    %4744 = vmatpush.msra.mxu0 0.0
    %4745 = vmatpush.msra.mxu0 0.0
    %4746 = vmatpush.msra.mxu0 0.0
    %4747 = vmatpush.msra.mxu0 0.0
    %4748 = vmatpush.msra.mxu0 0.0
    %4749 = vmatpush.msra.mxu0 0.0
    %4750 = vmatpush.msra.mxu0 0.0
    %4751 = vmatpush.msra.mxu0 0.0
    %4752 = vmatpush.msra.mxu0 0.0
    %4753 = vmatpush.msra.mxu0 0.0
    %4754 = vmatpush.msra.mxu0 %v4696
    %4755 = vmatmul.f32.gmra.mxu0 %v4669
    %v4756 = vpop.f32.mrf.mxu0
    %v4757 = vadd.f32 0.0, %v4756
    %4758 = vmatmul.f32.gmra.mxu0 %v4672
    %v4759 = vpop.f32.mrf.mxu0
    %v4760 = vadd.f32 0.0, %v4759
    %4761 = vmatmul.f32.gmra.mxu0 %v4675
    %v4762 = vpop.f32.mrf.mxu0
    %v4763 = vadd.f32 0.0, %v4762
    %4764 = vmatmul.f32.gmra.mxu0 %v4678
    %v4765 = vpop.f32.mrf.mxu0
    %v4766 = vadd.f32 0.0, %v4765
    %4767 = vmatmul.f32.gmra.mxu0 %v4681
    %v4768 = vpop.f32.mrf.mxu0
    %v4769 = vadd.f32 0.0, %v4768
    %4770 = vmatmul.f32.gmra.mxu0 %v4684
    %v4771 = vpop.f32.mrf.mxu0
    %v4772 = vadd.f32 0.0, %v4771
    %4773 = vmatmul.f32.gmra.mxu0 %v4687
    %v4774 = vpop.f32.mrf.mxu0
    %v4775 = vadd.f32 0.0, %v4774
    %4776 = vmatmul.f32.gmra.mxu0 %v4690
    %v4777 = vpop.f32.mrf.mxu0
    %v4778 = vadd.f32 0.0, %v4777
    %4779 = vdwg.mxu0
    %v4780 = vadd.f32 %v4631, %v4716
    %v4781 = vadd.f32 %v4632, %v4757
    %v4782 = vadd.f32 %v4633, %v4719
    %v4783 = vadd.f32 %v4634, %v4760
    %v4784 = vadd.f32 %v4635, %v4722
    %v4785 = vadd.f32 %v4636, %v4763
    %v4786 = vadd.f32 %v4637, %v4725
    %v4787 = vadd.f32 %v4638, %v4766
    %v4788 = vadd.f32 %v4639, %v4728
    %v4789 = vadd.f32 %v4640, %v4769
    %v4790 = vadd.f32 %v4641, %v4731
    %v4791 = vadd.f32 %v4642, %v4772
    %v4792 = vadd.f32 %v4643, %v4734
    %v4793 = vadd.f32 %v4644, %v4775
    %v4794 = vadd.f32 %v4645, %v4737
    %v4795 = vadd.f32 %v4646, %v4778
    %v4796 = vld [vmem:[%s637] sm:$0xff]
    %v4797 = vld [vmem:[%s637 + $0x8] sm:$0xff]
    %v4798 = vld [vmem:[%s637 + $0x10] sm:$0xff]
    %v4799 = vld [vmem:[%s637 + $0x18] sm:$0xff]
    %v4800 = vld [vmem:[%s637 + $0x20] sm:$0xff]
    %v4801 = vld [vmem:[%s637 + $0x28] sm:$0xff]
    %v4802 = vld [vmem:[%s637 + $0x30] sm:$0xff]
    %v4803 = vld [vmem:[%s637 + $0x38] sm:$0xff]
    %4804 = vst [vmem:[#allocation1] ss:$2 sm:$0xff] %v4230
    %v4805 = vld.sshfl [vmem:[#allocation1] sm:$0xff pattern:$0x75316420]
    %v4806 = vld.sshfl [vmem:[#allocation1 + $0x8] sm:$0xff pattern:$0x75316420]
    %v4808 = vsel %vm101, %v4796, 0
    %v4811 = vsel %vm101, %v4797, 0
    %v4814 = vsel %vm101, %v4798, 0
    %v4817 = vsel %vm101, %v4799, 0
    %v4820 = vsel %vm101, %v4800, 0
    %v4823 = vsel %vm101, %v4801, 0
    %v4826 = vsel %vm101, %v4802, 0
    %v4829 = vsel %vm101, %v4803, 0
    %v4831 = vsel %vm126, %v4805, 0
    %v4833 = vsel %vm126, %v4806, 0
    %4835 = vmatpush.msra.mxu0 0.0
    %4836 = vmatpush.msra.mxu0 0.0
    %4837 = vmatpush.msra.mxu0 0.0
    %4838 = vmatpush.msra.mxu0 0.0
    %4839 = vmatpush.msra.mxu0 0.0
    %4840 = vmatpush.msra.mxu0 0.0
    %4841 = vmatpush.msra.mxu0 0.0
    %4842 = vmatpush.msra.mxu0 0.0
    %4843 = vmatpush.msra.mxu0 0.0
    %4844 = vmatpush.msra.mxu0 0.0
    %4845 = vmatpush.msra.mxu0 0.0
    %4846 = vmatpush.msra.mxu0 0.0
    %4847 = vmatpush.msra.mxu0 0.0
    %4848 = vmatpush.msra.mxu0 0.0
    %4849 = vmatpush.msra.mxu0 0.0
    %4850 = vmatpush.msra.mxu0 %v4831
    %4851 = vmatmul.f32.gmra.mxu0 %v4808
    %v4852 = vpop.f32.mrf.mxu0
    %v4853 = vadd.f32 0.0, %v4852
    %4854 = vmatmul.f32.gmra.mxu0 %v4811
    %v4855 = vpop.f32.mrf.mxu0
    %v4856 = vadd.f32 0.0, %v4855
    %4857 = vmatmul.f32.gmra.mxu0 %v4814
    %v4858 = vpop.f32.mrf.mxu0
    %v4859 = vadd.f32 0.0, %v4858
    %4860 = vmatmul.f32.gmra.mxu0 %v4817
    %v4861 = vpop.f32.mrf.mxu0
    %v4862 = vadd.f32 0.0, %v4861
    %4863 = vmatmul.f32.gmra.mxu0 %v4820
    %v4864 = vpop.f32.mrf.mxu0
    %v4865 = vadd.f32 0.0, %v4864
    %4866 = vmatmul.f32.gmra.mxu0 %v4823
    %v4867 = vpop.f32.mrf.mxu0
    %v4868 = vadd.f32 0.0, %v4867
    %4869 = vmatmul.f32.gmra.mxu0 %v4826
    %v4870 = vpop.f32.mrf.mxu0
    %v4871 = vadd.f32 0.0, %v4870
    %4872 = vmatmul.f32.gmra.mxu0 %v4829
    %v4873 = vpop.f32.mrf.mxu0
    %v4874 = vadd.f32 0.0, %v4873
    %4875 = vdwg.mxu0
    %4876 = vmatpush.msra.mxu0 0.0
    %4877 = vmatpush.msra.mxu0 0.0
    %4878 = vmatpush.msra.mxu0 0.0
    %4879 = vmatpush.msra.mxu0 0.0
    %4880 = vmatpush.msra.mxu0 0.0
    %4881 = vmatpush.msra.mxu0 0.0
    %4882 = vmatpush.msra.mxu0 0.0
    %4883 = vmatpush.msra.mxu0 0.0
    %4884 = vmatpush.msra.mxu0 0.0
    %4885 = vmatpush.msra.mxu0 0.0
    %4886 = vmatpush.msra.mxu0 0.0
    %4887 = vmatpush.msra.mxu0 0.0
    %4888 = vmatpush.msra.mxu0 0.0
    %4889 = vmatpush.msra.mxu0 0.0
    %4890 = vmatpush.msra.mxu0 0.0
    %4891 = vmatpush.msra.mxu0 %v4833
    %4892 = vmatmul.f32.gmra.mxu0 %v4808
    %v4893 = vpop.f32.mrf.mxu0
    %v4894 = vadd.f32 0.0, %v4893
    %4895 = vmatmul.f32.gmra.mxu0 %v4811
    %v4896 = vpop.f32.mrf.mxu0
    %v4897 = vadd.f32 0.0, %v4896
    %4898 = vmatmul.f32.gmra.mxu0 %v4814
    %v4899 = vpop.f32.mrf.mxu0
    %v4900 = vadd.f32 0.0, %v4899
    %4901 = vmatmul.f32.gmra.mxu0 %v4817
    %v4902 = vpop.f32.mrf.mxu0
    %v4903 = vadd.f32 0.0, %v4902
    %4904 = vmatmul.f32.gmra.mxu0 %v4820
    %v4905 = vpop.f32.mrf.mxu0
    %v4906 = vadd.f32 0.0, %v4905
    %4907 = vmatmul.f32.gmra.mxu0 %v4823
    %v4908 = vpop.f32.mrf.mxu0
    %v4909 = vadd.f32 0.0, %v4908
    %4910 = vmatmul.f32.gmra.mxu0 %v4826
    %v4911 = vpop.f32.mrf.mxu0
    %v4912 = vadd.f32 0.0, %v4911
    %4913 = vmatmul.f32.gmra.mxu0 %v4829
    %v4914 = vpop.f32.mrf.mxu0
    %v4915 = vadd.f32 0.0, %v4914
    %4916 = vdwg.mxu0
    %v4917 = vadd.f32 %v4780, %v4853
    %v4918 = vadd.f32 %v4781, %v4894
    %v4919 = vadd.f32 %v4782, %v4856
    %v4920 = vadd.f32 %v4783, %v4897
    %v4921 = vadd.f32 %v4784, %v4859
    %v4922 = vadd.f32 %v4785, %v4900
    %v4923 = vadd.f32 %v4786, %v4862
    %v4924 = vadd.f32 %v4787, %v4903
    %v4925 = vadd.f32 %v4788, %v4865
    %v4926 = vadd.f32 %v4789, %v4906
    %v4927 = vadd.f32 %v4790, %v4868
    %v4928 = vadd.f32 %v4791, %v4909
    %v4929 = vadd.f32 %v4792, %v4871
    %v4930 = vadd.f32 %v4793, %v4912
    %v4931 = vadd.f32 %v4794, %v4874
    %v4932 = vadd.f32 %v4795, %v4915
    %4933 = vst [vmem:[#allocation1] ss:$2 sm:$0xff] %v4230
    %v4934 = vld.sshfl [vmem:[#allocation1] sm:$0xff pattern:$0x75316420]
    %v4935 = vld.sshfl [vmem:[#allocation1 + $0x8] sm:$0xff pattern:$0x75316420]
    %4938 = vrot.lane.b32.xlu0 %v4934, 127
    %v4939 = vpop.permute.xlu0 %4938
    %4940 = vrot.lane.b32.xlu0 %v4935, 127
    %v4941 = vpop.permute.xlu0 %4940
    %v4942 = vsel %vm784, %v4939, %v4941
    %v4943 = vsel %vm784, %v4941, %v4939
    %v4944 = vsel %vm789, %v4942, 0.0
    %v4945 = vsel %vm790, %v4943, 0.0
    %v4946 = vld [vmem:[%s793] sm:$0xff]
    %v4947 = vld [vmem:[%s793 + $0x8] sm:$0xff]
    %v4948 = vld [vmem:[%s793 + $0x10] sm:$0xff]
    %v4949 = vld [vmem:[%s793 + $0x18] sm:$0xff]
    %v4950 = vld [vmem:[%s793 + $0x20] sm:$0xff]
    %v4951 = vld [vmem:[%s793 + $0x28] sm:$0xff]
    %v4952 = vld [vmem:[%s793 + $0x30] sm:$0xff]
    %v4953 = vld [vmem:[%s793 + $0x38] sm:$0xff]
    %v4955 = vsel %vm101, %v4946, 0
    %v4958 = vsel %vm101, %v4947, 0
    %v4961 = vsel %vm101, %v4948, 0
    %v4964 = vsel %vm101, %v4949, 0
    %v4967 = vsel %vm101, %v4950, 0
    %v4970 = vsel %vm101, %v4951, 0
    %v4973 = vsel %vm101, %v4952, 0
    %v4976 = vsel %vm101, %v4953, 0
    %v4979 = vsel %vm126, %v4944, 0
    %v4982 = vsel %vm126, %v4945, 0
    %4984 = vmatpush.msra.mxu0 0.0
    %4985 = vmatpush.msra.mxu0 0.0
    %4986 = vmatpush.msra.mxu0 0.0
    %4987 = vmatpush.msra.mxu0 0.0
    %4988 = vmatpush.msra.mxu0 0.0
    %4989 = vmatpush.msra.mxu0 0.0
    %4990 = vmatpush.msra.mxu0 0.0
    %4991 = vmatpush.msra.mxu0 0.0
    %4992 = vmatpush.msra.mxu0 0.0
    %4993 = vmatpush.msra.mxu0 0.0
    %4994 = vmatpush.msra.mxu0 0.0
    %4995 = vmatpush.msra.mxu0 0.0
    %4996 = vmatpush.msra.mxu0 0.0
    %4997 = vmatpush.msra.mxu0 0.0
    %4998 = vmatpush.msra.mxu0 0.0
    %4999 = vmatpush.msra.mxu0 %v4979
    %5000 = vmatmul.f32.gmra.mxu0 %v4955
    %v5001 = vpop.f32.mrf.mxu0
    %v5002 = vadd.f32 0.0, %v5001
    %5003 = vmatmul.f32.gmra.mxu0 %v4958
    %v5004 = vpop.f32.mrf.mxu0
    %v5005 = vadd.f32 0.0, %v5004
    %5006 = vmatmul.f32.gmra.mxu0 %v4961
    %v5007 = vpop.f32.mrf.mxu0
    %v5008 = vadd.f32 0.0, %v5007
    %5009 = vmatmul.f32.gmra.mxu0 %v4964
    %v5010 = vpop.f32.mrf.mxu0
    %v5011 = vadd.f32 0.0, %v5010
    %5012 = vmatmul.f32.gmra.mxu0 %v4967
    %v5013 = vpop.f32.mrf.mxu0
    %v5014 = vadd.f32 0.0, %v5013
    %5015 = vmatmul.f32.gmra.mxu0 %v4970
    %v5016 = vpop.f32.mrf.mxu0
    %v5017 = vadd.f32 0.0, %v5016
    %5018 = vmatmul.f32.gmra.mxu0 %v4973
    %v5019 = vpop.f32.mrf.mxu0
    %v5020 = vadd.f32 0.0, %v5019
    %5021 = vmatmul.f32.gmra.mxu0 %v4976
    %v5022 = vpop.f32.mrf.mxu0
    %v5023 = vadd.f32 0.0, %v5022
    %5024 = vdwg.mxu0
    %5025 = vmatpush.msra.mxu0 0.0
    %5026 = vmatpush.msra.mxu0 0.0
    %5027 = vmatpush.msra.mxu0 0.0
    %5028 = vmatpush.msra.mxu0 0.0
    %5029 = vmatpush.msra.mxu0 0.0
    %5030 = vmatpush.msra.mxu0 0.0
    %5031 = vmatpush.msra.mxu0 0.0
    %5032 = vmatpush.msra.mxu0 0.0
    %5033 = vmatpush.msra.mxu0 0.0
    %5034 = vmatpush.msra.mxu0 0.0
    %5035 = vmatpush.msra.mxu0 0.0
    %5036 = vmatpush.msra.mxu0 0.0
    %5037 = vmatpush.msra.mxu0 0.0
    %5038 = vmatpush.msra.mxu0 0.0
    %5039 = vmatpush.msra.mxu0 0.0
    %5040 = vmatpush.msra.mxu0 %v4982
    %5041 = vmatmul.f32.gmra.mxu0 %v4955
    %v5042 = vpop.f32.mrf.mxu0
    %v5043 = vadd.f32 0.0, %v5042
    %5044 = vmatmul.f32.gmra.mxu0 %v4958
    %v5045 = vpop.f32.mrf.mxu0
    %v5046 = vadd.f32 0.0, %v5045
    %5047 = vmatmul.f32.gmra.mxu0 %v4961
    %v5048 = vpop.f32.mrf.mxu0
    %v5049 = vadd.f32 0.0, %v5048
    %5050 = vmatmul.f32.gmra.mxu0 %v4964
    %v5051 = vpop.f32.mrf.mxu0
    %v5052 = vadd.f32 0.0, %v5051
    %5053 = vmatmul.f32.gmra.mxu0 %v4967
    %v5054 = vpop.f32.mrf.mxu0
    %v5055 = vadd.f32 0.0, %v5054
    %5056 = vmatmul.f32.gmra.mxu0 %v4970
    %v5057 = vpop.f32.mrf.mxu0
    %v5058 = vadd.f32 0.0, %v5057
    %5059 = vmatmul.f32.gmra.mxu0 %v4973
    %v5060 = vpop.f32.mrf.mxu0
    %v5061 = vadd.f32 0.0, %v5060
    %5062 = vmatmul.f32.gmra.mxu0 %v4976
    %v5063 = vpop.f32.mrf.mxu0
    %v5064 = vadd.f32 0.0, %v5063
    %5065 = vdwg.mxu0
    %v5066 = vadd.f32 %v4917, %v5002
    %v5067 = vadd.f32 %v4918, %v5043
    %v5068 = vadd.f32 %v4919, %v5005
    %v5069 = vadd.f32 %v4920, %v5046
    %v5070 = vadd.f32 %v4921, %v5008
    %v5071 = vadd.f32 %v4922, %v5049
    %v5072 = vadd.f32 %v4923, %v5011
    %v5073 = vadd.f32 %v4924, %v5052
    %v5074 = vadd.f32 %v4925, %v5014
    %v5075 = vadd.f32 %v4926, %v5055
    %v5076 = vadd.f32 %v4927, %v5017
    %v5077 = vadd.f32 %v4928, %v5058
    %v5078 = vadd.f32 %v4929, %v5020
    %v5079 = vadd.f32 %v4930, %v5061
    %v5080 = vadd.f32 %v4931, %v5023
    %v5081 = vadd.f32 %v4932, %v5064
    %5082 = vst [vmem:[#allocation1] ss:$2 sm:$0xff] %v4230
    %v5083 = vld.sshfl [vmem:[#allocation1] sm:$0xff pattern:$0x75316420]
    %v5084 = vld.sshfl [vmem:[#allocation1 + $0x8] sm:$0xff pattern:$0x75316420]
    %5087 = vrot.lane.b32.xlu0 %v5083, 113
    %v5088 = vpop.permute.xlu0 %5087
    %5089 = vrot.lane.b32.xlu0 %v5084, 113
    %v5090 = vpop.permute.xlu0 %5089
    %v5091 = vsel %vm939, %v5088, %v5090
    %v5092 = vsel %vm939, %v5090, %v5088
    %v5093 = vsel %vm944, %v5091, 0.0
    %v5094 = vsel %vm945, %v5092, 0.0
    %v5095 = vld [vmem:[%s948] sm:$0xff]
    %v5096 = vld [vmem:[%s948 + $0x8] sm:$0xff]
    %v5097 = vld [vmem:[%s948 + $0x10] sm:$0xff]
    %v5098 = vld [vmem:[%s948 + $0x18] sm:$0xff]
    %v5099 = vld [vmem:[%s948 + $0x20] sm:$0xff]
    %v5100 = vld [vmem:[%s948 + $0x28] sm:$0xff]
    %v5101 = vld [vmem:[%s948 + $0x30] sm:$0xff]
    %v5102 = vld [vmem:[%s948 + $0x38] sm:$0xff]
    %v5104 = vsel %vm101, %v5095, 0
    %v5107 = vsel %vm101, %v5096, 0
    %v5110 = vsel %vm101, %v5097, 0
    %v5113 = vsel %vm101, %v5098, 0
    %v5116 = vsel %vm101, %v5099, 0
    %v5119 = vsel %vm101, %v5100, 0
    %v5122 = vsel %vm101, %v5101, 0
    %v5125 = vsel %vm101, %v5102, 0
    %v5128 = vsel %vm126, %v5093, 0
    %v5131 = vsel %vm126, %v5094, 0
    %5133 = vmatpush.msra.mxu0 0.0
    %5134 = vmatpush.msra.mxu0 0.0
    %5135 = vmatpush.msra.mxu0 0.0
    %5136 = vmatpush.msra.mxu0 0.0
    %5137 = vmatpush.msra.mxu0 0.0
    %5138 = vmatpush.msra.mxu0 0.0
    %5139 = vmatpush.msra.mxu0 0.0
    %5140 = vmatpush.msra.mxu0 0.0
    %5141 = vmatpush.msra.mxu0 0.0
    %5142 = vmatpush.msra.mxu0 0.0
    %5143 = vmatpush.msra.mxu0 0.0
    %5144 = vmatpush.msra.mxu0 0.0
    %5145 = vmatpush.msra.mxu0 0.0
    %5146 = vmatpush.msra.mxu0 0.0
    %5147 = vmatpush.msra.mxu0 0.0
    %5148 = vmatpush.msra.mxu0 %v5128
    %5149 = vmatmul.f32.gmra.mxu0 %v5104
    %v5150 = vpop.f32.mrf.mxu0
    %v5151 = vadd.f32 0.0, %v5150
    %5152 = vmatmul.f32.gmra.mxu0 %v5107
    %v5153 = vpop.f32.mrf.mxu0
    %v5154 = vadd.f32 0.0, %v5153
    %5155 = vmatmul.f32.gmra.mxu0 %v5110
    %v5156 = vpop.f32.mrf.mxu0
    %v5157 = vadd.f32 0.0, %v5156
    %5158 = vmatmul.f32.gmra.mxu0 %v5113
    %v5159 = vpop.f32.mrf.mxu0
    %v5160 = vadd.f32 0.0, %v5159
    %5161 = vmatmul.f32.gmra.mxu0 %v5116
    %v5162 = vpop.f32.mrf.mxu0
    %v5163 = vadd.f32 0.0, %v5162
    %5164 = vmatmul.f32.gmra.mxu0 %v5119
    %v5165 = vpop.f32.mrf.mxu0
    %v5166 = vadd.f32 0.0, %v5165
    %5167 = vmatmul.f32.gmra.mxu0 %v5122
    %v5168 = vpop.f32.mrf.mxu0
    %v5169 = vadd.f32 0.0, %v5168
    %5170 = vmatmul.f32.gmra.mxu0 %v5125
    %v5171 = vpop.f32.mrf.mxu0
    %v5172 = vadd.f32 0.0, %v5171
    %5173 = vdwg.mxu0
    %5174 = vmatpush.msra.mxu0 0.0
    %5175 = vmatpush.msra.mxu0 0.0
    %5176 = vmatpush.msra.mxu0 0.0
    %5177 = vmatpush.msra.mxu0 0.0
    %5178 = vmatpush.msra.mxu0 0.0
    %5179 = vmatpush.msra.mxu0 0.0
    %5180 = vmatpush.msra.mxu0 0.0
    %5181 = vmatpush.msra.mxu0 0.0
    %5182 = vmatpush.msra.mxu0 0.0
    %5183 = vmatpush.msra.mxu0 0.0
    %5184 = vmatpush.msra.mxu0 0.0
    %5185 = vmatpush.msra.mxu0 0.0
    %5186 = vmatpush.msra.mxu0 0.0
    %5187 = vmatpush.msra.mxu0 0.0
    %5188 = vmatpush.msra.mxu0 0.0
    %5189 = vmatpush.msra.mxu0 %v5131
    %5190 = vmatmul.f32.gmra.mxu0 %v5104
    %v5191 = vpop.f32.mrf.mxu0
    %v5192 = vadd.f32 0.0, %v5191
    %5193 = vmatmul.f32.gmra.mxu0 %v5107
    %v5194 = vpop.f32.mrf.mxu0
    %v5195 = vadd.f32 0.0, %v5194
    %5196 = vmatmul.f32.gmra.mxu0 %v5110
    %v5197 = vpop.f32.mrf.mxu0
    %v5198 = vadd.f32 0.0, %v5197
    %5199 = vmatmul.f32.gmra.mxu0 %v5113
    %v5200 = vpop.f32.mrf.mxu0
    %v5201 = vadd.f32 0.0, %v5200
    %5202 = vmatmul.f32.gmra.mxu0 %v5116
    %v5203 = vpop.f32.mrf.mxu0
    %v5204 = vadd.f32 0.0, %v5203
    %5205 = vmatmul.f32.gmra.mxu0 %v5119
    %v5206 = vpop.f32.mrf.mxu0
    %v5207 = vadd.f32 0.0, %v5206
    %5208 = vmatmul.f32.gmra.mxu0 %v5122
    %v5209 = vpop.f32.mrf.mxu0
    %v5210 = vadd.f32 0.0, %v5209
    %5211 = vmatmul.f32.gmra.mxu0 %v5125
    %v5212 = vpop.f32.mrf.mxu0
    %v5213 = vadd.f32 0.0, %v5212
    %5214 = vdwg.mxu0
    %v5215 = vadd.f32 %v5066, %v5151
    %v5216 = vadd.f32 %v5067, %v5192
    %v5217 = vadd.f32 %v5068, %v5154
    %v5218 = vadd.f32 %v5069, %v5195
    %v5219 = vadd.f32 %v5070, %v5157
    %v5220 = vadd.f32 %v5071, %v5198
    %v5221 = vadd.f32 %v5072, %v5160
    %v5222 = vadd.f32 %v5073, %v5201
    %v5223 = vadd.f32 %v5074, %v5163
    %v5224 = vadd.f32 %v5075, %v5204
    %v5225 = vadd.f32 %v5076, %v5166
    %v5226 = vadd.f32 %v5077, %v5207
    %v5227 = vadd.f32 %v5078, %v5169
    %v5228 = vadd.f32 %v5079, %v5210
    %v5229 = vadd.f32 %v5080, %v5172
    %v5230 = vadd.f32 %v5081, %v5213
    %5231 = vst [vmem:[#allocation1] ss:$2 sm:$0xff] %v4230
    %v5232 = vld.sshfl [vmem:[#allocation1] sm:$0xff pattern:$0x75316420]
    %v5233 = vld.sshfl [vmem:[#allocation1 + $0x8] sm:$0xff pattern:$0x75316420]
    %5236 = vrot.lane.b32.xlu0 %v5232, 112
    %v5237 = vpop.permute.xlu0 %5236
    %5238 = vrot.lane.b32.xlu0 %v5233, 112
    %v5239 = vpop.permute.xlu0 %5238
    %v5240 = vsel %vm1094, %v5237, %v5239
    %v5241 = vsel %vm1094, %v5239, %v5237
    %v5242 = vsel %vm1099, %v5240, 0.0
    %v5243 = vsel %vm1100, %v5241, 0.0
    %v5244 = vld [vmem:[%s1103] sm:$0xff]
    %v5245 = vld [vmem:[%s1103 + $0x8] sm:$0xff]
    %v5246 = vld [vmem:[%s1103 + $0x10] sm:$0xff]
    %v5247 = vld [vmem:[%s1103 + $0x18] sm:$0xff]
    %v5248 = vld [vmem:[%s1103 + $0x20] sm:$0xff]
    %v5249 = vld [vmem:[%s1103 + $0x28] sm:$0xff]
    %v5250 = vld [vmem:[%s1103 + $0x30] sm:$0xff]
    %v5251 = vld [vmem:[%s1103 + $0x38] sm:$0xff]
    %v5253 = vsel %vm101, %v5244, 0
    %v5256 = vsel %vm101, %v5245, 0
    %v5259 = vsel %vm101, %v5246, 0
    %v5262 = vsel %vm101, %v5247, 0
    %v5265 = vsel %vm101, %v5248, 0
    %v5268 = vsel %vm101, %v5249, 0
    %v5271 = vsel %vm101, %v5250, 0
    %v5274 = vsel %vm101, %v5251, 0
    %v5277 = vsel %vm126, %v5242, 0
    %v5280 = vsel %vm126, %v5243, 0
    %5282 = vmatpush.msra.mxu0 0.0
    %5283 = vmatpush.msra.mxu0 0.0
    %5284 = vmatpush.msra.mxu0 0.0
    %5285 = vmatpush.msra.mxu0 0.0
    %5286 = vmatpush.msra.mxu0 0.0
    %5287 = vmatpush.msra.mxu0 0.0
    %5288 = vmatpush.msra.mxu0 0.0
    %5289 = vmatpush.msra.mxu0 0.0
    %5290 = vmatpush.msra.mxu0 0.0
    %5291 = vmatpush.msra.mxu0 0.0
    %5292 = vmatpush.msra.mxu0 0.0
    %5293 = vmatpush.msra.mxu0 0.0
    %5294 = vmatpush.msra.mxu0 0.0
    %5295 = vmatpush.msra.mxu0 0.0
    %5296 = vmatpush.msra.mxu0 0.0
    %5297 = vmatpush.msra.mxu0 %v5277
    %5298 = vmatmul.f32.gmra.mxu0 %v5253
    %v5299 = vpop.f32.mrf.mxu0
    %v5300 = vadd.f32 0.0, %v5299
    %5301 = vmatmul.f32.gmra.mxu0 %v5256
    %v5302 = vpop.f32.mrf.mxu0
    %v5303 = vadd.f32 0.0, %v5302
    %5304 = vmatmul.f32.gmra.mxu0 %v5259
    %v5305 = vpop.f32.mrf.mxu0
    %v5306 = vadd.f32 0.0, %v5305
    %5307 = vmatmul.f32.gmra.mxu0 %v5262
    %v5308 = vpop.f32.mrf.mxu0
    %v5309 = vadd.f32 0.0, %v5308
    %5310 = vmatmul.f32.gmra.mxu0 %v5265
    %v5311 = vpop.f32.mrf.mxu0
    %v5312 = vadd.f32 0.0, %v5311
    %5313 = vmatmul.f32.gmra.mxu0 %v5268
    %v5314 = vpop.f32.mrf.mxu0
    %v5315 = vadd.f32 0.0, %v5314
    %5316 = vmatmul.f32.gmra.mxu0 %v5271
    %v5317 = vpop.f32.mrf.mxu0
    %v5318 = vadd.f32 0.0, %v5317
    %5319 = vmatmul.f32.gmra.mxu0 %v5274
    %v5320 = vpop.f32.mrf.mxu0
    %v5321 = vadd.f32 0.0, %v5320
    %5322 = vdwg.mxu0
    %5323 = vmatpush.msra.mxu0 0.0
    %5324 = vmatpush.msra.mxu0 0.0
    %5325 = vmatpush.msra.mxu0 0.0
    %5326 = vmatpush.msra.mxu0 0.0
    %5327 = vmatpush.msra.mxu0 0.0
    %5328 = vmatpush.msra.mxu0 0.0
    %5329 = vmatpush.msra.mxu0 0.0
    %5330 = vmatpush.msra.mxu0 0.0
    %5331 = vmatpush.msra.mxu0 0.0
    %5332 = vmatpush.msra.mxu0 0.0
    %5333 = vmatpush.msra.mxu0 0.0
    %5334 = vmatpush.msra.mxu0 0.0
    %5335 = vmatpush.msra.mxu0 0.0
    %5336 = vmatpush.msra.mxu0 0.0
    %5337 = vmatpush.msra.mxu0 0.0
    %5338 = vmatpush.msra.mxu0 %v5280
    %5339 = vmatmul.f32.gmra.mxu0 %v5253
    %v5340 = vpop.f32.mrf.mxu0
    %v5341 = vadd.f32 0.0, %v5340
    %5342 = vmatmul.f32.gmra.mxu0 %v5256
    %v5343 = vpop.f32.mrf.mxu0
    %v5344 = vadd.f32 0.0, %v5343
    %5345 = vmatmul.f32.gmra.mxu0 %v5259
    %v5346 = vpop.f32.mrf.mxu0
    %v5347 = vadd.f32 0.0, %v5346
    %5348 = vmatmul.f32.gmra.mxu0 %v5262
    %v5349 = vpop.f32.mrf.mxu0
    %v5350 = vadd.f32 0.0, %v5349
    %5351 = vmatmul.f32.gmra.mxu0 %v5265
    %v5352 = vpop.f32.mrf.mxu0
    %v5353 = vadd.f32 0.0, %v5352
    %5354 = vmatmul.f32.gmra.mxu0 %v5268
    %v5355 = vpop.f32.mrf.mxu0
    %v5356 = vadd.f32 0.0, %v5355
    %5357 = vmatmul.f32.gmra.mxu0 %v5271
    %v5358 = vpop.f32.mrf.mxu0
    %v5359 = vadd.f32 0.0, %v5358
    %5360 = vmatmul.f32.gmra.mxu0 %v5274
    %v5361 = vpop.f32.mrf.mxu0
    %v5362 = vadd.f32 0.0, %v5361
    %5363 = vdwg.mxu0
    %v5364 = vadd.f32 %v5215, %v5300
    %v5365 = vadd.f32 %v5216, %v5341
    %v5366 = vadd.f32 %v5217, %v5303
    %v5367 = vadd.f32 %v5218, %v5344
    %v5368 = vadd.f32 %v5219, %v5306
    %v5369 = vadd.f32 %v5220, %v5347
    %v5370 = vadd.f32 %v5221, %v5309
    %v5371 = vadd.f32 %v5222, %v5350
    %v5372 = vadd.f32 %v5223, %v5312
    %v5373 = vadd.f32 %v5224, %v5353
    %v5374 = vadd.f32 %v5225, %v5315
    %v5375 = vadd.f32 %v5226, %v5356
    %v5376 = vadd.f32 %v5227, %v5318
    %v5377 = vadd.f32 %v5228, %v5359
    %v5378 = vadd.f32 %v5229, %v5321
    %v5379 = vadd.f32 %v5230, %v5362
    %5380 = vst [vmem:[#allocation1] ss:$2 sm:$0xff] %v4230
    %v5381 = vld.sshfl [vmem:[#allocation1] sm:$0xff pattern:$0x75316420]
    %v5382 = vld.sshfl [vmem:[#allocation1 + $0x8] sm:$0xff pattern:$0x75316420]
    %5385 = vrot.lane.b32.xlu0 %v5381, 111
    %v5386 = vpop.permute.xlu0 %5385
    %5387 = vrot.lane.b32.xlu0 %v5382, 111
    %v5388 = vpop.permute.xlu0 %5387
    %v5389 = vsel %vm1249, %v5386, %v5388
    %v5390 = vsel %vm1249, %v5388, %v5386
    %v5391 = vsel %vm1254, %v5389, 0.0
    %v5392 = vsel %vm1255, %v5390, 0.0
    %v5393 = vld [vmem:[%s1258] sm:$0xff]
    %v5394 = vld [vmem:[%s1258 + $0x8] sm:$0xff]
    %v5395 = vld [vmem:[%s1258 + $0x10] sm:$0xff]
    %v5396 = vld [vmem:[%s1258 + $0x18] sm:$0xff]
    %v5397 = vld [vmem:[%s1258 + $0x20] sm:$0xff]
    %v5398 = vld [vmem:[%s1258 + $0x28] sm:$0xff]
    %v5399 = vld [vmem:[%s1258 + $0x30] sm:$0xff]
    %v5400 = vld [vmem:[%s1258 + $0x38] sm:$0xff]
    %v5402 = vsel %vm101, %v5393, 0
    %v5405 = vsel %vm101, %v5394, 0
    %v5408 = vsel %vm101, %v5395, 0
    %v5411 = vsel %vm101, %v5396, 0
    %v5414 = vsel %vm101, %v5397, 0
    %v5417 = vsel %vm101, %v5398, 0
    %v5420 = vsel %vm101, %v5399, 0
    %v5423 = vsel %vm101, %v5400, 0
    %v5426 = vsel %vm126, %v5391, 0
    %v5429 = vsel %vm126, %v5392, 0
    %5431 = vmatpush.msra.mxu0 0.0
    %5432 = vmatpush.msra.mxu0 0.0
    %5433 = vmatpush.msra.mxu0 0.0
    %5434 = vmatpush.msra.mxu0 0.0
    %5435 = vmatpush.msra.mxu0 0.0
    %5436 = vmatpush.msra.mxu0 0.0
    %5437 = vmatpush.msra.mxu0 0.0
    %5438 = vmatpush.msra.mxu0 0.0
    %5439 = vmatpush.msra.mxu0 0.0
    %5440 = vmatpush.msra.mxu0 0.0
    %5441 = vmatpush.msra.mxu0 0.0
    %5442 = vmatpush.msra.mxu0 0.0
    %5443 = vmatpush.msra.mxu0 0.0
    %5444 = vmatpush.msra.mxu0 0.0
    %5445 = vmatpush.msra.mxu0 0.0
    %5446 = vmatpush.msra.mxu0 %v5426
    %5447 = vmatmul.f32.gmra.mxu0 %v5402
    %v5448 = vpop.f32.mrf.mxu0
    %v5449 = vadd.f32 0.0, %v5448
    %5450 = vmatmul.f32.gmra.mxu0 %v5405
    %v5451 = vpop.f32.mrf.mxu0
    %v5452 = vadd.f32 0.0, %v5451
    %5453 = vmatmul.f32.gmra.mxu0 %v5408
    %v5454 = vpop.f32.mrf.mxu0
    %v5455 = vadd.f32 0.0, %v5454
    %5456 = vmatmul.f32.gmra.mxu0 %v5411
    %v5457 = vpop.f32.mrf.mxu0
    %v5458 = vadd.f32 0.0, %v5457
    %5459 = vmatmul.f32.gmra.mxu0 %v5414
    %v5460 = vpop.f32.mrf.mxu0
    %v5461 = vadd.f32 0.0, %v5460
    %5462 = vmatmul.f32.gmra.mxu0 %v5417
    %v5463 = vpop.f32.mrf.mxu0
    %v5464 = vadd.f32 0.0, %v5463
    %5465 = vmatmul.f32.gmra.mxu0 %v5420
    %v5466 = vpop.f32.mrf.mxu0
    %v5467 = vadd.f32 0.0, %v5466
    %5468 = vmatmul.f32.gmra.mxu0 %v5423
    %v5469 = vpop.f32.mrf.mxu0
    %v5470 = vadd.f32 0.0, %v5469
    %5471 = vdwg.mxu0
    %5472 = vmatpush.msra.mxu0 0.0
    %5473 = vmatpush.msra.mxu0 0.0
    %5474 = vmatpush.msra.mxu0 0.0
    %5475 = vmatpush.msra.mxu0 0.0
    %5476 = vmatpush.msra.mxu0 0.0
    %5477 = vmatpush.msra.mxu0 0.0
    %5478 = vmatpush.msra.mxu0 0.0
    %5479 = vmatpush.msra.mxu0 0.0
    %5480 = vmatpush.msra.mxu0 0.0
    %5481 = vmatpush.msra.mxu0 0.0
    %5482 = vmatpush.msra.mxu0 0.0
    %5483 = vmatpush.msra.mxu0 0.0
    %5484 = vmatpush.msra.mxu0 0.0
    %5485 = vmatpush.msra.mxu0 0.0
    %5486 = vmatpush.msra.mxu0 0.0
    %5487 = vmatpush.msra.mxu0 %v5429
    %5488 = vmatmul.f32.gmra.mxu0 %v5402
    %v5489 = vpop.f32.mrf.mxu0
    %v5490 = vadd.f32 0.0, %v5489
    %5491 = vmatmul.f32.gmra.mxu0 %v5405
    %v5492 = vpop.f32.mrf.mxu0
    %v5493 = vadd.f32 0.0, %v5492
    %5494 = vmatmul.f32.gmra.mxu0 %v5408
    %v5495 = vpop.f32.mrf.mxu0
    %v5496 = vadd.f32 0.0, %v5495
    %5497 = vmatmul.f32.gmra.mxu0 %v5411
    %v5498 = vpop.f32.mrf.mxu0
    %v5499 = vadd.f32 0.0, %v5498
    %5500 = vmatmul.f32.gmra.mxu0 %v5414
    %v5501 = vpop.f32.mrf.mxu0
    %v5502 = vadd.f32 0.0, %v5501
    %5503 = vmatmul.f32.gmra.mxu0 %v5417
    %v5504 = vpop.f32.mrf.mxu0
    %v5505 = vadd.f32 0.0, %v5504
    %5506 = vmatmul.f32.gmra.mxu0 %v5420
    %v5507 = vpop.f32.mrf.mxu0
    %v5508 = vadd.f32 0.0, %v5507
    %5509 = vmatmul.f32.gmra.mxu0 %v5423
    %v5510 = vpop.f32.mrf.mxu0
    %v5511 = vadd.f32 0.0, %v5510
    %5512 = vdwg.mxu0
    %v5513 = vadd.f32 %v5364, %v5449
    %v5514 = vadd.f32 %v5365, %v5490
    %v5515 = vadd.f32 %v5366, %v5452
    %v5516 = vadd.f32 %v5367, %v5493
    %v5517 = vadd.f32 %v5368, %v5455
    %v5518 = vadd.f32 %v5369, %v5496
    %v5519 = vadd.f32 %v5370, %v5458
    %v5520 = vadd.f32 %v5371, %v5499
    %v5521 = vadd.f32 %v5372, %v5461
    %v5522 = vadd.f32 %v5373, %v5502
    %v5523 = vadd.f32 %v5374, %v5464
    %v5524 = vadd.f32 %v5375, %v5505
    %v5525 = vadd.f32 %v5376, %v5467
    %v5526 = vadd.f32 %v5377, %v5508
    %v5527 = vadd.f32 %v5378, %v5470
    %v5528 = vadd.f32 %v5379, %v5511
    %v5529 = vadd.f32 %v5513, %v1398
    %v5530 = vadd.f32 %v5514, %v1398
    %v5531 = vadd.f32 %v5515, %v1403
    %v5532 = vadd.f32 %v5516, %v1403
    %v5533 = vadd.f32 %v5517, %v1408
    %v5534 = vadd.f32 %v5518, %v1408
    %v5535 = vadd.f32 %v5519, %v1413
    %v5536 = vadd.f32 %v5520, %v1413
    %v5537 = vadd.f32 %v5521, %v1418
    %v5538 = vadd.f32 %v5522, %v1418
    %v5539 = vadd.f32 %v5523, %v1423
    %v5540 = vadd.f32 %v5524, %v1423
    %v5541 = vadd.f32 %v5525, %v1428
    %v5542 = vadd.f32 %v5526, %v1428
    %v5543 = vadd.f32 %v5527, %v1433
    %v5544 = vadd.f32 %v5528, %v1433
    %v5545 = vmul.f32 %v5529, 0.01
    %v5546 = vmul.f32 %v5530, 0.01
    %v5547 = vmul.f32 %v5531, 0.01
    %v5548 = vmul.f32 %v5532, 0.01
    %v5549 = vmul.f32 %v5533, 0.01
    %v5550 = vmul.f32 %v5534, 0.01
    %v5551 = vmul.f32 %v5535, 0.01
    %v5552 = vmul.f32 %v5536, 0.01
    %v5553 = vmul.f32 %v5537, 0.01
    %v5554 = vmul.f32 %v5538, 0.01
    %v5555 = vmul.f32 %v5539, 0.01
    %v5556 = vmul.f32 %v5540, 0.01
    %v5557 = vmul.f32 %v5541, 0.01
    %v5558 = vmul.f32 %v5542, 0.01
    %v5559 = vmul.f32 %v5543, 0.01
    %v5560 = vmul.f32 %v5544, 0.01
    %v5561 = vmax.f32 %v5529, %v5545
    %v5562 = vmax.f32 %v5530, %v5546
    %v5563 = vmax.f32 %v5531, %v5547
    %v5564 = vmax.f32 %v5532, %v5548
    %v5565 = vmax.f32 %v5533, %v5549
    %v5566 = vmax.f32 %v5534, %v5550
    %v5567 = vmax.f32 %v5535, %v5551
    %v5568 = vmax.f32 %v5536, %v5552
    %v5569 = vmax.f32 %v5537, %v5553
    %v5570 = vmax.f32 %v5538, %v5554
    %v5571 = vmax.f32 %v5539, %v5555
    %v5572 = vmax.f32 %v5540, %v5556
    %v5573 = vmax.f32 %v5541, %v5557
    %v5574 = vmax.f32 %v5542, %v5558
    %v5575 = vmax.f32 %v5543, %v5559
    %v5576 = vmax.f32 %v5544, %v5560
    %s5577 = scalar_lea.vmem [#allocation2], 384
    %5578 = vst [vmem:[%s5577] sm:$0xff] %v5561
    %5579 = vst [vmem:[%s5577 + $0x8] sm:$0xff] %v5562
    %5580 = vst [vmem:[%s5577 + $0x10] sm:$0xff] %v5563
    %5581 = vst [vmem:[%s5577 + $0x18] sm:$0xff] %v5564
    %5582 = vst [vmem:[%s5577 + $0x20] sm:$0xff] %v5565
    %5583 = vst [vmem:[%s5577 + $0x28] sm:$0xff] %v5566
    %5584 = vst [vmem:[%s5577 + $0x30] sm:$0xff] %v5567
    %5585 = vst [vmem:[%s5577 + $0x38] sm:$0xff] %v5568
    %5586 = vst [vmem:[%s5577 + $0x40] sm:$0xff] %v5569
    %5587 = vst [vmem:[%s5577 + $0x48] sm:$0xff] %v5570
    %5588 = vst [vmem:[%s5577 + $0x50] sm:$0xff] %v5571
    %5589 = vst [vmem:[%s5577 + $0x58] sm:$0xff] %v5572
    %5590 = vst [vmem:[%s5577 + $0x60] sm:$0xff] %v5573
    %5591 = vst [vmem:[%s5577 + $0x68] sm:$0xff] %v5574
    %5592 = vst [vmem:[%s5577 + $0x70] sm:$0xff] %v5575
    %5593 = vst [vmem:[%s5577 + $0x78] sm:$0xff] %v5576
    // Predicated region
    $region14: #{tpu_custom_call.1} parent=1 // pred_check
      _
    $region15: #{tpu_custom_call.1} parent=1 // pred_check_branch
      %5595 = sbr.rel (0) target = $region17
    $region16: #{tpu_custom_call.1} parent=1 // pred_region
      %5597 = vsyncadd [#allocation3], 0
      %s5598 = sshll.u32 [#allocation2], 4
      %s5599 = int_to_ptr.vmem [resolvable:$true] %s5598
      %s5600 = sshll.u32 %s3, 4
      %s5601 = int_to_ptr.hbm [resolvable:$true] %s5600
      %5606 = dma.vmem_to_hbm [thread:$0]  %s5599, 8192, %s5601, [#allocation3], 256, 256, 16
    $region17: #{tpu_custom_call.1} parent=1 // pred_fallthru
      _
    // Predicated region
    $region18: #{tpu_custom_call.1} parent=1 // pred_check
      _
    $region19: #{tpu_custom_call.1} parent=1 // pred_check_branch
      %5608 = sbr.rel (0) target = $region21
    $region20: #{tpu_custom_call.1} parent=1 // pred_region
      %5610 = dma.done [#allocation3], 8192
    $region21: #{tpu_custom_call.1} parent=1 // pred_fallthru
      _
    %5611 = vsyncpa [#allocation3], 1

</llo_original>
